<compile_context>
chip_gen: v6e
topology: v6e:2x2x1
jax: 0.10.0
libtpu: 0.0.40
codegen_flags: <defaults>
</compile_context>

<pallas_src>
import functools

import jax
import jax.numpy as jnp
from jax.experimental import pallas as pl
from jax.experimental.pallas import tpu as pltpu


def _round_up(x, m):
    return (x + m - 1) // m * m


# ----------------------------------------------------------------------------
# Pallas kernel: fused 3x3 conv (big-K implicit im2col) + InstanceNorm (+ReLU)
# ----------------------------------------------------------------------------
def _conv_in_kernel(x_ref, w_ref, m_ref, o_ref, xk_ref, *, Wp, hw, eps, relu):
    """Refs:
      x_ref : (1, Cin, Lp)  bf16  reflection-padded sample, spatial flattened,
                                  lane-padded with zeros to Lp (mult. of 128)
      w_ref : (TCo, 9*Cin)  bf16  tap-major packed weights for this Cout tile
      m_ref : (1, L)        f32   1.0 on valid flat columns, 0.0 on pad cols
      o_ref : (1, TCo, L)         output (bf16 stage 1, f32 stage 2)
      xk_ref: (9*Cin, L)    bf16  VMEM scratch: shifted-stack (im2col) of x
    """
    cin = x_ref.shape[1]
    L = o_ref.shape[2]

    # Build the (9*Cin, L) shifted stack once per sample (co == 0) and reuse
    # it for every Cout tile.  Turns 9 underfilled K=Cin matmuls into a single
    # K=9*Cin contraction that fills the MXU depth.
    @pl.when(pl.program_id(1) == 0)
    def _build_im2col():
        for t in range(9):                          # static unroll
            di, dj = divmod(t, 3)
            ofs = di * Wp + dj                      # static lane offset
            xk_ref[t * cin:(t + 1) * cin, :] = x_ref[0, :, ofs:ofs + L]

    acc = jnp.dot(w_ref[...], xk_ref[...],
                  preferred_element_type=jnp.float32)       # (TCo, L) f32
    # NOTE: conv bias intentionally omitted — a per-channel constant cancels
    # exactly under no-affine InstanceNorm (mean subtraction; var unchanged).

    # InstanceNorm2d over the H*W valid columns (biased variance, no affine).
    mask = m_ref[...]                                        # (1, L) in {0,1}
    inv_hw = 1.0 / hw
    mean = jnp.sum(acc * mask, axis=-1, keepdims=True) * inv_hw
    cen = (acc - mean) * mask          # mask folded once; pad cols become 0
    var = jnp.sum(cen * cen, axis=-1, keepdims=True) * inv_hw
    y = cen * jax.lax.rsqrt(var + eps)                       # rsqrt -> EUP
    if relu:
        y = jnp.maximum(y, 0.0)
    o_ref[0] = y.astype(o_ref.dtype)


# ----------------------------------------------------------------------------
# pallas_call wrapper
# ----------------------------------------------------------------------------
def _fused_conv3x3_in(xpad_flat, w_packed, mask, *, Wp, hw, eps, relu,
                      out_dtype, cout_tile=None):
    N, cin, Lp = xpad_flat.shape
    cout = w_packed.shape[0]
    L = mask.shape[1]

    if cout_tile is None:
        cout_tile = cout if cout <= 128 else 128
    if cout % cout_tile:
        cout_tile = cout
    n_co = cout // cout_tile

    kernel = functools.partial(_conv_in_kernel, Wp=Wp, hw=hw, eps=eps,
                               relu=relu)
    return pl.pallas_call(
        kernel,
        out_shape=jax.ShapeDtypeStruct((N, cout, L), out_dtype),
        grid=(N, n_co),
        in_specs=[
            # per-sample padded image; constant block across co -> resident
            pl.BlockSpec((1, cin, Lp), lambda n, co: (n, 0, 0)),
            # packed weights, tiled over Cout
            pl.BlockSpec((cout_tile, 9 * cin), lambda n, co: (co, 0)),
            # valid-column mask, resident
            pl.BlockSpec((1, L), lambda n, co: (0, 0)),
        ],
        out_specs=pl.BlockSpec((1, cout_tile, L), lambda n, co: (n, co, 0)),
        scratch_shapes=[pltpu.VMEM((9 * cin, L), jnp.bfloat16)],
        compiler_params=pltpu.CompilerParams(
            # n is megacore-parallel; co stays sequential on one core so the
            # im2col scratch built at co == 0 is valid for all co > 0.
            dimension_semantics=("parallel", "arbitrary"),
            vmem_limit_bytes=48 * 1024 * 1024),
    )(xpad_flat, w_packed, mask)


# ----------------------------------------------------------------------------
# ResnetBlock forward (matches the PyTorch module semantics)
# ----------------------------------------------------------------------------
def resnet_block_forward(params, x):
    """x: (N, C, H, W) float32 -> (N, C, H, W) float32."""
    N, C, H, W = x.shape
    Hp, Wp = H + 2, W + 2
    eps = 1e-5
    hw = float(H * W)
    L = _round_up(H * Wp, 128)                        # lane-dense output width
    Lp = _round_up(max(Hp * Wp, L + 2 * Wp + 2), 128)  # padded input lanes

    cols = jnp.arange(L, dtype=jnp.int32)
    mask = (((cols % Wp) < W) & (cols < H * Wp)).astype(jnp.float32)
    mask = mask.reshape(1, L)

    def pad_flat(t):      # (N,C,H,W) -> (N,C,Lp) bf16: reflect-pad + lane-pad
        tp = jnp.pad(t, ((0, 0), (0, 0), (1, 1), (1, 1)), mode="reflect")
        tp = tp.reshape(N, C, Hp * Wp).astype(jnp.bfloat16)
        return jnp.pad(tp, ((0, 0), (0, 0), (0, Lp - Hp * Wp)))

    def unflatten(y_flat):  # (N,C,L) padded-flat -> (N,C,H,W)
        return y_flat[:, :, :H * Wp].reshape(N, C, H, Wp)[:, :, :, :W]

    def pack_w(w):          # (Co,Ci,3,3) -> (Co, 9*Ci), tap-major columns
        co, ci = w.shape[0], w.shape[1]
        return jnp.transpose(w, (0, 2, 3, 1)).reshape(co, 9 * ci).astype(
            jnp.bfloat16)

    # Stage 1: ReflPad -> Conv3x3 -> InstanceNorm -> ReLU  (one kernel, bf16)
    y1_flat = _fused_conv3x3_in(pad_flat(x), pack_w(params["w1"]), mask,
                                Wp=Wp, hw=hw, eps=eps, relu=True,
                                out_dtype=jnp.bfloat16)
    # TODO(synk): fully fuse both stages (keep padded y1 in VMEM scratch, do
    # the reflection border in-kernel) to remove this single bf16 XLA pass.
    y1_img = unflatten(y1_flat)

    # Stage 2: ReflPad -> Conv3x3 -> InstanceNorm  (one kernel, f32 out)
    y2_flat = _fused_conv3x3_in(pad_flat(y1_img), pack_w(params["w2"]), mask,
                                Wp=Wp, hw=hw, eps=eps, relu=False,
                                out_dtype=jnp.float32)

    # Residual add: XLA fuses it with the un-padding slice of y2_flat.
    return x + unflatten(y2_flat)


# ----------------------------------------------------------------------------
# Pure-JAX reference (f32, keeps the bias) for validation
# ----------------------------------------------------------------------------
def _reference_forward(params, x):
    eps = 1e-5

    def stage(t, w, b, relu):
        tp = jnp.pad(t, ((0, 0), (0, 0), (1, 1), (1, 1)), mode="reflect")
        y = jax.lax.conv_general_dilated(
            tp, w, window_strides=(1, 1), padding="VALID",
            dimension_numbers=("NCHW", "OIHW", "NCHW"))
        y = y + b.reshape(1, -1, 1, 1)
        mean = jnp.mean(y, axis=(2, 3), keepdims=True)
        var = jnp.mean((y - mean) ** 2, axis=(2, 3), keepdims=True)
        y = (y - mean) * jax.lax.rsqrt(var + eps)
        return jnp.maximum(y, 0.0) if relu else y

    h = stage(x, params["w1"], params["b1"], True)
    h = stage(h, params["w2"], params["b2"], False)
    return x + h


# ----------------------------------------------------------------------------
if __name__ == "__main__":
    key = jax.random.PRNGKey(0)
    k1, k2, k3, k4, kx = jax.random.split(key, 5)

    N, C, H, W = 2, 32, 16, 16
    bound = 1.0 / float((C * 9) ** 0.5)          # PyTorch Conv2d default init
    params = dict(
        w1=jax.random.uniform(k1, (C, C, 3, 3), jnp.float32, -bound, bound),
        b1=jax.random.uniform(k2, (C,), jnp.float32, -bound, bound),
        w2=jax.random.uniform(k3, (C, C, 3, 3), jnp.float32, -bound, bound),
        b2=jax.random.uniform(k4, (C,), jnp.float32, -bound, bound),
    )
    x = jax.random.normal(kx, (N, C, H, W), jnp.float32)

    fwd = jax.jit(resnet_block_forward)
    y = jax.block_until_ready(fwd(params, x))

    assert y.shape == (N, C, H, W), y.shape
    assert bool(jnp.all(jnp.isfinite(y)))

    ref = _reference_forward(params, x)
    max_err = float(jnp.max(jnp.abs(y - ref)))
    mean_err = float(jnp.mean(jnp.abs(y - ref)))
    # bf16 MXU inputs / f32 accumulation: tighter than before but safe.
    assert max_err < 0.1, f"max_err={max_err}"
    assert mean_err < 1e-2, f"mean_err={mean_err}"
    print("KERNEL_OK")
</pallas_src>

<mosaic_0001>
module attributes {stable_mosaic.version = 11 : i64} {
  func.func @_conv_in_kernel(%arg0: i32, %arg1: i32, %arg2: memref<1x32x512xbf16, #tpu.memory_space<vmem>>, %arg3: memref<32x288xbf16, #tpu.memory_space<vmem>>, %arg4: memref<1x384xf32, #tpu.memory_space<vmem>>, %arg5: memref<1x32x384xbf16, #tpu.memory_space<vmem>>, %arg6: memref<288x384xbf16, #tpu.memory_space<vmem>>) attributes {dimension_semantics = [#tpu.dimension_semantics<parallel>, #tpu.dimension_semantics<arbitrary>], iteration_bounds = array<i64: 2, 1>, scalar_prefetch = 0 : i64, scratch_operands = 1 : i64, tpu.core_type = #tpu.core_type<tc>, window_params = [{transform_indices = @transform_0, window_bounds = array<i64: 1, 32, 512>}, {transform_indices = @transform_1, window_bounds = array<i64: 32, 288>}, {pipeline_mode = #tpu.pipeline_mode<synchronous>, transform_indices = @transform_2, window_bounds = array<i64: 1, 384>}, {transform_indices = @transform_3, window_bounds = array<i64: 1, 32, 384>}]} {
    %c0_i32 = arith.constant 0 : i32
    %0 = arith.cmpi eq, %arg1, %c0_i32 : i32
    %1 = arith.extui %0 : i1 to i32
    %c0_i32_0 = arith.constant 0 : i32
    %2 = arith.cmpi ne, %1, %c0_i32_0 : i32
    scf.if %2 {
      %c0_15 = arith.constant 0 : index
      %c0_16 = arith.constant 0 : index
      %c0_17 = arith.constant 0 : index
      %33 = vector.load %arg2[%c0_15, %c0_16, %c0_17] : memref<1x32x512xbf16, #tpu.memory_space<vmem>>, vector<1x32x384xbf16>
      %34 = vector.shape_cast %33 : vector<1x32x384xbf16> to vector<32x384xbf16>
      %c0_18 = arith.constant 0 : index
      %c0_19 = arith.constant 0 : index
      %35 = vector.load %arg6[%c0_18, %c0_19] : memref<288x384xbf16, #tpu.memory_space<vmem>>, vector<32x384xbf16>
      tpu.vector_store %arg6[%c0_18, %c0_19], %34 {strides = array<i32>} : memref<288x384xbf16, #tpu.memory_space<vmem>>, vector<32x384xbf16>,
      %c0_20 = arith.constant 0 : index
      %c0_21 = arith.constant 0 : index
      %c1 = arith.constant 1 : index
      %36 = vector.load %arg2[%c0_20, %c0_21, %c1] : memref<1x32x512xbf16, #tpu.memory_space<vmem>>, vector<1x32x384xbf16>
      %37 = vector.shape_cast %36 : vector<1x32x384xbf16> to vector<32x384xbf16>
      %c32 = arith.constant 32 : index
      %c0_22 = arith.constant 0 : index
      %38 = vector.load %arg6[%c32, %c0_22] : memref<288x384xbf16, #tpu.memory_space<vmem>>, vector<32x384xbf16>
      tpu.vector_store %arg6[%c32, %c0_22], %37 {strides = array<i32>} : memref<288x384xbf16, #tpu.memory_space<vmem>>, vector<32x384xbf16>,
      %c0_23 = arith.constant 0 : index
      %c0_24 = arith.constant 0 : index
      %c2 = arith.constant 2 : index
      %39 = vector.load %arg2[%c0_23, %c0_24, %c2] : memref<1x32x512xbf16, #tpu.memory_space<vmem>>, vector<1x32x384xbf16>
      %40 = vector.shape_cast %39 : vector<1x32x384xbf16> to vector<32x384xbf16>
      %c64 = arith.constant 64 : index
      %c0_25 = arith.constant 0 : index
      %41 = vector.load %arg6[%c64, %c0_25] : memref<288x384xbf16, #tpu.memory_space<vmem>>, vector<32x384xbf16>
      tpu.vector_store %arg6[%c64, %c0_25], %40 {strides = array<i32>} : memref<288x384xbf16, #tpu.memory_space<vmem>>, vector<32x384xbf16>,
      %c0_26 = arith.constant 0 : index
      %c0_27 = arith.constant 0 : index
      %c18 = arith.constant 18 : index
      %42 = vector.load %arg2[%c0_26, %c0_27, %c18] : memref<1x32x512xbf16, #tpu.memory_space<vmem>>, vector<1x32x384xbf16>
      %43 = vector.shape_cast %42 : vector<1x32x384xbf16> to vector<32x384xbf16>
      %c96 = arith.constant 96 : index
      %c0_28 = arith.constant 0 : index
      %44 = vector.load %arg6[%c96, %c0_28] : memref<288x384xbf16, #tpu.memory_space<vmem>>, vector<32x384xbf16>
      tpu.vector_store %arg6[%c96, %c0_28], %43 {strides = array<i32>} : memref<288x384xbf16, #tpu.memory_space<vmem>>, vector<32x384xbf16>,
      %c0_29 = arith.constant 0 : index
      %c0_30 = arith.constant 0 : index
      %c19 = arith.constant 19 : index
      %45 = vector.load %arg2[%c0_29, %c0_30, %c19] : memref<1x32x512xbf16, #tpu.memory_space<vmem>>, vector<1x32x384xbf16>
      %46 = vector.shape_cast %45 : vector<1x32x384xbf16> to vector<32x384xbf16>
      %c128 = arith.constant 128 : index
      %c0_31 = arith.constant 0 : index
      %47 = vector.load %arg6[%c128, %c0_31] : memref<288x384xbf16, #tpu.memory_space<vmem>>, vector<32x384xbf16>
      tpu.vector_store %arg6[%c128, %c0_31], %46 {strides = array<i32>} : memref<288x384xbf16, #tpu.memory_space<vmem>>, vector<32x384xbf16>,
      %c0_32 = arith.constant 0 : index
      %c0_33 = arith.constant 0 : index
      %c20 = arith.constant 20 : index
      %48 = vector.load %arg2[%c0_32, %c0_33, %c20] : memref<1x32x512xbf16, #tpu.memory_space<vmem>>, vector<1x32x384xbf16>
      %49 = vector.shape_cast %48 : vector<1x32x384xbf16> to vector<32x384xbf16>
      %c160 = arith.constant 160 : index
      %c0_34 = arith.constant 0 : index
      %50 = vector.load %arg6[%c160, %c0_34] : memref<288x384xbf16, #tpu.memory_space<vmem>>, vector<32x384xbf16>
      tpu.vector_store %arg6[%c160, %c0_34], %49 {strides = array<i32>} : memref<288x384xbf16, #tpu.memory_space<vmem>>, vector<32x384xbf16>,
      %c0_35 = arith.constant 0 : index
      %c0_36 = arith.constant 0 : index
      %c36 = arith.constant 36 : index
      %51 = vector.load %arg2[%c0_35, %c0_36, %c36] : memref<1x32x512xbf16, #tpu.memory_space<vmem>>, vector<1x32x384xbf16>
      %52 = vector.shape_cast %51 : vector<1x32x384xbf16> to vector<32x384xbf16>
      %c192 = arith.constant 192 : index
      %c0_37 = arith.constant 0 : index
      %53 = vector.load %arg6[%c192, %c0_37] : memref<288x384xbf16, #tpu.memory_space<vmem>>, vector<32x384xbf16>
      tpu.vector_store %arg6[%c192, %c0_37], %52 {strides = array<i32>} : memref<288x384xbf16, #tpu.memory_space<vmem>>, vector<32x384xbf16>,
      %c0_38 = arith.constant 0 : index
      %c0_39 = arith.constant 0 : index
      %c37 = arith.constant 37 : index
      %54 = vector.load %arg2[%c0_38, %c0_39, %c37] : memref<1x32x512xbf16, #tpu.memory_space<vmem>>, vector<1x32x384xbf16>
      %55 = vector.shape_cast %54 : vector<1x32x384xbf16> to vector<32x384xbf16>
      %c224 = arith.constant 224 : index
      %c0_40 = arith.constant 0 : index
      %56 = vector.load %arg6[%c224, %c0_40] : memref<288x384xbf16, #tpu.memory_space<vmem>>, vector<32x384xbf16>
      tpu.vector_store %arg6[%c224, %c0_40], %55 {strides = array<i32>} : memref<288x384xbf16, #tpu.memory_space<vmem>>, vector<32x384xbf16>,
      %c0_41 = arith.constant 0 : index
      %c0_42 = arith.constant 0 : index
      %c38 = arith.constant 38 : index
      %57 = vector.load %arg2[%c0_41, %c0_42, %c38] : memref<1x32x512xbf16, #tpu.memory_space<vmem>>, vector<1x32x384xbf16>
      %58 = vector.shape_cast %57 : vector<1x32x384xbf16> to vector<32x384xbf16>
      %c256 = arith.constant 256 : index
      %c0_43 = arith.constant 0 : index
      %59 = vector.load %arg6[%c256, %c0_43] : memref<288x384xbf16, #tpu.memory_space<vmem>>, vector<32x384xbf16>
      tpu.vector_store %arg6[%c256, %c0_43], %58 {strides = array<i32>} : memref<288x384xbf16, #tpu.memory_space<vmem>>, vector<32x384xbf16>,
    } else {
    }
    %c0 = arith.constant 0 : index
    %c0_1 = arith.constant 0 : index
    %3 = vector.load %arg3[%c0, %c0_1] : memref<32x288xbf16, #tpu.memory_space<vmem>>, vector<32x288xbf16>
    %c0_2 = arith.constant 0 : index
    %c0_3 = arith.constant 0 : index
    %4 = vector.load %arg6[%c0_2, %c0_3] : memref<288x384xbf16, #tpu.memory_space<vmem>>, vector<288x384xbf16>
    %cst = arith.constant dense<0.000000e+00> : vector<32x384xf32>
    %5 = tpu.matmul %3, %4, %cst {dimension_numbers = #tpu.dot_dimension_numbers<[1], [0], [0], [1], [0, 0, 1, 1], [], []>} : vector<32x288xbf16>, vector<288x384xbf16>, vector<32x384xf32> -> vector<32x384xf32>
    %c0_4 = arith.constant 0 : index
    %c0_5 = arith.constant 0 : index
    %6 = vector.load %arg4[%c0_4, %c0_5] : memref<1x384xf32, #tpu.memory_space<vmem>>, vector<1x384xf32>
    %7 = vector.broadcast %6 : vector<1x384xf32> to vector<32x384xf32>
    %8 = arith.mulf %5, %7 : vector<32x384xf32>
    %cst_6 = arith.constant dense<0.000000e+00> : vector<32xf32>
    %9 = vector.multi_reduction <add>, %8, %cst_6 [1] : vector<32x384xf32> to vector<32xf32>
    %10 = vector.shape_cast %9 : vector<32xf32> to vector<32x1xf32>
    %cst_7 = arith.constant 3.906250e-03 : f32
    %11 = vector.broadcast %cst_7 : f32 to vector<32x1xf32>
    %12 = arith.mulf %10, %11 : vector<32x1xf32>
    %13 = vector.broadcast %12 : vector<32x1xf32> to vector<32x384xf32>
    %14 = arith.subf %5, %13 : vector<32x384xf32>
    %15 = vector.broadcast %6 : vector<1x384xf32> to vector<32x384xf32>
    %16 = arith.mulf %14, %15 : vector<32x384xf32>
    %17 = arith.mulf %16, %16 : vector<32x384xf32>
    %cst_8 = arith.constant dense<0.000000e+00> : vector<32xf32>
    %18 = vector.multi_reduction <add>, %17, %cst_8 [1] : vector<32x384xf32> to vector<32xf32>
    %19 = vector.shape_cast %18 : vector<32xf32> to vector<32x1xf32>
    %cst_9 = arith.constant 3.906250e-03 : f32
    %20 = vector.broadcast %cst_9 : f32 to vector<32x1xf32>
    %21 = arith.mulf %19, %20 : vector<32x1xf32>
    %cst_10 = arith.constant 9.99999974E-6 : f32
    %22 = vector.broadcast %cst_10 : f32 to vector<32x1xf32>
    %23 = arith.addf %21, %22 : vector<32x1xf32>
    %24 = math.rsqrt %23 : vector<32x1xf32>
    %25 = vector.broadcast %24 : vector<32x1xf32> to vector<32x384xf32>
    %26 = arith.mulf %16, %25 : vector<32x384xf32>
    %cst_11 = arith.constant 0.000000e+00 : f32
    %27 = vector.broadcast %cst_11 : f32 to vector<32x384xf32>
    %28 = arith.maximumf %26, %27 : vector<32x384xf32>
    %29 = arith.truncf %28 : vector<32x384xf32> to vector<32x384xbf16>
    %c0_12 = arith.constant 0 : index
    %c0_13 = arith.constant 0 : index
    %c0_14 = arith.constant 0 : index
    %30 = vector.load %arg5[%c0_12, %c0_13, %c0_14] : memref<1x32x384xbf16, #tpu.memory_space<vmem>>, vector<1x32x384xbf16>
    %31 = vector.shape_cast %30 : vector<1x32x384xbf16> to vector<32x384xbf16>
    %32 = vector.shape_cast %29 : vector<32x384xbf16> to vector<1x32x384xbf16>
    tpu.vector_store %arg5[%c0_12, %c0_13, %c0_14], %32 {strides = array<i32>} : memref<1x32x384xbf16, #tpu.memory_space<vmem>>, vector<1x32x384xbf16>,
    return
  }
  func.func @transform_0(%arg0: i32, %arg1: i32) -> (i32, i32, i32) {
    %c0_i32 = arith.constant 0 : i32
    %c0_i32_0 = arith.constant 0 : i32
    %c0_i32_1 = arith.constant 0 : i32
    return %arg0, %c0_i32, %c0_i32_0 : i32, i32, i32
  }
  func.func @transform_1(%arg0: i32, %arg1: i32) -> (i32, i32) {
    %c0_i32 = arith.constant 0 : i32
    %c0_i32_0 = arith.constant 0 : i32
    return %arg1, %c0_i32 : i32, i32
  }
  func.func @transform_2(%arg0: i32, %arg1: i32) -> (i32, i32) {
    %c0_i32 = arith.constant 0 : i32
    %c0_i32_0 = arith.constant 0 : i32
    %c0_i32_1 = arith.constant 0 : i32
    return %c0_i32, %c0_i32_0 : i32, i32
  }
  func.func @transform_3(%arg0: i32, %arg1: i32) -> (i32, i32, i32) {
    %c0_i32 = arith.constant 0 : i32
    %c0_i32_0 = arith.constant 0 : i32
    return %arg0, %arg1, %c0_i32 : i32, i32, i32
  }
}

module attributes {stable_mosaic.version = 11 : i64} {
  func.func @_conv_in_kernel(%arg0: i32, %arg1: i32, %arg2: memref<1x32x512xbf16, #tpu.memory_space<vmem>>, %arg3: memref<32x288xbf16, #tpu.memory_space<vmem>>, %arg4: memref<1x384xf32, #tpu.memory_space<vmem>>, %arg5: memref<1x32x384xf32, #tpu.memory_space<vmem>>, %arg6: memref<288x384xbf16, #tpu.memory_space<vmem>>) attributes {dimension_semantics = [#tpu.dimension_semantics<parallel>, #tpu.dimension_semantics<arbitrary>], iteration_bounds = array<i64: 2, 1>, scalar_prefetch = 0 : i64, scratch_operands = 1 : i64, tpu.core_type = #tpu.core_type<tc>, window_params = [{transform_indices = @transform_0, window_bounds = array<i64: 1, 32, 512>}, {transform_indices = @transform_1, window_bounds = array<i64: 32, 288>}, {pipeline_mode = #tpu.pipeline_mode<synchronous>, transform_indices = @transform_2, window_bounds = array<i64: 1, 384>}, {transform_indices = @transform_3, window_bounds = array<i64: 1, 32, 384>}]} {
    %c0_i32 = arith.constant 0 : i32
    %0 = arith.cmpi eq, %arg1, %c0_i32 : i32
    %1 = arith.extui %0 : i1 to i32
    %c0_i32_0 = arith.constant 0 : i32
    %2 = arith.cmpi ne, %1, %c0_i32_0 : i32
    scf.if %2 {
      %c0_14 = arith.constant 0 : index
      %c0_15 = arith.constant 0 : index
      %c0_16 = arith.constant 0 : index
      %30 = vector.load %arg2[%c0_14, %c0_15, %c0_16] : memref<1x32x512xbf16, #tpu.memory_space<vmem>>, vector<1x32x384xbf16>
      %31 = vector.shape_cast %30 : vector<1x32x384xbf16> to vector<32x384xbf16>
      %c0_17 = arith.constant 0 : index
      %c0_18 = arith.constant 0 : index
      %32 = vector.load %arg6[%c0_17, %c0_18] : memref<288x384xbf16, #tpu.memory_space<vmem>>, vector<32x384xbf16>
      tpu.vector_store %arg6[%c0_17, %c0_18], %31 {strides = array<i32>} : memref<288x384xbf16, #tpu.memory_space<vmem>>, vector<32x384xbf16>,
      %c0_19 = arith.constant 0 : index
      %c0_20 = arith.constant 0 : index
      %c1 = arith.constant 1 : index
      %33 = vector.load %arg2[%c0_19, %c0_20, %c1] : memref<1x32x512xbf16, #tpu.memory_space<vmem>>, vector<1x32x384xbf16>
      %34 = vector.shape_cast %33 : vector<1x32x384xbf16> to vector<32x384xbf16>
      %c32 = arith.constant 32 : index
      %c0_21 = arith.constant 0 : index
      %35 = vector.load %arg6[%c32, %c0_21] : memref<288x384xbf16, #tpu.memory_space<vmem>>, vector<32x384xbf16>
      tpu.vector_store %arg6[%c32, %c0_21], %34 {strides = array<i32>} : memref<288x384xbf16, #tpu.memory_space<vmem>>, vector<32x384xbf16>,
      %c0_22 = arith.constant 0 : index
      %c0_23 = arith.constant 0 : index
      %c2 = arith.constant 2 : index
      %36 = vector.load %arg2[%c0_22, %c0_23, %c2] : memref<1x32x512xbf16, #tpu.memory_space<vmem>>, vector<1x32x384xbf16>
      %37 = vector.shape_cast %36 : vector<1x32x384xbf16> to vector<32x384xbf16>
      %c64 = arith.constant 64 : index
      %c0_24 = arith.constant 0 : index
      %38 = vector.load %arg6[%c64, %c0_24] : memref<288x384xbf16, #tpu.memory_space<vmem>>, vector<32x384xbf16>
      tpu.vector_store %arg6[%c64, %c0_24], %37 {strides = array<i32>} : memref<288x384xbf16, #tpu.memory_space<vmem>>, vector<32x384xbf16>,
      %c0_25 = arith.constant 0 : index
      %c0_26 = arith.constant 0 : index
      %c18 = arith.constant 18 : index
      %39 = vector.load %arg2[%c0_25, %c0_26, %c18] : memref<1x32x512xbf16, #tpu.memory_space<vmem>>, vector<1x32x384xbf16>
      %40 = vector.shape_cast %39 : vector<1x32x384xbf16> to vector<32x384xbf16>
      %c96 = arith.constant 96 : index
      %c0_27 = arith.constant 0 : index
      %41 = vector.load %arg6[%c96, %c0_27] : memref<288x384xbf16, #tpu.memory_space<vmem>>, vector<32x384xbf16>
      tpu.vector_store %arg6[%c96, %c0_27], %40 {strides = array<i32>} : memref<288x384xbf16, #tpu.memory_space<vmem>>, vector<32x384xbf16>,
      %c0_28 = arith.constant 0 : index
      %c0_29 = arith.constant 0 : index
      %c19 = arith.constant 19 : index
      %42 = vector.load %arg2[%c0_28, %c0_29, %c19] : memref<1x32x512xbf16, #tpu.memory_space<vmem>>, vector<1x32x384xbf16>
      %43 = vector.shape_cast %42 : vector<1x32x384xbf16> to vector<32x384xbf16>
      %c128 = arith.constant 128 : index
      %c0_30 = arith.constant 0 : index
      %44 = vector.load %arg6[%c128, %c0_30] : memref<288x384xbf16, #tpu.memory_space<vmem>>, vector<32x384xbf16>
      tpu.vector_store %arg6[%c128, %c0_30], %43 {strides = array<i32>} : memref<288x384xbf16, #tpu.memory_space<vmem>>, vector<32x384xbf16>,
      %c0_31 = arith.constant 0 : index
      %c0_32 = arith.constant 0 : index
      %c20 = arith.constant 20 : index
      %45 = vector.load %arg2[%c0_31, %c0_32, %c20] : memref<1x32x512xbf16, #tpu.memory_space<vmem>>, vector<1x32x384xbf16>
      %46 = vector.shape_cast %45 : vector<1x32x384xbf16> to vector<32x384xbf16>
      %c160 = arith.constant 160 : index
      %c0_33 = arith.constant 0 : index
      %47 = vector.load %arg6[%c160, %c0_33] : memref<288x384xbf16, #tpu.memory_space<vmem>>, vector<32x384xbf16>
      tpu.vector_store %arg6[%c160, %c0_33], %46 {strides = array<i32>} : memref<288x384xbf16, #tpu.memory_space<vmem>>, vector<32x384xbf16>,
      %c0_34 = arith.constant 0 : index
      %c0_35 = arith.constant 0 : index
      %c36 = arith.constant 36 : index
      %48 = vector.load %arg2[%c0_34, %c0_35, %c36] : memref<1x32x512xbf16, #tpu.memory_space<vmem>>, vector<1x32x384xbf16>
      %49 = vector.shape_cast %48 : vector<1x32x384xbf16> to vector<32x384xbf16>
      %c192 = arith.constant 192 : index
      %c0_36 = arith.constant 0 : index
      %50 = vector.load %arg6[%c192, %c0_36] : memref<288x384xbf16, #tpu.memory_space<vmem>>, vector<32x384xbf16>
      tpu.vector_store %arg6[%c192, %c0_36], %49 {strides = array<i32>} : memref<288x384xbf16, #tpu.memory_space<vmem>>, vector<32x384xbf16>,
      %c0_37 = arith.constant 0 : index
      %c0_38 = arith.constant 0 : index
      %c37 = arith.constant 37 : index
      %51 = vector.load %arg2[%c0_37, %c0_38, %c37] : memref<1x32x512xbf16, #tpu.memory_space<vmem>>, vector<1x32x384xbf16>
      %52 = vector.shape_cast %51 : vector<1x32x384xbf16> to vector<32x384xbf16>
      %c224 = arith.constant 224 : index
      %c0_39 = arith.constant 0 : index
      %53 = vector.load %arg6[%c224, %c0_39] : memref<288x384xbf16, #tpu.memory_space<vmem>>, vector<32x384xbf16>
      tpu.vector_store %arg6[%c224, %c0_39], %52 {strides = array<i32>} : memref<288x384xbf16, #tpu.memory_space<vmem>>, vector<32x384xbf16>,
      %c0_40 = arith.constant 0 : index
      %c0_41 = arith.constant 0 : index
      %c38 = arith.constant 38 : index
      %54 = vector.load %arg2[%c0_40, %c0_41, %c38] : memref<1x32x512xbf16, #tpu.memory_space<vmem>>, vector<1x32x384xbf16>
      %55 = vector.shape_cast %54 : vector<1x32x384xbf16> to vector<32x384xbf16>
      %c256 = arith.constant 256 : index
      %c0_42 = arith.constant 0 : index
      %56 = vector.load %arg6[%c256, %c0_42] : memref<288x384xbf16, #tpu.memory_space<vmem>>, vector<32x384xbf16>
      tpu.vector_store %arg6[%c256, %c0_42], %55 {strides = array<i32>} : memref<288x384xbf16, #tpu.memory_space<vmem>>, vector<32x384xbf16>,
    } else {
    }
    %c0 = arith.constant 0 : index
    %c0_1 = arith.constant 0 : index
    %3 = vector.load %arg3[%c0, %c0_1] : memref<32x288xbf16, #tpu.memory_space<vmem>>, vector<32x288xbf16>
    %c0_2 = arith.constant 0 : index
    %c0_3 = arith.constant 0 : index
    %4 = vector.load %arg6[%c0_2, %c0_3] : memref<288x384xbf16, #tpu.memory_space<vmem>>, vector<288x384xbf16>
    %cst = arith.constant dense<0.000000e+00> : vector<32x384xf32>
    %5 = tpu.matmul %3, %4, %cst {dimension_numbers = #tpu.dot_dimension_numbers<[1], [0], [0], [1], [0, 0, 1, 1], [], []>} : vector<32x288xbf16>, vector<288x384xbf16>, vector<32x384xf32> -> vector<32x384xf32>
    %c0_4 = arith.constant 0 : index
    %c0_5 = arith.constant 0 : index
    %6 = vector.load %arg4[%c0_4, %c0_5] : memref<1x384xf32, #tpu.memory_space<vmem>>, vector<1x384xf32>
    %7 = vector.broadcast %6 : vector<1x384xf32> to vector<32x384xf32>
    %8 = arith.mulf %5, %7 : vector<32x384xf32>
    %cst_6 = arith.constant dense<0.000000e+00> : vector<32xf32>
    %9 = vector.multi_reduction <add>, %8, %cst_6 [1] : vector<32x384xf32> to vector<32xf32>
    %10 = vector.shape_cast %9 : vector<32xf32> to vector<32x1xf32>
    %cst_7 = arith.constant 3.906250e-03 : f32
    %11 = vector.broadcast %cst_7 : f32 to vector<32x1xf32>
    %12 = arith.mulf %10, %11 : vector<32x1xf32>
    %13 = vector.broadcast %12 : vector<32x1xf32> to vector<32x384xf32>
    %14 = arith.subf %5, %13 : vector<32x384xf32>
    %15 = vector.broadcast %6 : vector<1x384xf32> to vector<32x384xf32>
    %16 = arith.mulf %14, %15 : vector<32x384xf32>
    %17 = arith.mulf %16, %16 : vector<32x384xf32>
    %cst_8 = arith.constant dense<0.000000e+00> : vector<32xf32>
    %18 = vector.multi_reduction <add>, %17, %cst_8 [1] : vector<32x384xf32> to vector<32xf32>
    %19 = vector.shape_cast %18 : vector<32xf32> to vector<32x1xf32>
    %cst_9 = arith.constant 3.906250e-03 : f32
    %20 = vector.broadcast %cst_9 : f32 to vector<32x1xf32>
    %21 = arith.mulf %19, %20 : vector<32x1xf32>
    %cst_10 = arith.constant 9.99999974E-6 : f32
    %22 = vector.broadcast %cst_10 : f32 to vector<32x1xf32>
    %23 = arith.addf %21, %22 : vector<32x1xf32>
    %24 = math.rsqrt %23 : vector<32x1xf32>
    %25 = vector.broadcast %24 : vector<32x1xf32> to vector<32x384xf32>
    %26 = arith.mulf %16, %25 : vector<32x384xf32>
    %c0_11 = arith.constant 0 : index
    %c0_12 = arith.constant 0 : index
    %c0_13 = arith.constant 0 : index
    %27 = vector.load %arg5[%c0_11, %c0_12, %c0_13] : memref<1x32x384xf32, #tpu.memory_space<vmem>>, vector<1x32x384xf32>
    %28 = vector.shape_cast %27 : vector<1x32x384xf32> to vector<32x384xf32>
    %29 = vector.shape_cast %26 : vector<32x384xf32> to vector<1x32x384xf32>
    tpu.vector_store %arg5[%c0_11, %c0_12, %c0_13], %29 {strides = array<i32>} : memref<1x32x384xf32, #tpu.memory_space<vmem>>, vector<1x32x384xf32>,
    return
  }
  func.func @transform_0(%arg0: i32, %arg1: i32) -> (i32, i32, i32) {
    %c0_i32 = arith.constant 0 : i32
    %c0_i32_0 = arith.constant 0 : i32
    %c0_i32_1 = arith.constant 0 : i32
    return %arg0, %c0_i32, %c0_i32_0 : i32, i32, i32
  }
  func.func @transform_1(%arg0: i32, %arg1: i32) -> (i32, i32) {
    %c0_i32 = arith.constant 0 : i32
    %c0_i32_0 = arith.constant 0 : i32
    return %arg1, %c0_i32 : i32, i32
  }
  func.func @transform_2(%arg0: i32, %arg1: i32) -> (i32, i32) {
    %c0_i32 = arith.constant 0 : i32
    %c0_i32_0 = arith.constant 0 : i32
    %c0_i32_1 = arith.constant 0 : i32
    return %c0_i32, %c0_i32_0 : i32, i32
  }
  func.func @transform_3(%arg0: i32, %arg1: i32) -> (i32, i32, i32) {
    %c0_i32 = arith.constant 0 : i32
    %c0_i32_0 = arith.constant 0 : i32
    return %arg0, %arg1, %c0_i32 : i32, i32, i32
  }
}

</mosaic_0001>

<llo_original>
// kernel: resnet_block_forward.2
$region0: #{resnet_block_forward.2}
  #allocation0 [shape = 'u32[]', space=smem, size = 0x4, offset = 0x4, fixed_abs, tag = 'smem constant byte address 0x4 - core index']
  #allocation1 [shape = 'u32[144,128]{1,0:T(1,128)}', space=vmem, size = 0x12000, scoped, tag = 'internal scratch']
  #allocation2 [shape = 'bf16[288,384]{1,0:T(8,128)(2,1)}', space=vmem, size = 0x36000, scoped, tag = 'scratch operand']
  %s0 = inlined_call_operand.vmem [shape: bf16[2,32,512], index: 0, kind: input, shape index: {}]
  %s1 = inlined_call_operand.vmem [shape: bf16[32,288], index: 1, kind: input, shape index: {}]
  %s2 = inlined_call_operand.vmem [shape: f32[1,384], index: 2, kind: input, shape index: {}]
  %s3 = inlined_call_operand.vmem [shape: bf16[2,32,384], index: 3, kind: output, shape index: {}]
  %s4 = sld [smem:[#allocation0]]
  $region49: #{resnet_block_forward.2} parent=0
    _
  %s6 = ssub.s32 1, %s4
  %s7 = scalar_select 0, %s6, %s4
  loop: start=0, step=1, limit=4
  $region2: #{resnet_block_forward.2} parent=0 // loop_pre_header
    _
  $region3: #{resnet_block_forward.2} parent=0 // loop_header
    %s9 = sphi 0, %s13
    %p10 = scmp.ge.s32.totalorder %s9, 4
    %s16 = sphi 0, %s28
    %s17 = sphi 0, %s24
    %s18 = sphi 0, %s16
    %s19 = sphi 0, %s17
    %s20 = sphi 0, %s18
    %s21 = sphi 0, %s19
    %s31 = sphi 0, %s33
    %s34 = sphi 0, %s31
    %s35 = sphi 0, %s34
    %s51 = sphi 0, %s35
    %s57 = sphi 0, %s59
    %s60 = sphi 0, %s57
    %s61 = sphi 0, %s60
    %s77 = sphi 0, %s61
    %s81 = sphi 0, %s81
    %s83 = sphi 0, %s81
    %s84 = sphi 0, %s83
    %s98 = sphi 0, %s84
    %s106 = sphi 0, %s108
    %s109 = sphi 0, %s106
    %s110 = sphi 0, %s109
    %s126 = sphi 0, %s110
  $region4: #{resnet_block_forward.2} parent=0 // loop_header_branch
    %12 = sbr.rel (%p10) target = $region8
  $region5: #{resnet_block_forward.2} parent=0 // loop_body
    %s14 = ssub.s32 %s9, 1
    %s15 = ssub.s32 %s9, 2
    %s22 = sadd.s32 1, %s17
    %p23 = scmp.ge.s32.totalorder %s22, 1
    %s24 = scalar_select %p23, 0, %s22
    %s25 = sadd.s32 1, %s16
    %s26 = scalar_select %p23, %s25, %s16
    %p27 = scmp.ge.s32.totalorder %s26, 2
    %s28 = scalar_select %p27, 0, %s26
    %s29 = ssub.s32 %s16, %s28
    %p30 = scmp.eq.s32.totalorder %s29, 0
    %s32 = sadd.s32 %s31, 1
    %s33 = scalar_select %p30, %s31, %s32
    %p36 = pneg %p30
    %p37 = scmp.eq.s32.totalorder %s9, 1
    %p38 = por %p36, %p37
    %p39 = scmp.ne.s32.totalorder %s31, %s34
    %p40 = scmp.eq.s32.totalorder %s9, 0
    %p41 = por %p39, %p40
    %p42 = scmp.ne.s32.totalorder %s31, %s34
    %p43 = scmp.eq.s32.totalorder %s14, 1
    %p44 = por %p42, %p43
    %p45 = scmp.ne.s32.totalorder %s34, %s35
    %p46 = scmp.eq.s32.totalorder %s14, 0
    %p47 = por %p45, %p46
    %p48 = scmp.ne.s32.totalorder %s34, %s35
    %p49 = scmp.eq.s32.totalorder %s15, 1
    %p50 = por %p48, %p49
    %p52 = scmp.ne.s32.totalorder %s35, %s51
    %p53 = scmp.eq.s32.totalorder %s15, 0
    %p54 = por %p52, %p53
    %s55 = ssub.s32 %s17, %s24
    %p56 = scmp.eq.s32.totalorder %s55, 0
    %s58 = sadd.s32 %s57, 1
    %s59 = scalar_select %p56, %s57, %s58
    %p62 = pneg %p56
    %p63 = scmp.eq.s32.totalorder %s9, 1
    %p64 = por %p62, %p63
    %p65 = scmp.ne.s32.totalorder %s57, %s60
    %p66 = scmp.eq.s32.totalorder %s9, 0
    %p67 = por %p65, %p66
    %p68 = scmp.ne.s32.totalorder %s57, %s60
    %p69 = scmp.eq.s32.totalorder %s14, 1
    %p70 = por %p68, %p69
    %p71 = scmp.ne.s32.totalorder %s60, %s61
    %p72 = scmp.eq.s32.totalorder %s14, 0
    %p73 = por %p71, %p72
    %p74 = scmp.ne.s32.totalorder %s60, %s61
    %p75 = scmp.eq.s32.totalorder %s15, 1
    %p76 = por %p74, %p75
    %p78 = scmp.ne.s32.totalorder %s61, %s77
    %p79 = scmp.eq.s32.totalorder %s15, 0
    %p80 = por %p78, %p79
    %s82 = sadd.s32 %s81, 1
    %p85 = scmp.eq.s32.totalorder %s9, 1
    %p86 = scmp.ne.s32.totalorder %s81, %s83
    %p87 = scmp.eq.s32.totalorder %s9, 0
    %p88 = por %p86, %p87
    %p89 = scmp.ne.s32.totalorder %s81, %s83
    %p90 = scmp.eq.s32.totalorder %s14, 1
    %p91 = por %p89, %p90
    %p92 = scmp.ne.s32.totalorder %s83, %s84
    %p93 = scmp.eq.s32.totalorder %s14, 0
    %p94 = por %p92, %p93
    %p95 = scmp.ne.s32.totalorder %s83, %s84
    %p96 = scmp.eq.s32.totalorder %s15, 1
    %p97 = por %p95, %p96
    %p99 = scmp.ne.s32.totalorder %s84, %s98
    %p100 = scmp.eq.s32.totalorder %s15, 0
    %p101 = por %p99, %p100
    %s102 = ssub.s32 %s16, %s28
    %s103 = ssub.s32 %s17, %s24
    %s104 = sor.u32 %s102, %s103
    %p105 = scmp.eq.s32.totalorder %s104, 0
    %s107 = sadd.s32 %s106, 1
    %s108 = scalar_select %p105, %s106, %s107
    %p111 = pneg %p105
    %p112 = scmp.eq.s32.totalorder %s9, 1
    %p113 = por %p111, %p112
    %p114 = scmp.ne.s32.totalorder %s106, %s109
    %p115 = scmp.eq.s32.totalorder %s9, 0
    %p116 = por %p114, %p115
    %p117 = scmp.ne.s32.totalorder %s106, %s109
    %p118 = scmp.eq.s32.totalorder %s14, 1
    %p119 = por %p117, %p118
    %p120 = scmp.ne.s32.totalorder %s109, %s110
    %p121 = scmp.eq.s32.totalorder %s14, 0
    %p122 = por %p120, %p121
    %p123 = scmp.ne.s32.totalorder %s109, %s110
    %p124 = scmp.eq.s32.totalorder %s15, 1
    %p125 = por %p123, %p124
    %p127 = scmp.ne.s32.totalorder %s110, %s126
    %p128 = scmp.eq.s32.totalorder %s15, 0
    %p129 = por %p127, %p128
    %p130 = scmp.le.s32.totalorder 1, %s9
    %p131 = scmp.lt.s32.totalorder %s9, 3
    %p132 = pnand %p130, %p131
    %p133 = pneg %p132
    // Predicated region
    $region9: #{resnet_block_forward.2} parent=5 // pred_check
      _
    $region10: #{resnet_block_forward.2} parent=5 // pred_check_branch
      %135 = sbr.rel (%p132) target = $region12
    $region11: #{resnet_block_forward.2} parent=5 // pred_region
      %s136 = ssub.s32 %s9, 1
      // Predicated region
      $region13: #{resnet_block_forward.2} parent=11 // pred_check
        %p137 = pneg %p73
      $region14: #{resnet_block_forward.2} parent=11 // pred_check_branch
        %139 = sbr.rel (%p137) target = $region16
      $region15: #{resnet_block_forward.2} parent=11 // pred_region
        %s140 = smul.u32 4, %s19
        %p141 = scmp.lt.s32.totalorder %s140, 3
        %s142 = scalar_select %p141, %s140, 3
        %s143 = smul.addr %s142, 3
        %s144 = smul.addr %s143, 4
        %s145 = scalar_lea.vmem %s1, %s144
        %s146 = smul.u32 4, %s19
      $region16: #{resnet_block_forward.2} parent=11 // pred_fallthru
        _
      // Predicated region
      $region17: #{resnet_block_forward.2} parent=11 // pred_check
        %p147 = pneg %p94
      $region18: #{resnet_block_forward.2} parent=11 // pred_check_branch
        %149 = sbr.rel (%p147) target = $region20
      $region19: #{resnet_block_forward.2} parent=11 // pred_region
        _
      $region20: #{resnet_block_forward.2} parent=11 // pred_fallthru
        _
    $region12: #{resnet_block_forward.2} parent=5 // pred_fallthru
      _
    %p150 = scmp.lt.s32.totalorder %s9, 2
    // Predicated region
    $region21: #{resnet_block_forward.2} parent=5 // pred_check
      %p151 = pneg %p150
    $region22: #{resnet_block_forward.2} parent=5 // pred_check_branch
      %153 = sbr.rel (%p151) target = $region24
    $region23: #{resnet_block_forward.2} parent=5 // pred_region
      // Predicated region
      $region25: #{resnet_block_forward.2} parent=23 // pred_check
        %p154 = pneg %p41
      $region26: #{resnet_block_forward.2} parent=23 // pred_check_branch
        %156 = sbr.rel (%p154) target = $region28
      $region27: #{resnet_block_forward.2} parent=23 // pred_region
        %p157 = scmp.lt.s32.totalorder %s16, 1
        %s158 = scalar_select %p157, %s16, 1
        %s159 = smul.addr %s158, 16
        %s160 = smul.addr %s159, 4
        %s161 = scalar_lea.vmem %s0, %s160
      $region28: #{resnet_block_forward.2} parent=23 // pred_fallthru
        _
    $region24: #{resnet_block_forward.2} parent=5 // pred_fallthru
      _
    %p162 = scmp.le.s32.totalorder 1, %s9
    %p163 = scmp.lt.s32.totalorder %s9, 3
    %p164 = pnand %p162, %p163
    %p165 = pneg %p164
    // Predicated region
    $region29: #{resnet_block_forward.2} parent=5 // pred_check
      _
    $region30: #{resnet_block_forward.2} parent=5 // pred_check_branch
      %167 = sbr.rel (%p164) target = $region32
    $region31: #{resnet_block_forward.2} parent=5 // pred_region
      %s168 = ssub.s32 %s9, 1
      %p169 = scmp.lt.s32.totalorder %s18, 1
      %s170 = scalar_select %p169, %s18, 1
      %s171 = smul.addr %s170, 16
      %s172 = smul.addr %s171, 4
      %s173 = scalar_lea.vmem %s0, %s172
      %p174 = pneg %p47
      %p175 = pneg %p44
      %s176 = smul.u32 4, %s19
      %p177 = scmp.lt.s32.totalorder %s176, 3
      %s178 = scalar_select %p177, %s176, 3
      %s179 = smul.addr %s178, 3
      %s180 = smul.addr %s179, 4
      %s181 = scalar_lea.vmem %s1, %s180
      %p182 = pneg %p73
      %p183 = pneg %p70
      %p184 = pneg %p94
      %p185 = pneg %p91
      %p186 = pneg %p122
      %p187 = pneg %p119
      %s188 = smul.u32 4, %s19
      %p189 = scmp.lt.s32.totalorder %s18, 1
      %s190 = scalar_select %p189, %s18, 1
      %p191 = scmp.lt.s32.totalorder %s188, 3
      %s192 = scalar_select %p191, %s188, 3
      %s193 = smul.addr %s192, 3
      %s194 = smul.addr %s190, 12
      %s195 = sadd.s32 %s193, %s194
      %s196 = smul.addr %s195, 4
      %s197 = scalar_lea.vmem %s3, %s196
      %p198 = scmp.lt.s32.totalorder %s18, 1
      %s199 = scalar_select %p198, %s18, 1
      %s200 = smul.addr %s199, 16
      %s201 = smul.addr %s200, 4
      %s202 = scalar_lea.vmem %s0, %s201
      %s203 = smul.u32 4, %s19
      %p204 = scmp.lt.s32.totalorder %s203, 3
      %s205 = scalar_select %p204, %s203, 3
      %s206 = smul.addr %s205, 3
      %s207 = smul.addr %s206, 4
      %s208 = scalar_lea.vmem %s1, %s207
      %s209 = smul.u32 4, %s19
      %s210 = smul.u32 4, %s19
      %p211 = scmp.lt.s32.totalorder %s18, 1
      %s212 = scalar_select %p211, %s18, 1
      %p213 = scmp.lt.s32.totalorder %s210, 3
      %s214 = scalar_select %p213, %s210, 3
      %s215 = smul.addr %s214, 3
      %s216 = smul.addr %s212, 12
      %s217 = sadd.s32 %s215, %s216
      %s218 = smul.addr %s217, 4
      %s219 = scalar_lea.vmem %s3, %s218
      %s220 = smul.u32 4, %s19
      %p222 = scmp.eq.s32.totalorder %s19, 0
      // Predicated region
      $region33: #{resnet_block_forward.2} parent=31 // pred_check
        %p223 = pneg %p222
      $region34: #{resnet_block_forward.2} parent=31 // pred_check_branch
        %225 = sbr.rel (%p223) target = $region36
      $region35: #{resnet_block_forward.2} parent=31 // pred_region
        %v226 = vld [vmem:[%s202] sm:$0xff]
        %v227 = vld [vmem:[%s202 + $0x8] sm:$0xf]
        %v228 = vld [vmem:[%s202 + $0x10] sm:$0xff]
        %v229 = vld [vmem:[%s202 + $0x18] sm:$0xf]
        %v230 = vld [vmem:[%s202 + $0x20] sm:$0xff]
        %v231 = vld [vmem:[%s202 + $0x28] sm:$0xf]
        %v232 = vld [vmem:[%s202 + $0x30] sm:$0xff]
        %v233 = vld [vmem:[%s202 + $0x38] sm:$0xf]
        %234 = vst [vmem:[#allocation2] sm:$0xff] %v226
        %235 = vst [vmem:[#allocation2 + $0x8] sm:$0xf] %v227
        %236 = vst [vmem:[#allocation2 + $0xc] sm:$0xff] %v228
        %237 = vst [vmem:[#allocation2 + $0x14] sm:$0xf] %v229
        %238 = vst [vmem:[#allocation2 + $0x18] sm:$0xff] %v230
        %239 = vst [vmem:[#allocation2 + $0x20] sm:$0xf] %v231
        %240 = vst [vmem:[#allocation2 + $0x24] sm:$0xff] %v232
        %241 = vst [vmem:[#allocation2 + $0x2c] sm:$0xf] %v233
        %v242 = vld [vmem:[%s202] sm:$0xff]
        %v243 = vld [vmem:[%s202 + $0x8] sm:$0xff]
        %v244 = vld [vmem:[%s202 + $0x10] sm:$0xff]
        %v245 = vld [vmem:[%s202 + $0x18] sm:$0xff]
        %v246 = vld [vmem:[%s202 + $0x20] sm:$0xff]
        %v247 = vld [vmem:[%s202 + $0x28] sm:$0xff]
        %v248 = vld [vmem:[%s202 + $0x30] sm:$0xff]
        %v249 = vld [vmem:[%s202 + $0x38] sm:$0xff]
        %258 = vrot.lane.b32.xlu0 %v242, 127
        %v259 = vpop.permute.xlu0 %258
        %260 = vrot.lane.b32.xlu0 %v243, 127
        %v261 = vpop.permute.xlu0 %260
        %262 = vrot.lane.b32.xlu0 %v244, 127
        %v263 = vpop.permute.xlu0 %262
        %264 = vrot.lane.b32.xlu0 %v245, 127
        %v265 = vpop.permute.xlu0 %264
        %266 = vrot.lane.b32.xlu0 %v246, 127
        %v267 = vpop.permute.xlu0 %266
        %268 = vrot.lane.b32.xlu0 %v247, 127
        %v269 = vpop.permute.xlu0 %268
        %270 = vrot.lane.b32.xlu0 %v248, 127
        %v271 = vpop.permute.xlu0 %270
        %272 = vrot.lane.b32.xlu0 %v249, 127
        %v273 = vpop.permute.xlu0 %272
        %v274 = vrot.slane %v259, 4
        %v275 = vrot.slane %v261, 4
        %v276 = vrot.slane %v263, 4
        %v277 = vrot.slane %v265, 4
        %v278 = vrot.slane %v267, 4
        %v279 = vrot.slane %v269, 4
        %v280 = vrot.slane %v271, 4
        %v281 = vrot.slane %v273, 4
        %vm282 = vcmask 1043456
        %v283 = vsel %vm282, %v274, %v275
        %vm284 = vcmask 1039360
        %v285 = vsel %vm284, %v259, %v283
        %v286 = vsel %vm284, %v261, %v275
        %v287 = vsel %vm282, %v276, %v277
        %v288 = vsel %vm284, %v263, %v287
        %v289 = vsel %vm284, %v265, %v277
        %v290 = vsel %vm282, %v278, %v279
        %v291 = vsel %vm284, %v267, %v290
        %v292 = vsel %vm284, %v269, %v279
        %v293 = vsel %vm282, %v280, %v281
        %v294 = vsel %vm284, %v271, %v293
        %v295 = vsel %vm284, %v273, %v281
        %304 = vst [vmem:[#allocation2 + $0x30] sm:$0xff] %v285
        %305 = vst [vmem:[#allocation2 + $0x38] sm:$0xf] %v286
        %306 = vst [vmem:[#allocation2 + $0x3c] sm:$0xff] %v288
        %307 = vst [vmem:[#allocation2 + $0x44] sm:$0xf] %v289
        %308 = vst [vmem:[#allocation2 + $0x48] sm:$0xff] %v291
        %309 = vst [vmem:[#allocation2 + $0x50] sm:$0xf] %v292
        %310 = vst [vmem:[#allocation2 + $0x54] sm:$0xff] %v294
        %311 = vst [vmem:[#allocation2 + $0x5c] sm:$0xf] %v295
        %v312 = vld [vmem:[%s202] sm:$0xff]
        %v313 = vld [vmem:[%s202 + $0x8] sm:$0xff]
        %v314 = vld [vmem:[%s202 + $0x10] sm:$0xff]
        %v315 = vld [vmem:[%s202 + $0x18] sm:$0xff]
        %v316 = vld [vmem:[%s202 + $0x20] sm:$0xff]
        %v317 = vld [vmem:[%s202 + $0x28] sm:$0xff]
        %v318 = vld [vmem:[%s202 + $0x30] sm:$0xff]
        %v319 = vld [vmem:[%s202 + $0x38] sm:$0xff]
        %328 = vrot.lane.b32.xlu0 %v312, 126
        %v329 = vpop.permute.xlu0 %328
        %330 = vrot.lane.b32.xlu0 %v313, 126
        %v331 = vpop.permute.xlu0 %330
        %332 = vrot.lane.b32.xlu0 %v314, 126
        %v333 = vpop.permute.xlu0 %332
        %334 = vrot.lane.b32.xlu0 %v315, 126
        %v335 = vpop.permute.xlu0 %334
        %336 = vrot.lane.b32.xlu0 %v316, 126
        %v337 = vpop.permute.xlu0 %336
        %338 = vrot.lane.b32.xlu0 %v317, 126
        %v339 = vpop.permute.xlu0 %338
        %340 = vrot.lane.b32.xlu0 %v318, 126
        %v341 = vpop.permute.xlu0 %340
        %342 = vrot.lane.b32.xlu0 %v319, 126
        %v343 = vpop.permute.xlu0 %342
        %v344 = vrot.slane %v329, 4
        %v345 = vrot.slane %v331, 4
        %v346 = vrot.slane %v333, 4
        %v347 = vrot.slane %v335, 4
        %v348 = vrot.slane %v337, 4
        %v349 = vrot.slane %v339, 4
        %v350 = vrot.slane %v341, 4
        %v351 = vrot.slane %v343, 4
        %v352 = vsel %vm282, %v344, %v345
        %vm353 = vcmask 1031168
        %v354 = vsel %vm353, %v329, %v352
        %v355 = vsel %vm353, %v331, %v345
        %v356 = vsel %vm282, %v346, %v347
        %v357 = vsel %vm353, %v333, %v356
        %v358 = vsel %vm353, %v335, %v347
        %v359 = vsel %vm282, %v348, %v349
        %v360 = vsel %vm353, %v337, %v359
        %v361 = vsel %vm353, %v339, %v349
        %v362 = vsel %vm282, %v350, %v351
        %v363 = vsel %vm353, %v341, %v362
        %v364 = vsel %vm353, %v343, %v351
        %373 = vst [vmem:[#allocation2 + $0x60] sm:$0xff] %v354
        %374 = vst [vmem:[#allocation2 + $0x68] sm:$0xf] %v355
        %375 = vst [vmem:[#allocation2 + $0x6c] sm:$0xff] %v357
        %376 = vst [vmem:[#allocation2 + $0x74] sm:$0xf] %v358
        %377 = vst [vmem:[#allocation2 + $0x78] sm:$0xff] %v360
        %378 = vst [vmem:[#allocation2 + $0x80] sm:$0xf] %v361
        %379 = vst [vmem:[#allocation2 + $0x84] sm:$0xff] %v363
        %380 = vst [vmem:[#allocation2 + $0x8c] sm:$0xf] %v364
        %v381 = vld [vmem:[%s202] sm:$0xff]
        %v382 = vld [vmem:[%s202 + $0x8] sm:$0xff]
        %v383 = vld [vmem:[%s202 + $0x10] sm:$0xff]
        %v384 = vld [vmem:[%s202 + $0x18] sm:$0xff]
        %v385 = vld [vmem:[%s202 + $0x20] sm:$0xff]
        %v386 = vld [vmem:[%s202 + $0x28] sm:$0xff]
        %v387 = vld [vmem:[%s202 + $0x30] sm:$0xff]
        %v388 = vld [vmem:[%s202 + $0x38] sm:$0xff]
        %397 = vrot.lane.b32.xlu0 %v381, 110
        %v398 = vpop.permute.xlu0 %397
        %399 = vrot.lane.b32.xlu0 %v382, 110
        %v400 = vpop.permute.xlu0 %399
        %401 = vrot.lane.b32.xlu0 %v383, 110
        %v402 = vpop.permute.xlu0 %401
        %403 = vrot.lane.b32.xlu0 %v384, 110
        %v404 = vpop.permute.xlu0 %403
        %405 = vrot.lane.b32.xlu0 %v385, 110
        %v406 = vpop.permute.xlu0 %405
        %407 = vrot.lane.b32.xlu0 %v386, 110
        %v408 = vpop.permute.xlu0 %407
        %409 = vrot.lane.b32.xlu0 %v387, 110
        %v410 = vpop.permute.xlu0 %409
        %411 = vrot.lane.b32.xlu0 %v388, 110
        %v412 = vpop.permute.xlu0 %411
        %v413 = vrot.slane %v398, 4
        %v414 = vrot.slane %v400, 4
        %v415 = vrot.slane %v402, 4
        %v416 = vrot.slane %v404, 4
        %v417 = vrot.slane %v406, 4
        %v418 = vrot.slane %v408, 4
        %v419 = vrot.slane %v410, 4
        %v420 = vrot.slane %v412, 4
        %v421 = vsel %vm282, %v413, %v414
        %vm422 = vcmask 900096
        %v423 = vsel %vm422, %v398, %v421
        %v424 = vsel %vm422, %v400, %v414
        %v425 = vsel %vm282, %v415, %v416
        %v426 = vsel %vm422, %v402, %v425
        %v427 = vsel %vm422, %v404, %v416
        %v428 = vsel %vm282, %v417, %v418
        %v429 = vsel %vm422, %v406, %v428
        %v430 = vsel %vm422, %v408, %v418
        %v431 = vsel %vm282, %v419, %v420
        %v432 = vsel %vm422, %v410, %v431
        %v433 = vsel %vm422, %v412, %v420
        %442 = vst [vmem:[#allocation2 + $0x90] sm:$0xff] %v423
        %443 = vst [vmem:[#allocation2 + $0x98] sm:$0xf] %v424
        %444 = vst [vmem:[#allocation2 + $0x9c] sm:$0xff] %v426
        %445 = vst [vmem:[#allocation2 + $0xa4] sm:$0xf] %v427
        %446 = vst [vmem:[#allocation2 + $0xa8] sm:$0xff] %v429
        %447 = vst [vmem:[#allocation2 + $0xb0] sm:$0xf] %v430
        %448 = vst [vmem:[#allocation2 + $0xb4] sm:$0xff] %v432
        %449 = vst [vmem:[#allocation2 + $0xbc] sm:$0xf] %v433
        %v450 = vld [vmem:[%s202] sm:$0xff]
        %v451 = vld [vmem:[%s202 + $0x8] sm:$0xff]
        %v452 = vld [vmem:[%s202 + $0x10] sm:$0xff]
        %v453 = vld [vmem:[%s202 + $0x18] sm:$0xff]
        %v454 = vld [vmem:[%s202 + $0x20] sm:$0xff]
        %v455 = vld [vmem:[%s202 + $0x28] sm:$0xff]
        %v456 = vld [vmem:[%s202 + $0x30] sm:$0xff]
        %v457 = vld [vmem:[%s202 + $0x38] sm:$0xff]
        %466 = vrot.lane.b32.xlu0 %v450, 109
        %v467 = vpop.permute.xlu0 %466
        %468 = vrot.lane.b32.xlu0 %v451, 109
        %v469 = vpop.permute.xlu0 %468
        %470 = vrot.lane.b32.xlu0 %v452, 109
        %v471 = vpop.permute.xlu0 %470
        %472 = vrot.lane.b32.xlu0 %v453, 109
        %v473 = vpop.permute.xlu0 %472
        %474 = vrot.lane.b32.xlu0 %v454, 109
        %v475 = vpop.permute.xlu0 %474
        %476 = vrot.lane.b32.xlu0 %v455, 109
        %v477 = vpop.permute.xlu0 %476
        %478 = vrot.lane.b32.xlu0 %v456, 109
        %v479 = vpop.permute.xlu0 %478
        %480 = vrot.lane.b32.xlu0 %v457, 109
        %v481 = vpop.permute.xlu0 %480
        %v482 = vrot.slane %v467, 4
        %v483 = vrot.slane %v469, 4
        %v484 = vrot.slane %v471, 4
        %v485 = vrot.slane %v473, 4
        %v486 = vrot.slane %v475, 4
        %v487 = vrot.slane %v477, 4
        %v488 = vrot.slane %v479, 4
        %v489 = vrot.slane %v481, 4
        %v490 = vsel %vm282, %v482, %v483
        %vm491 = vcmask 891904
        %v492 = vsel %vm491, %v467, %v490
        %v493 = vsel %vm491, %v469, %v483
        %v494 = vsel %vm282, %v484, %v485
        %v495 = vsel %vm491, %v471, %v494
        %v496 = vsel %vm491, %v473, %v485
        %v497 = vsel %vm282, %v486, %v487
        %v498 = vsel %vm491, %v475, %v497
        %v499 = vsel %vm491, %v477, %v487
        %v500 = vsel %vm282, %v488, %v489
        %v501 = vsel %vm491, %v479, %v500
        %v502 = vsel %vm491, %v481, %v489
        %511 = vst [vmem:[#allocation2 + $0xc0] sm:$0xff] %v492
        %512 = vst [vmem:[#allocation2 + $0xc8] sm:$0xf] %v493
        %513 = vst [vmem:[#allocation2 + $0xcc] sm:$0xff] %v495
        %514 = vst [vmem:[#allocation2 + $0xd4] sm:$0xf] %v496
        %515 = vst [vmem:[#allocation2 + $0xd8] sm:$0xff] %v498
        %516 = vst [vmem:[#allocation2 + $0xe0] sm:$0xf] %v499
        %517 = vst [vmem:[#allocation2 + $0xe4] sm:$0xff] %v501
        %518 = vst [vmem:[#allocation2 + $0xec] sm:$0xf] %v502
        %v519 = vld [vmem:[%s202] sm:$0xff]
        %v520 = vld [vmem:[%s202 + $0x8] sm:$0xff]
        %v521 = vld [vmem:[%s202 + $0x10] sm:$0xff]
        %v522 = vld [vmem:[%s202 + $0x18] sm:$0xff]
        %v523 = vld [vmem:[%s202 + $0x20] sm:$0xff]
        %v524 = vld [vmem:[%s202 + $0x28] sm:$0xff]
        %v525 = vld [vmem:[%s202 + $0x30] sm:$0xff]
        %v526 = vld [vmem:[%s202 + $0x38] sm:$0xff]
        %535 = vrot.lane.b32.xlu0 %v519, 108
        %v536 = vpop.permute.xlu0 %535
        %537 = vrot.lane.b32.xlu0 %v520, 108
        %v538 = vpop.permute.xlu0 %537
        %539 = vrot.lane.b32.xlu0 %v521, 108
        %v540 = vpop.permute.xlu0 %539
        %541 = vrot.lane.b32.xlu0 %v522, 108
        %v542 = vpop.permute.xlu0 %541
        %543 = vrot.lane.b32.xlu0 %v523, 108
        %v544 = vpop.permute.xlu0 %543
        %545 = vrot.lane.b32.xlu0 %v524, 108
        %v546 = vpop.permute.xlu0 %545
        %547 = vrot.lane.b32.xlu0 %v525, 108
        %v548 = vpop.permute.xlu0 %547
        %549 = vrot.lane.b32.xlu0 %v526, 108
        %v550 = vpop.permute.xlu0 %549
        %v551 = vrot.slane %v536, 4
        %v552 = vrot.slane %v538, 4
        %v553 = vrot.slane %v540, 4
        %v554 = vrot.slane %v542, 4
        %v555 = vrot.slane %v544, 4
        %v556 = vrot.slane %v546, 4
        %v557 = vrot.slane %v548, 4
        %v558 = vrot.slane %v550, 4
        %v559 = vsel %vm282, %v551, %v552
        %vm560 = vcmask 883712
        %v561 = vsel %vm560, %v536, %v559
        %v562 = vsel %vm560, %v538, %v552
        %v563 = vsel %vm282, %v553, %v554
        %v564 = vsel %vm560, %v540, %v563
        %v565 = vsel %vm560, %v542, %v554
        %v566 = vsel %vm282, %v555, %v556
        %v567 = vsel %vm560, %v544, %v566
        %v568 = vsel %vm560, %v546, %v556
        %v569 = vsel %vm282, %v557, %v558
        %v570 = vsel %vm560, %v548, %v569
        %v571 = vsel %vm560, %v550, %v558
        %580 = vst [vmem:[#allocation2 + $0xf0] sm:$0xff] %v561
        %581 = vst [vmem:[#allocation2 + $0xf8] sm:$0xf] %v562
        %582 = vst [vmem:[#allocation2 + $0xfc] sm:$0xff] %v564
        %583 = vst [vmem:[#allocation2 + $0x104] sm:$0xf] %v565
        %584 = vst [vmem:[#allocation2 + $0x108] sm:$0xff] %v567
        %585 = vst [vmem:[#allocation2 + $0x110] sm:$0xf] %v568
        %586 = vst [vmem:[#allocation2 + $0x114] sm:$0xff] %v570
        %587 = vst [vmem:[#allocation2 + $0x11c] sm:$0xf] %v571
        %v588 = vld [vmem:[%s202] sm:$0xff]
        %v589 = vld [vmem:[%s202 + $0x8] sm:$0xff]
        %v590 = vld [vmem:[%s202 + $0x10] sm:$0xff]
        %v591 = vld [vmem:[%s202 + $0x18] sm:$0xff]
        %v592 = vld [vmem:[%s202 + $0x20] sm:$0xff]
        %v593 = vld [vmem:[%s202 + $0x28] sm:$0xff]
        %v594 = vld [vmem:[%s202 + $0x30] sm:$0xff]
        %v595 = vld [vmem:[%s202 + $0x38] sm:$0xff]
        %604 = vrot.lane.b32.xlu0 %v588, 92
        %v605 = vpop.permute.xlu0 %604
        %606 = vrot.lane.b32.xlu0 %v589, 92
        %v607 = vpop.permute.xlu0 %606
        %608 = vrot.lane.b32.xlu0 %v590, 92
        %v609 = vpop.permute.xlu0 %608
        %610 = vrot.lane.b32.xlu0 %v591, 92
        %v611 = vpop.permute.xlu0 %610
        %612 = vrot.lane.b32.xlu0 %v592, 92
        %v613 = vpop.permute.xlu0 %612
        %614 = vrot.lane.b32.xlu0 %v593, 92
        %v615 = vpop.permute.xlu0 %614
        %616 = vrot.lane.b32.xlu0 %v594, 92
        %v617 = vpop.permute.xlu0 %616
        %618 = vrot.lane.b32.xlu0 %v595, 92
        %v619 = vpop.permute.xlu0 %618
        %v620 = vrot.slane %v605, 4
        %v621 = vrot.slane %v607, 4
        %v622 = vrot.slane %v609, 4
        %v623 = vrot.slane %v611, 4
        %v624 = vrot.slane %v613, 4
        %v625 = vrot.slane %v615, 4
        %v626 = vrot.slane %v617, 4
        %v627 = vrot.slane %v619, 4
        %v628 = vsel %vm282, %v620, %v621
        %vm629 = vcmask 752640
        %v630 = vsel %vm629, %v605, %v628
        %v631 = vsel %vm629, %v607, %v621
        %v632 = vsel %vm282, %v622, %v623
        %v633 = vsel %vm629, %v609, %v632
        %v634 = vsel %vm629, %v611, %v623
        %v635 = vsel %vm282, %v624, %v625
        %v636 = vsel %vm629, %v613, %v635
        %v637 = vsel %vm629, %v615, %v625
        %v638 = vsel %vm282, %v626, %v627
        %v639 = vsel %vm629, %v617, %v638
        %v640 = vsel %vm629, %v619, %v627
        %649 = vst [vmem:[#allocation2 + $0x120] sm:$0xff] %v630
        %650 = vst [vmem:[#allocation2 + $0x128] sm:$0xf] %v631
        %651 = vst [vmem:[#allocation2 + $0x12c] sm:$0xff] %v633
        %652 = vst [vmem:[#allocation2 + $0x134] sm:$0xf] %v634
        %653 = vst [vmem:[#allocation2 + $0x138] sm:$0xff] %v636
        %654 = vst [vmem:[#allocation2 + $0x140] sm:$0xf] %v637
        %655 = vst [vmem:[#allocation2 + $0x144] sm:$0xff] %v639
        %656 = vst [vmem:[#allocation2 + $0x14c] sm:$0xf] %v640
        %v657 = vld [vmem:[%s202] sm:$0xff]
        %v658 = vld [vmem:[%s202 + $0x8] sm:$0xff]
        %v659 = vld [vmem:[%s202 + $0x10] sm:$0xff]
        %v660 = vld [vmem:[%s202 + $0x18] sm:$0xff]
        %v661 = vld [vmem:[%s202 + $0x20] sm:$0xff]
        %v662 = vld [vmem:[%s202 + $0x28] sm:$0xff]
        %v663 = vld [vmem:[%s202 + $0x30] sm:$0xff]
        %v664 = vld [vmem:[%s202 + $0x38] sm:$0xff]
        %673 = vrot.lane.b32.xlu0 %v657, 91
        %v674 = vpop.permute.xlu0 %673
        %675 = vrot.lane.b32.xlu0 %v658, 91
        %v676 = vpop.permute.xlu0 %675
        %677 = vrot.lane.b32.xlu0 %v659, 91
        %v678 = vpop.permute.xlu0 %677
        %679 = vrot.lane.b32.xlu0 %v660, 91
        %v680 = vpop.permute.xlu0 %679
        %681 = vrot.lane.b32.xlu0 %v661, 91
        %v682 = vpop.permute.xlu0 %681
        %683 = vrot.lane.b32.xlu0 %v662, 91
        %v684 = vpop.permute.xlu0 %683
        %685 = vrot.lane.b32.xlu0 %v663, 91
        %v686 = vpop.permute.xlu0 %685
        %687 = vrot.lane.b32.xlu0 %v664, 91
        %v688 = vpop.permute.xlu0 %687
        %v689 = vrot.slane %v674, 4
        %v690 = vrot.slane %v676, 4
        %v691 = vrot.slane %v678, 4
        %v692 = vrot.slane %v680, 4
        %v693 = vrot.slane %v682, 4
        %v694 = vrot.slane %v684, 4
        %v695 = vrot.slane %v686, 4
        %v696 = vrot.slane %v688, 4
        %v697 = vsel %vm282, %v689, %v690
        %vm698 = vcmask 744448
        %v699 = vsel %vm698, %v674, %v697
        %v700 = vsel %vm698, %v676, %v690
        %v701 = vsel %vm282, %v691, %v692
        %v702 = vsel %vm698, %v678, %v701
        %v703 = vsel %vm698, %v680, %v692
        %v704 = vsel %vm282, %v693, %v694
        %v705 = vsel %vm698, %v682, %v704
        %v706 = vsel %vm698, %v684, %v694
        %v707 = vsel %vm282, %v695, %v696
        %v708 = vsel %vm698, %v686, %v707
        %v709 = vsel %vm698, %v688, %v696
        %718 = vst [vmem:[#allocation2 + $0x150] sm:$0xff] %v699
        %719 = vst [vmem:[#allocation2 + $0x158] sm:$0xf] %v700
        %720 = vst [vmem:[#allocation2 + $0x15c] sm:$0xff] %v702
        %721 = vst [vmem:[#allocation2 + $0x164] sm:$0xf] %v703
        %722 = vst [vmem:[#allocation2 + $0x168] sm:$0xff] %v705
        %723 = vst [vmem:[#allocation2 + $0x170] sm:$0xf] %v706
        %724 = vst [vmem:[#allocation2 + $0x174] sm:$0xff] %v708
        %725 = vst [vmem:[#allocation2 + $0x17c] sm:$0xf] %v709
        %v726 = vld [vmem:[%s202] sm:$0xff]
        %v727 = vld [vmem:[%s202 + $0x8] sm:$0xff]
        %v728 = vld [vmem:[%s202 + $0x10] sm:$0xff]
        %v729 = vld [vmem:[%s202 + $0x18] sm:$0xff]
        %v730 = vld [vmem:[%s202 + $0x20] sm:$0xff]
        %v731 = vld [vmem:[%s202 + $0x28] sm:$0xff]
        %v732 = vld [vmem:[%s202 + $0x30] sm:$0xff]
        %v733 = vld [vmem:[%s202 + $0x38] sm:$0xff]
        %742 = vrot.lane.b32.xlu0 %v726, 90
        %v743 = vpop.permute.xlu0 %742
        %744 = vrot.lane.b32.xlu0 %v727, 90
        %v745 = vpop.permute.xlu0 %744
        %746 = vrot.lane.b32.xlu0 %v728, 90
        %v747 = vpop.permute.xlu0 %746
        %748 = vrot.lane.b32.xlu0 %v729, 90
        %v749 = vpop.permute.xlu0 %748
        %750 = vrot.lane.b32.xlu0 %v730, 90
        %v751 = vpop.permute.xlu0 %750
        %752 = vrot.lane.b32.xlu0 %v731, 90
        %v753 = vpop.permute.xlu0 %752
        %754 = vrot.lane.b32.xlu0 %v732, 90
        %v755 = vpop.permute.xlu0 %754
        %756 = vrot.lane.b32.xlu0 %v733, 90
        %v757 = vpop.permute.xlu0 %756
        %v758 = vrot.slane %v743, 4
        %v759 = vrot.slane %v745, 4
        %v760 = vrot.slane %v747, 4
        %v761 = vrot.slane %v749, 4
        %v762 = vrot.slane %v751, 4
        %v763 = vrot.slane %v753, 4
        %v764 = vrot.slane %v755, 4
        %v765 = vrot.slane %v757, 4
        %v766 = vsel %vm282, %v758, %v759
        %vm767 = vcmask 736256
        %v768 = vsel %vm767, %v743, %v766
        %v769 = vsel %vm767, %v745, %v759
        %v770 = vsel %vm282, %v760, %v761
        %v771 = vsel %vm767, %v747, %v770
        %v772 = vsel %vm767, %v749, %v761
        %v773 = vsel %vm282, %v762, %v763
        %v774 = vsel %vm767, %v751, %v773
        %v775 = vsel %vm767, %v753, %v763
        %v776 = vsel %vm282, %v764, %v765
        %v777 = vsel %vm767, %v755, %v776
        %v778 = vsel %vm767, %v757, %v765
        %787 = vst [vmem:[#allocation2 + $0x180] sm:$0xff] %v768
        %788 = vst [vmem:[#allocation2 + $0x188] sm:$0xf] %v769
        %789 = vst [vmem:[#allocation2 + $0x18c] sm:$0xff] %v771
        %790 = vst [vmem:[#allocation2 + $0x194] sm:$0xf] %v772
        %791 = vst [vmem:[#allocation2 + $0x198] sm:$0xff] %v774
        %792 = vst [vmem:[#allocation2 + $0x1a0] sm:$0xf] %v775
        %793 = vst [vmem:[#allocation2 + $0x1a4] sm:$0xff] %v777
        %794 = vst [vmem:[#allocation2 + $0x1ac] sm:$0xf] %v778
      $region36: #{resnet_block_forward.2} parent=31 // pred_fallthru
        _
      %v795 = vld [vmem:[%s208] sm:$0xff]
      %v796 = vld [vmem:[%s208 + $0x8] sm:$0xf]
      %v797 = vld [vmem:[%s208 + $0xc] sm:$0xff]
      %v798 = vld [vmem:[%s208 + $0x14] sm:$0xf]
      %v799 = vld [vmem:[%s208 + $0x18] sm:$0xff]
      %v800 = vld [vmem:[%s208 + $0x20] sm:$0xf]
      %v801 = vld [vmem:[%s208 + $0x24] sm:$0xff]
      %v802 = vld [vmem:[%s208 + $0x2c] sm:$0xf]
      %v803 = vld [vmem:[#allocation2] sm:$0xff]
      %v804 = vld [vmem:[#allocation2 + $0x8] sm:$0xf]
      %v805 = vld [vmem:[#allocation2 + $0xc] sm:$0xff]
      %v806 = vld [vmem:[#allocation2 + $0x14] sm:$0xf]
      %v807 = vld [vmem:[#allocation2 + $0x18] sm:$0xff]
      %v808 = vld [vmem:[#allocation2 + $0x20] sm:$0xf]
      %v809 = vld [vmem:[#allocation2 + $0x24] sm:$0xff]
      %v810 = vld [vmem:[#allocation2 + $0x2c] sm:$0xf]
      %v811 = vld [vmem:[#allocation2 + $0x30] sm:$0xff]
      %v812 = vld [vmem:[#allocation2 + $0x38] sm:$0xf]
      %v813 = vld [vmem:[#allocation2 + $0x3c] sm:$0xff]
      %v814 = vld [vmem:[#allocation2 + $0x44] sm:$0xf]
      %v815 = vld [vmem:[#allocation2 + $0x48] sm:$0xff]
      %v816 = vld [vmem:[#allocation2 + $0x50] sm:$0xf]
      %v817 = vld [vmem:[#allocation2 + $0x54] sm:$0xff]
      %v818 = vld [vmem:[#allocation2 + $0x5c] sm:$0xf]
      %v819 = vld [vmem:[#allocation2 + $0x60] sm:$0xff]
      %v820 = vld [vmem:[#allocation2 + $0x68] sm:$0xf]
      %v821 = vld [vmem:[#allocation2 + $0x6c] sm:$0xff]
      %v822 = vld [vmem:[#allocation2 + $0x74] sm:$0xf]
      %v823 = vld [vmem:[#allocation2 + $0x78] sm:$0xff]
      %v824 = vld [vmem:[#allocation2 + $0x80] sm:$0xf]
      %v825 = vld [vmem:[#allocation2 + $0x84] sm:$0xff]
      %v826 = vld [vmem:[#allocation2 + $0x8c] sm:$0xf]
      %v827 = vld [vmem:[#allocation2 + $0x90] sm:$0xff]
      %v828 = vld [vmem:[#allocation2 + $0x98] sm:$0xf]
      %v829 = vld [vmem:[#allocation2 + $0x9c] sm:$0xff]
      %v830 = vld [vmem:[#allocation2 + $0xa4] sm:$0xf]
      %v831 = vld [vmem:[#allocation2 + $0xa8] sm:$0xff]
      %v832 = vld [vmem:[#allocation2 + $0xb0] sm:$0xf]
      %v833 = vld [vmem:[#allocation2 + $0xb4] sm:$0xff]
      %v834 = vld [vmem:[#allocation2 + $0xbc] sm:$0xf]
      %v835 = vld [vmem:[#allocation2 + $0xc0] sm:$0xff]
      %v836 = vld [vmem:[#allocation2 + $0xc8] sm:$0xf]
      %v837 = vld [vmem:[#allocation2 + $0xcc] sm:$0xff]
      %v838 = vld [vmem:[#allocation2 + $0xd4] sm:$0xf]
      %v839 = vld [vmem:[#allocation2 + $0xd8] sm:$0xff]
      %v840 = vld [vmem:[#allocation2 + $0xe0] sm:$0xf]
      %v841 = vld [vmem:[#allocation2 + $0xe4] sm:$0xff]
      %v842 = vld [vmem:[#allocation2 + $0xec] sm:$0xf]
      %v843 = vld [vmem:[#allocation2 + $0xf0] sm:$0xff]
      %v844 = vld [vmem:[#allocation2 + $0xf8] sm:$0xf]
      %v845 = vld [vmem:[#allocation2 + $0xfc] sm:$0xff]
      %v846 = vld [vmem:[#allocation2 + $0x104] sm:$0xf]
      %v847 = vld [vmem:[#allocation2 + $0x108] sm:$0xff]
      %v848 = vld [vmem:[#allocation2 + $0x110] sm:$0xf]
      %v849 = vld [vmem:[#allocation2 + $0x114] sm:$0xff]
      %v850 = vld [vmem:[#allocation2 + $0x11c] sm:$0xf]
      %v851 = vld [vmem:[#allocation2 + $0x120] sm:$0xff]
      %v852 = vld [vmem:[#allocation2 + $0x128] sm:$0xf]
      %v853 = vld [vmem:[#allocation2 + $0x12c] sm:$0xff]
      %v854 = vld [vmem:[#allocation2 + $0x134] sm:$0xf]
      %v855 = vld [vmem:[#allocation2 + $0x138] sm:$0xff]
      %v856 = vld [vmem:[#allocation2 + $0x140] sm:$0xf]
      %v857 = vld [vmem:[#allocation2 + $0x144] sm:$0xff]
      %v858 = vld [vmem:[#allocation2 + $0x14c] sm:$0xf]
      %v859 = vld [vmem:[#allocation2 + $0x150] sm:$0xff]
      %v860 = vld [vmem:[#allocation2 + $0x158] sm:$0xf]
      %v861 = vld [vmem:[#allocation2 + $0x15c] sm:$0xff]
      %v862 = vld [vmem:[#allocation2 + $0x164] sm:$0xf]
      %v863 = vld [vmem:[#allocation2 + $0x168] sm:$0xff]
      %v864 = vld [vmem:[#allocation2 + $0x170] sm:$0xf]
      %v865 = vld [vmem:[#allocation2 + $0x174] sm:$0xff]
      %v866 = vld [vmem:[#allocation2 + $0x17c] sm:$0xf]
      %v867 = vld [vmem:[#allocation2 + $0x180] sm:$0xff]
      %v868 = vld [vmem:[#allocation2 + $0x188] sm:$0xf]
      %v869 = vld [vmem:[#allocation2 + $0x18c] sm:$0xff]
      %v870 = vld [vmem:[#allocation2 + $0x194] sm:$0xf]
      %v871 = vld [vmem:[#allocation2 + $0x198] sm:$0xff]
      %v872 = vld [vmem:[#allocation2 + $0x1a0] sm:$0xf]
      %v873 = vld [vmem:[#allocation2 + $0x1a4] sm:$0xff]
      %v874 = vld [vmem:[#allocation2 + $0x1ac] sm:$0xf]
      %v883 = vunpack.c.l.b16 %v795
      %v884 = vunpack.c.h.b16 %v795
      %v885 = vunpack.c.l.b16 %v796
      %v886 = vunpack.c.l.b16 %v797
      %v887 = vunpack.c.h.b16 %v797
      %v888 = vunpack.c.l.b16 %v798
      %v889 = vunpack.c.l.b16 %v799
      %v890 = vunpack.c.h.b16 %v799
      %v891 = vunpack.c.l.b16 %v800
      %v892 = vunpack.c.l.b16 %v801
      %v893 = vunpack.c.h.b16 %v801
      %v894 = vunpack.c.l.b16 %v802
      %v895 = vpack.c.b16 %v886, %v883
      %v896 = vpack.c.b16 %v887, %v884
      %v897 = vpack.c.b16 %v888, %v885
      %v898 = vpack.c.b16 %v892, %v889
      %v899 = vpack.c.b16 %v893, %v890
      %v900 = vpack.c.b16 %v894, %v891
      %v977 = vunpack.c.l.b16 %v803
      %v978 = vunpack.c.h.b16 %v803
      %v979 = vunpack.c.l.b16 %v804
      %v980 = vunpack.c.l.b16 %v805
      %v981 = vunpack.c.h.b16 %v805
      %v982 = vunpack.c.l.b16 %v806
      %v983 = vunpack.c.l.b16 %v807
      %v984 = vunpack.c.h.b16 %v807
      %v985 = vunpack.c.l.b16 %v808
      %v986 = vunpack.c.l.b16 %v809
      %v987 = vunpack.c.h.b16 %v809
      %v988 = vunpack.c.l.b16 %v810
      %v989 = vunpack.c.l.b16 %v811
      %v990 = vunpack.c.h.b16 %v811
      %v991 = vunpack.c.l.b16 %v812
      %v992 = vunpack.c.l.b16 %v813
      %v993 = vunpack.c.h.b16 %v813
      %v994 = vunpack.c.l.b16 %v814
      %v995 = vunpack.c.l.b16 %v815
      %v996 = vunpack.c.h.b16 %v815
      %v997 = vunpack.c.l.b16 %v816
      %v998 = vunpack.c.l.b16 %v817
      %v999 = vunpack.c.h.b16 %v817
      %v1000 = vunpack.c.l.b16 %v818
      %v1001 = vunpack.c.l.b16 %v819
      %v1002 = vunpack.c.h.b16 %v819
      %v1003 = vunpack.c.l.b16 %v820
      %v1004 = vunpack.c.l.b16 %v821
      %v1005 = vunpack.c.h.b16 %v821
      %v1006 = vunpack.c.l.b16 %v822
      %v1007 = vunpack.c.l.b16 %v823
      %v1008 = vunpack.c.h.b16 %v823
      %v1009 = vunpack.c.l.b16 %v824
      %v1010 = vunpack.c.l.b16 %v825
      %v1011 = vunpack.c.h.b16 %v825
      %v1012 = vunpack.c.l.b16 %v826
      %v1013 = vunpack.c.l.b16 %v827
      %v1014 = vunpack.c.h.b16 %v827
      %v1015 = vunpack.c.l.b16 %v828
      %v1016 = vunpack.c.l.b16 %v829
      %v1017 = vunpack.c.h.b16 %v829
      %v1018 = vunpack.c.l.b16 %v830
      %v1019 = vunpack.c.l.b16 %v831
      %v1020 = vunpack.c.h.b16 %v831
      %v1021 = vunpack.c.l.b16 %v832
      %v1022 = vunpack.c.l.b16 %v833
      %v1023 = vunpack.c.h.b16 %v833
      %v1024 = vunpack.c.l.b16 %v834
      %v1025 = vunpack.c.l.b16 %v835
      %v1026 = vunpack.c.h.b16 %v835
      %v1027 = vunpack.c.l.b16 %v836
      %v1028 = vunpack.c.l.b16 %v837
      %v1029 = vunpack.c.h.b16 %v837
      %v1030 = vunpack.c.l.b16 %v838
      %v1031 = vunpack.c.l.b16 %v839
      %v1032 = vunpack.c.h.b16 %v839
      %v1033 = vunpack.c.l.b16 %v840
      %v1034 = vunpack.c.l.b16 %v841
      %v1035 = vunpack.c.h.b16 %v841
      %v1036 = vunpack.c.l.b16 %v842
      %v1037 = vunpack.c.l.b16 %v843
      %v1038 = vunpack.c.h.b16 %v843
      %v1039 = vunpack.c.l.b16 %v844
      %v1040 = vunpack.c.l.b16 %v845
      %v1041 = vunpack.c.h.b16 %v845
      %v1042 = vunpack.c.l.b16 %v846
      %v1043 = vunpack.c.l.b16 %v847
      %v1044 = vunpack.c.h.b16 %v847
      %v1045 = vunpack.c.l.b16 %v848
      %v1046 = vunpack.c.l.b16 %v849
      %v1047 = vunpack.c.h.b16 %v849
      %v1048 = vunpack.c.l.b16 %v850
      %v1049 = vunpack.c.l.b16 %v851
      %v1050 = vunpack.c.h.b16 %v851
      %v1051 = vunpack.c.l.b16 %v852
      %v1052 = vunpack.c.l.b16 %v853
      %v1053 = vunpack.c.h.b16 %v853
      %v1054 = vunpack.c.l.b16 %v854
      %v1055 = vunpack.c.l.b16 %v855
      %v1056 = vunpack.c.h.b16 %v855
      %v1057 = vunpack.c.l.b16 %v856
      %v1058 = vunpack.c.l.b16 %v857
      %v1059 = vunpack.c.h.b16 %v857
      %v1060 = vunpack.c.l.b16 %v858
      %v1061 = vunpack.c.l.b16 %v859
      %v1062 = vunpack.c.h.b16 %v859
      %v1063 = vunpack.c.l.b16 %v860
      %v1064 = vunpack.c.l.b16 %v861
      %v1065 = vunpack.c.h.b16 %v861
      %v1066 = vunpack.c.l.b16 %v862
      %v1067 = vunpack.c.l.b16 %v863
      %v1068 = vunpack.c.h.b16 %v863
      %v1069 = vunpack.c.l.b16 %v864
      %v1070 = vunpack.c.l.b16 %v865
      %v1071 = vunpack.c.h.b16 %v865
      %v1072 = vunpack.c.l.b16 %v866
      %v1073 = vunpack.c.l.b16 %v867
      %v1074 = vunpack.c.h.b16 %v867
      %v1075 = vunpack.c.l.b16 %v868
      %v1076 = vunpack.c.l.b16 %v869
      %v1077 = vunpack.c.h.b16 %v869
      %v1078 = vunpack.c.l.b16 %v870
      %v1079 = vunpack.c.l.b16 %v871
      %v1080 = vunpack.c.h.b16 %v871
      %v1081 = vunpack.c.l.b16 %v872
      %v1082 = vunpack.c.l.b16 %v873
      %v1083 = vunpack.c.h.b16 %v873
      %v1084 = vunpack.c.l.b16 %v874
      %v1085 = vpack.c.b16 %v980, %v977
      %v1086 = vpack.c.b16 %v981, %v978
      %v1087 = vpack.c.b16 %v982, %v979
      %v1088 = vpack.c.b16 %v986, %v983
      %v1089 = vpack.c.b16 %v987, %v984
      %v1090 = vpack.c.b16 %v988, %v985
      %v1091 = vpack.c.b16 %v992, %v989
      %v1092 = vpack.c.b16 %v993, %v990
      %v1093 = vpack.c.b16 %v994, %v991
      %v1094 = vpack.c.b16 %v998, %v995
      %v1095 = vpack.c.b16 %v999, %v996
      %v1096 = vpack.c.b16 %v1000, %v997
      %v1097 = vpack.c.b16 %v1004, %v1001
      %v1098 = vpack.c.b16 %v1005, %v1002
      %v1099 = vpack.c.b16 %v1006, %v1003
      %v1100 = vpack.c.b16 %v1010, %v1007
      %v1101 = vpack.c.b16 %v1011, %v1008
      %v1102 = vpack.c.b16 %v1012, %v1009
      %v1103 = vpack.c.b16 %v1016, %v1013
      %v1104 = vpack.c.b16 %v1017, %v1014
      %v1105 = vpack.c.b16 %v1018, %v1015
      %v1106 = vpack.c.b16 %v1022, %v1019
      %v1107 = vpack.c.b16 %v1023, %v1020
      %v1108 = vpack.c.b16 %v1024, %v1021
      %v1109 = vpack.c.b16 %v1028, %v1025
      %v1110 = vpack.c.b16 %v1029, %v1026
      %v1111 = vpack.c.b16 %v1030, %v1027
      %v1112 = vpack.c.b16 %v1034, %v1031
      %v1113 = vpack.c.b16 %v1035, %v1032
      %v1114 = vpack.c.b16 %v1036, %v1033
      %v1115 = vpack.c.b16 %v1040, %v1037
      %v1116 = vpack.c.b16 %v1041, %v1038
      %v1117 = vpack.c.b16 %v1042, %v1039
      %v1118 = vpack.c.b16 %v1046, %v1043
      %v1119 = vpack.c.b16 %v1047, %v1044
      %v1120 = vpack.c.b16 %v1048, %v1045
      %v1121 = vpack.c.b16 %v1052, %v1049
      %v1122 = vpack.c.b16 %v1053, %v1050
      %v1123 = vpack.c.b16 %v1054, %v1051
      %v1124 = vpack.c.b16 %v1058, %v1055
      %v1125 = vpack.c.b16 %v1059, %v1056
      %v1126 = vpack.c.b16 %v1060, %v1057
      %v1127 = vpack.c.b16 %v1064, %v1061
      %v1128 = vpack.c.b16 %v1065, %v1062
      %v1129 = vpack.c.b16 %v1066, %v1063
      %v1130 = vpack.c.b16 %v1070, %v1067
      %v1131 = vpack.c.b16 %v1071, %v1068
      %v1132 = vpack.c.b16 %v1072, %v1069
      %v1133 = vpack.c.b16 %v1076, %v1073
      %v1134 = vpack.c.b16 %v1077, %v1074
      %v1135 = vpack.c.b16 %v1078, %v1075
      %v1136 = vpack.c.b16 %v1082, %v1079
      %v1137 = vpack.c.b16 %v1083, %v1080
      %v1138 = vpack.c.b16 %v1084, %v1081
      %vm1193 = vcmask 261120
      %v1195 = vsel %vm1193, %v897, 0
      %v1198 = vsel %vm1193, %v900, 0
      %1200 = vmatprep.subr.bf16.mxu0 %v1107
      %1201 = vmatpush1.bf16.msra.mxu0 %v1106
      %1202 = vmatprep.subr.bf16.mxu0 %v1104
      %1203 = vmatpush1.bf16.msra.mxu0 %v1103
      %1204 = vmatprep.subr.bf16.mxu0 %v1101
      %1205 = vmatpush1.bf16.msra.mxu0 %v1100
      %1206 = vmatprep.subr.bf16.mxu0 %v1098
      %1207 = vmatpush1.bf16.msra.mxu0 %v1097
      %1208 = vmatprep.subr.bf16.mxu0 %v1095
      %1209 = vmatpush1.bf16.msra.mxu0 %v1094
      %1210 = vmatprep.subr.bf16.mxu0 %v1092
      %1211 = vmatpush1.bf16.msra.mxu0 %v1091
      %1212 = vmatprep.subr.bf16.mxu0 %v1089
      %1213 = vmatpush1.bf16.msra.mxu0 %v1088
      %1214 = vmatprep.subr.bf16.mxu0 %v1086
      %1215 = vmatpush1.bf16.msra.mxu0 %v1085
      %1216 = vmatprep.subr.bf16.mxu0 %v1131
      %1217 = vmatpush2.bf16.msra.mxu0 %v1130
      %1218 = vmatprep.subr.bf16.mxu0 %v1128
      %1219 = vmatpush2.bf16.msra.mxu0 %v1127
      %1220 = vmatprep.subr.bf16.mxu0 %v1125
      %1221 = vmatpush2.bf16.msra.mxu0 %v1124
      %1222 = vmatprep.subr.bf16.mxu0 %v1122
      %1223 = vmatpush2.bf16.msra.mxu0 %v1121
      %1224 = vmatprep.subr.bf16.mxu0 %v1119
      %1225 = vmatpush2.bf16.msra.mxu0 %v1118
      %1226 = vmatprep.subr.bf16.mxu0 %v1116
      %1227 = vmatpush2.bf16.msra.mxu0 %v1115
      %1228 = vmatprep.subr.bf16.mxu0 %v1113
      %1229 = vmatpush2.bf16.msra.mxu0 %v1112
      %1230 = vmatprep.subr.bf16.mxu0 %v1110
      %1231 = vmatpush2.bf16.msra.mxu0 %v1109
      %1232 = vmatprep.mubr.bf16.mxu0 %v896
      %1233 = vmatmul.mubr.bf16.gmra.mxu0 %v895
      %v1234 = vpop.f32.mrf.mxu0
      %v1235 = vadd.f32 0.0, %v1234
      %v1236 = vpop.f32.mrf.mxu0
      %v1237 = vadd.f32 0.0, %v1236
      %v1238 = vpop.f32.mrf.mxu0
      %v1239 = vadd.f32 0.0, %v1238
      %v1240 = vpop.f32.mrf.mxu0
      %v1241 = vadd.f32 0.0, %v1240
      %1242 = vmatprep.mubr.bf16.mxu0 %v899
      %1243 = vmatmul.mubr.bf16.gmra.mxu0 %v898
      %v1244 = vpop.f32.mrf.mxu0
      %v1245 = vadd.f32 0.0, %v1244
      %v1246 = vpop.f32.mrf.mxu0
      %v1247 = vadd.f32 0.0, %v1246
      %v1248 = vpop.f32.mrf.mxu0
      %v1249 = vadd.f32 0.0, %v1248
      %v1250 = vpop.f32.mrf.mxu0
      %v1251 = vadd.f32 0.0, %v1250
      %1252 = vdwg.mxu0
      %1253 = vmatprep.subr.bf16.mxu0 0
      %1254 = vmatpush1.bf16.msra.mxu0 0
      %1255 = vmatprep.subr.bf16.mxu0 0
      %1256 = vmatpush1.bf16.msra.mxu0 0
      %1257 = vmatprep.subr.bf16.mxu0 0
      %1258 = vmatpush1.bf16.msra.mxu0 0
      %1259 = vmatprep.subr.bf16.mxu0 0
      %1260 = vmatpush1.bf16.msra.mxu0 0
      %1261 = vmatprep.subr.bf16.mxu0 0
      %1262 = vmatpush1.bf16.msra.mxu0 0
      %1263 = vmatprep.subr.bf16.mxu0 0
      %1264 = vmatpush1.bf16.msra.mxu0 0
      %1265 = vmatprep.subr.bf16.mxu0 %v1137
      %1266 = vmatpush1.bf16.msra.mxu0 %v1136
      %1267 = vmatprep.subr.bf16.mxu0 %v1134
      %1268 = vmatpush1.bf16.msra.mxu0 %v1133
      %1269 = vmatprep.subr.bf16.mxu0 0
      %1270 = vmatpush2.bf16.msra.mxu0 0
      %1271 = vmatprep.subr.bf16.mxu0 0
      %1272 = vmatpush2.bf16.msra.mxu0 0
      %1273 = vmatprep.subr.bf16.mxu0 0
      %1274 = vmatpush2.bf16.msra.mxu0 0
      %1275 = vmatprep.subr.bf16.mxu0 0
      %1276 = vmatpush2.bf16.msra.mxu0 0
      %1277 = vmatprep.subr.bf16.mxu0 0
      %1278 = vmatpush2.bf16.msra.mxu0 0
      %1279 = vmatprep.subr.bf16.mxu0 0
      %1280 = vmatpush2.bf16.msra.mxu0 0
      %1281 = vmatprep.subr.bf16.mxu0 0
      %1282 = vmatpush2.bf16.msra.mxu0 0
      %1283 = vmatprep.subr.bf16.mxu0 0
      %1284 = vmatpush2.bf16.msra.mxu0 0
      %1285 = vmatprep.mubr.bf16.mxu0 0
      %1286 = vmatmul.mubr.bf16.gmra.mxu0 %v1195
      %v1287 = vpop.f32.mrf.mxu0
      %v1288 = vadd.f32 %v1235, %v1287
      %v1289 = vpop.f32.mrf.mxu0
      %v1290 = vadd.f32 %v1237, %v1289
      %v1291 = vpop.f32.mrf.mxu0
      %v1292 = vadd.f32 %v1239, %v1291
      %v1293 = vpop.f32.mrf.mxu0
      %v1294 = vadd.f32 %v1241, %v1293
      %1295 = vmatprep.mubr.bf16.mxu0 0
      %1296 = vmatmul.mubr.bf16.gmra.mxu0 %v1198
      %v1297 = vpop.f32.mrf.mxu0
      %v1298 = vadd.f32 %v1245, %v1297
      %v1299 = vpop.f32.mrf.mxu0
      %v1300 = vadd.f32 %v1247, %v1299
      %v1301 = vpop.f32.mrf.mxu0
      %v1302 = vadd.f32 %v1249, %v1301
      %v1303 = vpop.f32.mrf.mxu0
      %v1304 = vadd.f32 %v1251, %v1303
      %1305 = vdwg.mxu0
      %1306 = vmatprep.subr.bf16.mxu0 0
      %1307 = vmatpush1.bf16.msra.mxu0 %v1108
      %1308 = vmatprep.subr.bf16.mxu0 0
      %1309 = vmatpush1.bf16.msra.mxu0 %v1105
      %1310 = vmatprep.subr.bf16.mxu0 0
      %1311 = vmatpush1.bf16.msra.mxu0 %v1102
      %1312 = vmatprep.subr.bf16.mxu0 0
      %1313 = vmatpush1.bf16.msra.mxu0 %v1099
      %1314 = vmatprep.subr.bf16.mxu0 0
      %1315 = vmatpush1.bf16.msra.mxu0 %v1096
      %1316 = vmatprep.subr.bf16.mxu0 0
      %1317 = vmatpush1.bf16.msra.mxu0 %v1093
      %1318 = vmatprep.subr.bf16.mxu0 0
      %1319 = vmatpush1.bf16.msra.mxu0 %v1090
      %1320 = vmatprep.subr.bf16.mxu0 0
      %1321 = vmatpush1.bf16.msra.mxu0 %v1087
      %1322 = vmatprep.subr.bf16.mxu0 0
      %1323 = vmatpush2.bf16.msra.mxu0 %v1132
      %1324 = vmatprep.subr.bf16.mxu0 0
      %1325 = vmatpush2.bf16.msra.mxu0 %v1129
      %1326 = vmatprep.subr.bf16.mxu0 0
      %1327 = vmatpush2.bf16.msra.mxu0 %v1126
      %1328 = vmatprep.subr.bf16.mxu0 0
      %1329 = vmatpush2.bf16.msra.mxu0 %v1123
      %1330 = vmatprep.subr.bf16.mxu0 0
      %1331 = vmatpush2.bf16.msra.mxu0 %v1120
      %1332 = vmatprep.subr.bf16.mxu0 0
      %1333 = vmatpush2.bf16.msra.mxu0 %v1117
      %1334 = vmatprep.subr.bf16.mxu0 0
      %1335 = vmatpush2.bf16.msra.mxu0 %v1114
      %1336 = vmatprep.subr.bf16.mxu0 0
      %1337 = vmatpush2.bf16.msra.mxu0 %v1111
      %1338 = vmatprep.mubr.bf16.mxu0 %v896
      %1339 = vmatmul.mubr.bf16.gmra.mxu0 %v895
      %v1340 = vpop.f32.mrf.mxu0
      %v1341 = vadd.f32 0.0, %v1340
      %v1342 = vpop.f32.mrf.mxu0
      %v1343 = vpop.f32.mrf.mxu0
      %v1344 = vadd.f32 0.0, %v1343
      %v1345 = vpop.f32.mrf.mxu0
      %1346 = vmatprep.mubr.bf16.mxu0 %v899
      %1347 = vmatmul.mubr.bf16.gmra.mxu0 %v898
      %v1348 = vpop.f32.mrf.mxu0
      %v1349 = vadd.f32 0.0, %v1348
      %v1350 = vpop.f32.mrf.mxu0
      %v1351 = vpop.f32.mrf.mxu0
      %v1352 = vadd.f32 0.0, %v1351
      %v1353 = vpop.f32.mrf.mxu0
      %1354 = vdwg.mxu0
      %1355 = vmatprep.subr.bf16.mxu0 0
      %1356 = vmatpush1.bf16.msra.mxu0 0
      %1357 = vmatprep.subr.bf16.mxu0 0
      %1358 = vmatpush1.bf16.msra.mxu0 0
      %1359 = vmatprep.subr.bf16.mxu0 0
      %1360 = vmatpush1.bf16.msra.mxu0 0
      %1361 = vmatprep.subr.bf16.mxu0 0
      %1362 = vmatpush1.bf16.msra.mxu0 0
      %1363 = vmatprep.subr.bf16.mxu0 0
      %1364 = vmatpush1.bf16.msra.mxu0 0
      %1365 = vmatprep.subr.bf16.mxu0 0
      %1366 = vmatpush1.bf16.msra.mxu0 0
      %1367 = vmatprep.subr.bf16.mxu0 0
      %1368 = vmatpush1.bf16.msra.mxu0 %v1138
      %1369 = vmatprep.subr.bf16.mxu0 0
      %1370 = vmatpush1.bf16.msra.mxu0 %v1135
      %1371 = vmatprep.subr.bf16.mxu0 0
      %1372 = vmatpush2.bf16.msra.mxu0 0
      %1373 = vmatprep.subr.bf16.mxu0 0
      %1374 = vmatpush2.bf16.msra.mxu0 0
      %1375 = vmatprep.subr.bf16.mxu0 0
      %1376 = vmatpush2.bf16.msra.mxu0 0
      %1377 = vmatprep.subr.bf16.mxu0 0
      %1378 = vmatpush2.bf16.msra.mxu0 0
      %1379 = vmatprep.subr.bf16.mxu0 0
      %1380 = vmatpush2.bf16.msra.mxu0 0
      %1381 = vmatprep.subr.bf16.mxu0 0
      %1382 = vmatpush2.bf16.msra.mxu0 0
      %1383 = vmatprep.subr.bf16.mxu0 0
      %1384 = vmatpush2.bf16.msra.mxu0 0
      %1385 = vmatprep.subr.bf16.mxu0 0
      %1386 = vmatpush2.bf16.msra.mxu0 0
      %1387 = vmatprep.mubr.bf16.mxu0 0
      %1388 = vmatmul.mubr.bf16.gmra.mxu0 %v1195
      %v1389 = vpop.f32.mrf.mxu0
      %v1390 = vadd.f32 %v1341, %v1389
      %v1391 = vpop.f32.mrf.mxu0
      %v1392 = vpop.f32.mrf.mxu0
      %v1393 = vadd.f32 %v1344, %v1392
      %v1394 = vpop.f32.mrf.mxu0
      %1395 = vmatprep.mubr.bf16.mxu0 0
      %1396 = vmatmul.mubr.bf16.gmra.mxu0 %v1198
      %v1397 = vpop.f32.mrf.mxu0
      %v1398 = vadd.f32 %v1349, %v1397
      %v1399 = vpop.f32.mrf.mxu0
      %v1400 = vpop.f32.mrf.mxu0
      %v1401 = vadd.f32 %v1352, %v1400
      %v1402 = vpop.f32.mrf.mxu0
      %1403 = vdwg.mxu0
      %v1404 = vld [vmem:[%s2] sm:$0x7]
      %v1406 = vlaneseq
      %v1407 = vshrl.u32 %v1406, 7
      %v1408 = vsub.s32 0, %v1407
      %v1409 = vrot.slane %v1404, %v1408
      %v1410 = vlaneseq
      %v1411 = vshrl.u32 %v1410, 7
      %v1412 = vsub.s32 1, %v1411
      %v1413 = vrot.slane %v1404, %v1412
      %v1414 = vlaneseq
      %v1415 = vshrl.u32 %v1414, 7
      %v1416 = vsub.s32 2, %v1415
      %v1417 = vrot.slane %v1404, %v1416
      %v1421 = vmul.f32 %v1288, %v1409
      %v1422 = vmul.f32 %v1290, %v1413
      %v1423 = vmul.f32 %v1390, %v1417
      %v1424 = vmul.f32 %v1292, %v1409
      %v1425 = vmul.f32 %v1294, %v1413
      %v1426 = vmul.f32 %v1393, %v1417
      %v1427 = vmul.f32 %v1298, %v1409
      %v1428 = vmul.f32 %v1300, %v1413
      %v1429 = vmul.f32 %v1398, %v1417
      %v1430 = vmul.f32 %v1302, %v1409
      %v1431 = vmul.f32 %v1304, %v1413
      %v1432 = vmul.f32 %v1401, %v1417
      %v1433 = vadd.f32 %v1421, %v1422
      %v1434 = vadd.f32 %v1433, %v1423
      %1435 = vadd.xlane.f32.xlu0 %v1434
      %v1436 = vpop.xlane.xlu0 %1435
      %v1437 = vadd.f32 %v1424, %v1425
      %v1438 = vadd.f32 %v1437, %v1426
      %1439 = vadd.xlane.f32.xlu0 %v1438
      %v1440 = vpop.xlane.xlu0 %1439
      %v1441 = vadd.f32 %v1427, %v1428
      %v1442 = vadd.f32 %v1441, %v1429
      %1443 = vadd.xlane.f32.xlu0 %v1442
      %v1444 = vpop.xlane.xlu0 %1443
      %v1445 = vadd.f32 %v1430, %v1431
      %v1446 = vadd.f32 %v1445, %v1432
      %1447 = vadd.xlane.f32.xlu0 %v1446
      %v1448 = vpop.xlane.xlu0 %1447
      %v1449 = vmul.f32 %v1436, 0.00390625
      %v1450 = vmul.f32 %v1440, 0.00390625
      %v1451 = vmul.f32 %v1444, 0.00390625
      %v1452 = vmul.f32 %v1448, 0.00390625
      %v1453 = vsub.f32 %v1288, %v1449
      %v1454 = vsub.f32 %v1290, %v1449
      %v1455 = vsub.f32 %v1390, %v1449
      %v1456 = vsub.f32 %v1292, %v1450
      %v1457 = vsub.f32 %v1294, %v1450
      %v1458 = vsub.f32 %v1393, %v1450
      %v1459 = vsub.f32 %v1298, %v1451
      %v1460 = vsub.f32 %v1300, %v1451
      %v1461 = vsub.f32 %v1398, %v1451
      %v1462 = vsub.f32 %v1302, %v1452
      %v1463 = vsub.f32 %v1304, %v1452
      %v1464 = vsub.f32 %v1401, %v1452
      %v1465 = vmul.f32 %v1453, %v1409
      %v1466 = vmul.f32 %v1454, %v1413
      %v1467 = vmul.f32 %v1455, %v1417
      %v1468 = vmul.f32 %v1456, %v1409
      %v1469 = vmul.f32 %v1457, %v1413
      %v1470 = vmul.f32 %v1458, %v1417
      %v1471 = vmul.f32 %v1459, %v1409
      %v1472 = vmul.f32 %v1460, %v1413
      %v1473 = vmul.f32 %v1461, %v1417
      %v1474 = vmul.f32 %v1462, %v1409
      %v1475 = vmul.f32 %v1463, %v1413
      %v1476 = vmul.f32 %v1464, %v1417
      %v1477 = vmul.f32 %v1465, %v1465
      %v1478 = vmul.f32 %v1466, %v1466
      %v1479 = vmul.f32 %v1467, %v1467
      %v1480 = vmul.f32 %v1468, %v1468
      %v1481 = vmul.f32 %v1469, %v1469
      %v1482 = vmul.f32 %v1470, %v1470
      %v1483 = vmul.f32 %v1471, %v1471
      %v1484 = vmul.f32 %v1472, %v1472
      %v1485 = vmul.f32 %v1473, %v1473
      %v1486 = vmul.f32 %v1474, %v1474
      %v1487 = vmul.f32 %v1475, %v1475
      %v1488 = vmul.f32 %v1476, %v1476
      %v1489 = vadd.f32 %v1477, %v1478
      %v1490 = vadd.f32 %v1489, %v1479
      %1491 = vadd.xlane.f32.xlu0 %v1490
      %v1492 = vpop.xlane.xlu0 %1491
      %v1493 = vadd.f32 %v1480, %v1481
      %v1494 = vadd.f32 %v1493, %v1482
      %1495 = vadd.xlane.f32.xlu0 %v1494
      %v1496 = vpop.xlane.xlu0 %1495
      %v1497 = vadd.f32 %v1483, %v1484
      %v1498 = vadd.f32 %v1497, %v1485
      %1499 = vadd.xlane.f32.xlu0 %v1498
      %v1500 = vpop.xlane.xlu0 %1499
      %v1501 = vadd.f32 %v1486, %v1487
      %v1502 = vadd.f32 %v1501, %v1488
      %1503 = vadd.xlane.f32.xlu0 %v1502
      %v1504 = vpop.xlane.xlu0 %1503
      %v1505 = vmul.f32 %v1492, 0.00390625
      %v1506 = vmul.f32 %v1496, 0.00390625
      %v1507 = vmul.f32 %v1500, 0.00390625
      %v1508 = vmul.f32 %v1504, 0.00390625
      %v1509 = vadd.f32 %v1505, 1e-05
      %v1510 = vadd.f32 %v1506, 1e-05
      %v1511 = vadd.f32 %v1507, 1e-05
      %v1512 = vadd.f32 %v1508, 1e-05
      %v1513 = vrsqrt.pop %v1509
      %v1514 = vrsqrt.pop %v1510
      %v1515 = vrsqrt.pop %v1511
      %v1516 = vrsqrt.pop %v1512
      %v1517 = vmul.f32 %v1465, %v1513
      %v1518 = vmul.f32 %v1466, %v1513
      %v1519 = vmul.f32 %v1467, %v1513
      %v1520 = vmul.f32 %v1468, %v1514
      %v1521 = vmul.f32 %v1469, %v1514
      %v1522 = vmul.f32 %v1470, %v1514
      %v1523 = vmul.f32 %v1471, %v1515
      %v1524 = vmul.f32 %v1472, %v1515
      %v1525 = vmul.f32 %v1473, %v1515
      %v1526 = vmul.f32 %v1474, %v1516
      %v1527 = vmul.f32 %v1475, %v1516
      %v1528 = vmul.f32 %v1476, %v1516
      %v1529 = vmax.f32 %v1517, 0.0
      %v1530 = vmax.f32 %v1518, 0.0
      %v1531 = vmax.f32 %v1519, 0.0
      %v1532 = vmax.f32 %v1520, 0.0
      %v1533 = vmax.f32 %v1521, 0.0
      %v1534 = vmax.f32 %v1522, 0.0
      %v1535 = vmax.f32 %v1523, 0.0
      %v1536 = vmax.f32 %v1524, 0.0
      %v1537 = vmax.f32 %v1525, 0.0
      %v1538 = vmax.f32 %v1526, 0.0
      %v1539 = vmax.f32 %v1527, 0.0
      %v1540 = vmax.f32 %v1528, 0.0
      %v1541 = vpack.c.bf16 %v1532, %v1529
      %v1542 = vpack.c.bf16 %v1533, %v1530
      %v1543 = vpack.c.bf16 %v1534, %v1531
      %v1544 = vpack.c.bf16 %v1538, %v1535
      %v1545 = vpack.c.bf16 %v1539, %v1536
      %v1546 = vpack.c.bf16 %v1540, %v1537
      %v1553 = vunpack.c.l.b16 %v1541
      %v1554 = vunpack.c.l.b16 %v1542
      %v1555 = vunpack.c.l.b16 %v1543
      %v1556 = vunpack.c.h.b16 %v1541
      %v1557 = vunpack.c.h.b16 %v1542
      %v1558 = vunpack.c.h.b16 %v1543
      %v1559 = vunpack.c.l.b16 %v1544
      %v1560 = vunpack.c.l.b16 %v1545
      %v1561 = vunpack.c.l.b16 %v1546
      %v1562 = vunpack.c.h.b16 %v1544
      %v1563 = vunpack.c.h.b16 %v1545
      %v1564 = vunpack.c.h.b16 %v1546
      %v1565 = vpack.c.b16 %v1554, %v1553
      %v1566 = vpack.c.b16 %v1555, %v1555
      %v1567 = vpack.c.b16 %v1557, %v1556
      %v1568 = vpack.c.b16 %v1558, %v1558
      %v1569 = vpack.c.b16 %v1560, %v1559
      %v1570 = vpack.c.b16 %v1561, %v1561
      %v1571 = vpack.c.b16 %v1563, %v1562
      %v1572 = vpack.c.b16 %v1564, %v1564
      %1581 = vst [vmem:[%s219] sm:$0xff] %v1565
      %1582 = vst [vmem:[%s219 + $0x8] sm:$0xf] %v1566
      %1583 = vst [vmem:[%s219 + $0xc] sm:$0xff] %v1567
      %1584 = vst [vmem:[%s219 + $0x14] sm:$0xf] %v1568
      %1585 = vst [vmem:[%s219 + $0x18] sm:$0xff] %v1569
      %1586 = vst [vmem:[%s219 + $0x20] sm:$0xf] %v1570
      %1587 = vst [vmem:[%s219 + $0x24] sm:$0xff] %v1571
      %1588 = vst [vmem:[%s219 + $0x2c] sm:$0xf] %v1572
      %s1589 = smul.u32 4, %s19
      %p1590 = scmp.lt.s32.totalorder %s18, 1
      %s1591 = scalar_select %p1590, %s18, 1
      %p1592 = scmp.lt.s32.totalorder %s1589, 3
      %s1593 = scalar_select %p1592, %s1589, 3
      %s1594 = smul.addr %s1593, 3
      %s1595 = smul.addr %s1591, 12
      %s1596 = sadd.s32 %s1594, %s1595
      %s1597 = smul.addr %s1596, 4
      %s1598 = scalar_lea.vmem %s3, %s1597
      // Predicated region
      $region37: #{resnet_block_forward.2} parent=31 // pred_check
        %p1599 = pneg %p119
      $region38: #{resnet_block_forward.2} parent=31 // pred_check_branch
        %1601 = sbr.rel (%p1599) target = $region40
      $region39: #{resnet_block_forward.2} parent=31 // pred_region
        %s1602 = smul.u32 4, %s19
      $region40: #{resnet_block_forward.2} parent=31 // pred_fallthru
        _
    $region32: #{resnet_block_forward.2} parent=5 // pred_fallthru
      _
    %p1603 = scmp.le.s32.totalorder 2, %s9
    // Predicated region
    $region41: #{resnet_block_forward.2} parent=5 // pred_check
      %p1604 = pneg %p1603
    $region42: #{resnet_block_forward.2} parent=5 // pred_check_branch
      %1606 = sbr.rel (%p1604) target = $region44
    $region43: #{resnet_block_forward.2} parent=5 // pred_region
      %s1607 = ssub.s32 %s9, 2
      // Predicated region
      $region45: #{resnet_block_forward.2} parent=43 // pred_check
        %p1608 = pneg %p125
      $region46: #{resnet_block_forward.2} parent=43 // pred_check_branch
        %1610 = sbr.rel (%p1608) target = $region48
      $region47: #{resnet_block_forward.2} parent=43 // pred_region
        %s1611 = smul.u32 4, %s21
        %p1612 = scmp.lt.s32.totalorder %s20, 1
        %s1613 = scalar_select %p1612, %s20, 1
        %p1614 = scmp.lt.s32.totalorder %s1611, 3
        %s1615 = scalar_select %p1614, %s1611, 3
        %s1616 = smul.addr %s1615, 3
        %s1617 = smul.addr %s1613, 12
        %s1618 = sadd.s32 %s1616, %s1617
        %s1619 = smul.addr %s1618, 4
        %s1620 = scalar_lea.vmem %s3, %s1619
      $region48: #{resnet_block_forward.2} parent=43 // pred_fallthru
        _
    $region44: #{resnet_block_forward.2} parent=5 // pred_fallthru
      _
  $region6: #{resnet_block_forward.2} parent=0 // loop_footer
    %s13 = sadd.s32 1, %s9
  $region7: #{resnet_block_forward.2} parent=0 // loop_footer_branch
    %8 = sbr.rel target = $region3
  $region8: #{resnet_block_forward.2} parent=0 // loop_exit
    _

// kernel: resnet_block_forward.3
$region0: #{resnet_block_forward.3}
  #allocation0 [shape = 'u32[]', space=smem, size = 0x4, offset = 0x4, fixed_abs, tag = 'smem constant byte address 0x4 - core index']
  #allocation1 [shape = 'u32[144,128]{1,0:T(1,128)}', space=vmem, size = 0x12000, scoped, tag = 'internal scratch']
  #allocation2 [shape = 'bf16[288,384]{1,0:T(8,128)(2,1)}', space=vmem, size = 0x36000, scoped, tag = 'scratch operand']
  %s0 = inlined_call_operand.vmem [shape: bf16[2,32,512], index: 0, kind: input, shape index: {}]
  %s1 = inlined_call_operand.vmem [shape: bf16[32,288], index: 1, kind: input, shape index: {}]
  %s2 = inlined_call_operand.vmem [shape: f32[1,384], index: 2, kind: input, shape index: {}]
  %s3 = inlined_call_operand.vmem [shape: f32[2,32,384], index: 3, kind: output, shape index: {}]
  %s4 = sld [smem:[#allocation0]]
  $region49: #{resnet_block_forward.3} parent=0
    _
  %s6 = ssub.s32 1, %s4
  %s7 = scalar_select 0, %s6, %s4
  loop: start=0, step=1, limit=4
  $region2: #{resnet_block_forward.3} parent=0 // loop_pre_header
    _
  $region3: #{resnet_block_forward.3} parent=0 // loop_header
    %s9 = sphi 0, %s13
    %p10 = scmp.ge.s32.totalorder %s9, 4
    %s16 = sphi 0, %s28
    %s17 = sphi 0, %s24
    %s18 = sphi 0, %s16
    %s19 = sphi 0, %s17
    %s20 = sphi 0, %s18
    %s21 = sphi 0, %s19
    %s31 = sphi 0, %s33
    %s34 = sphi 0, %s31
    %s35 = sphi 0, %s34
    %s51 = sphi 0, %s35
    %s57 = sphi 0, %s59
    %s60 = sphi 0, %s57
    %s61 = sphi 0, %s60
    %s77 = sphi 0, %s61
    %s81 = sphi 0, %s81
    %s83 = sphi 0, %s81
    %s84 = sphi 0, %s83
    %s98 = sphi 0, %s84
    %s106 = sphi 0, %s108
    %s109 = sphi 0, %s106
    %s110 = sphi 0, %s109
    %s126 = sphi 0, %s110
  $region4: #{resnet_block_forward.3} parent=0 // loop_header_branch
    %12 = sbr.rel (%p10) target = $region8
  $region5: #{resnet_block_forward.3} parent=0 // loop_body
    %s14 = ssub.s32 %s9, 1
    %s15 = ssub.s32 %s9, 2
    %s22 = sadd.s32 1, %s17
    %p23 = scmp.ge.s32.totalorder %s22, 1
    %s24 = scalar_select %p23, 0, %s22
    %s25 = sadd.s32 1, %s16
    %s26 = scalar_select %p23, %s25, %s16
    %p27 = scmp.ge.s32.totalorder %s26, 2
    %s28 = scalar_select %p27, 0, %s26
    %s29 = ssub.s32 %s16, %s28
    %p30 = scmp.eq.s32.totalorder %s29, 0
    %s32 = sadd.s32 %s31, 1
    %s33 = scalar_select %p30, %s31, %s32
    %p36 = pneg %p30
    %p37 = scmp.eq.s32.totalorder %s9, 1
    %p38 = por %p36, %p37
    %p39 = scmp.ne.s32.totalorder %s31, %s34
    %p40 = scmp.eq.s32.totalorder %s9, 0
    %p41 = por %p39, %p40
    %p42 = scmp.ne.s32.totalorder %s31, %s34
    %p43 = scmp.eq.s32.totalorder %s14, 1
    %p44 = por %p42, %p43
    %p45 = scmp.ne.s32.totalorder %s34, %s35
    %p46 = scmp.eq.s32.totalorder %s14, 0
    %p47 = por %p45, %p46
    %p48 = scmp.ne.s32.totalorder %s34, %s35
    %p49 = scmp.eq.s32.totalorder %s15, 1
    %p50 = por %p48, %p49
    %p52 = scmp.ne.s32.totalorder %s35, %s51
    %p53 = scmp.eq.s32.totalorder %s15, 0
    %p54 = por %p52, %p53
    %s55 = ssub.s32 %s17, %s24
    %p56 = scmp.eq.s32.totalorder %s55, 0
    %s58 = sadd.s32 %s57, 1
    %s59 = scalar_select %p56, %s57, %s58
    %p62 = pneg %p56
    %p63 = scmp.eq.s32.totalorder %s9, 1
    %p64 = por %p62, %p63
    %p65 = scmp.ne.s32.totalorder %s57, %s60
    %p66 = scmp.eq.s32.totalorder %s9, 0
    %p67 = por %p65, %p66
    %p68 = scmp.ne.s32.totalorder %s57, %s60
    %p69 = scmp.eq.s32.totalorder %s14, 1
    %p70 = por %p68, %p69
    %p71 = scmp.ne.s32.totalorder %s60, %s61
    %p72 = scmp.eq.s32.totalorder %s14, 0
    %p73 = por %p71, %p72
    %p74 = scmp.ne.s32.totalorder %s60, %s61
    %p75 = scmp.eq.s32.totalorder %s15, 1
    %p76 = por %p74, %p75
    %p78 = scmp.ne.s32.totalorder %s61, %s77
    %p79 = scmp.eq.s32.totalorder %s15, 0
    %p80 = por %p78, %p79
    %s82 = sadd.s32 %s81, 1
    %p85 = scmp.eq.s32.totalorder %s9, 1
    %p86 = scmp.ne.s32.totalorder %s81, %s83
    %p87 = scmp.eq.s32.totalorder %s9, 0
    %p88 = por %p86, %p87
    %p89 = scmp.ne.s32.totalorder %s81, %s83
    %p90 = scmp.eq.s32.totalorder %s14, 1
    %p91 = por %p89, %p90
    %p92 = scmp.ne.s32.totalorder %s83, %s84
    %p93 = scmp.eq.s32.totalorder %s14, 0
    %p94 = por %p92, %p93
    %p95 = scmp.ne.s32.totalorder %s83, %s84
    %p96 = scmp.eq.s32.totalorder %s15, 1
    %p97 = por %p95, %p96
    %p99 = scmp.ne.s32.totalorder %s84, %s98
    %p100 = scmp.eq.s32.totalorder %s15, 0
    %p101 = por %p99, %p100
    %s102 = ssub.s32 %s16, %s28
    %s103 = ssub.s32 %s17, %s24
    %s104 = sor.u32 %s102, %s103
    %p105 = scmp.eq.s32.totalorder %s104, 0
    %s107 = sadd.s32 %s106, 1
    %s108 = scalar_select %p105, %s106, %s107
    %p111 = pneg %p105
    %p112 = scmp.eq.s32.totalorder %s9, 1
    %p113 = por %p111, %p112
    %p114 = scmp.ne.s32.totalorder %s106, %s109
    %p115 = scmp.eq.s32.totalorder %s9, 0
    %p116 = por %p114, %p115
    %p117 = scmp.ne.s32.totalorder %s106, %s109
    %p118 = scmp.eq.s32.totalorder %s14, 1
    %p119 = por %p117, %p118
    %p120 = scmp.ne.s32.totalorder %s109, %s110
    %p121 = scmp.eq.s32.totalorder %s14, 0
    %p122 = por %p120, %p121
    %p123 = scmp.ne.s32.totalorder %s109, %s110
    %p124 = scmp.eq.s32.totalorder %s15, 1
    %p125 = por %p123, %p124
    %p127 = scmp.ne.s32.totalorder %s110, %s126
    %p128 = scmp.eq.s32.totalorder %s15, 0
    %p129 = por %p127, %p128
    %p130 = scmp.le.s32.totalorder 1, %s9
    %p131 = scmp.lt.s32.totalorder %s9, 3
    %p132 = pnand %p130, %p131
    %p133 = pneg %p132
    // Predicated region
    $region9: #{resnet_block_forward.3} parent=5 // pred_check
      _
    $region10: #{resnet_block_forward.3} parent=5 // pred_check_branch
      %135 = sbr.rel (%p132) target = $region12
    $region11: #{resnet_block_forward.3} parent=5 // pred_region
      %s136 = ssub.s32 %s9, 1
      // Predicated region
      $region13: #{resnet_block_forward.3} parent=11 // pred_check
        %p137 = pneg %p73
      $region14: #{resnet_block_forward.3} parent=11 // pred_check_branch
        %139 = sbr.rel (%p137) target = $region16
      $region15: #{resnet_block_forward.3} parent=11 // pred_region
        %s140 = smul.u32 4, %s19
        %p141 = scmp.lt.s32.totalorder %s140, 3
        %s142 = scalar_select %p141, %s140, 3
        %s143 = smul.addr %s142, 3
        %s144 = smul.addr %s143, 4
        %s145 = scalar_lea.vmem %s1, %s144
        %s146 = smul.u32 4, %s19
      $region16: #{resnet_block_forward.3} parent=11 // pred_fallthru
        _
      // Predicated region
      $region17: #{resnet_block_forward.3} parent=11 // pred_check
        %p147 = pneg %p94
      $region18: #{resnet_block_forward.3} parent=11 // pred_check_branch
        %149 = sbr.rel (%p147) target = $region20
      $region19: #{resnet_block_forward.3} parent=11 // pred_region
        _
      $region20: #{resnet_block_forward.3} parent=11 // pred_fallthru
        _
    $region12: #{resnet_block_forward.3} parent=5 // pred_fallthru
      _
    %p150 = scmp.lt.s32.totalorder %s9, 2
    // Predicated region
    $region21: #{resnet_block_forward.3} parent=5 // pred_check
      %p151 = pneg %p150
    $region22: #{resnet_block_forward.3} parent=5 // pred_check_branch
      %153 = sbr.rel (%p151) target = $region24
    $region23: #{resnet_block_forward.3} parent=5 // pred_region
      // Predicated region
      $region25: #{resnet_block_forward.3} parent=23 // pred_check
        %p154 = pneg %p41
      $region26: #{resnet_block_forward.3} parent=23 // pred_check_branch
        %156 = sbr.rel (%p154) target = $region28
      $region27: #{resnet_block_forward.3} parent=23 // pred_region
        %p157 = scmp.lt.s32.totalorder %s16, 1
        %s158 = scalar_select %p157, %s16, 1
        %s159 = smul.addr %s158, 16
        %s160 = smul.addr %s159, 4
        %s161 = scalar_lea.vmem %s0, %s160
      $region28: #{resnet_block_forward.3} parent=23 // pred_fallthru
        _
    $region24: #{resnet_block_forward.3} parent=5 // pred_fallthru
      _
    %p162 = scmp.le.s32.totalorder 1, %s9
    %p163 = scmp.lt.s32.totalorder %s9, 3
    %p164 = pnand %p162, %p163
    %p165 = pneg %p164
    // Predicated region
    $region29: #{resnet_block_forward.3} parent=5 // pred_check
      _
    $region30: #{resnet_block_forward.3} parent=5 // pred_check_branch
      %167 = sbr.rel (%p164) target = $region32
    $region31: #{resnet_block_forward.3} parent=5 // pred_region
      %s168 = ssub.s32 %s9, 1
      %p169 = scmp.lt.s32.totalorder %s18, 1
      %s170 = scalar_select %p169, %s18, 1
      %s171 = smul.addr %s170, 16
      %s172 = smul.addr %s171, 4
      %s173 = scalar_lea.vmem %s0, %s172
      %p174 = pneg %p47
      %p175 = pneg %p44
      %s176 = smul.u32 4, %s19
      %p177 = scmp.lt.s32.totalorder %s176, 3
      %s178 = scalar_select %p177, %s176, 3
      %s179 = smul.addr %s178, 3
      %s180 = smul.addr %s179, 4
      %s181 = scalar_lea.vmem %s1, %s180
      %p182 = pneg %p73
      %p183 = pneg %p70
      %p184 = pneg %p94
      %p185 = pneg %p91
      %p186 = pneg %p122
      %p187 = pneg %p119
      %s188 = smul.u32 4, %s19
      %p189 = scmp.lt.s32.totalorder %s18, 1
      %s190 = scalar_select %p189, %s18, 1
      %p191 = scmp.lt.s32.totalorder %s188, 3
      %s192 = scalar_select %p191, %s188, 3
      %s193 = smul.addr %s192, 3
      %s194 = smul.addr %s190, 12
      %s195 = sadd.s32 %s193, %s194
      %s196 = smul.addr %s195, 8
      %s197 = scalar_lea.vmem %s3, %s196
      %p198 = scmp.lt.s32.totalorder %s18, 1
      %s199 = scalar_select %p198, %s18, 1
      %s200 = smul.addr %s199, 16
      %s201 = smul.addr %s200, 4
      %s202 = scalar_lea.vmem %s0, %s201
      %s203 = smul.u32 4, %s19
      %p204 = scmp.lt.s32.totalorder %s203, 3
      %s205 = scalar_select %p204, %s203, 3
      %s206 = smul.addr %s205, 3
      %s207 = smul.addr %s206, 4
      %s208 = scalar_lea.vmem %s1, %s207
      %s209 = smul.u32 4, %s19
      %s210 = smul.u32 4, %s19
      %p211 = scmp.lt.s32.totalorder %s18, 1
      %s212 = scalar_select %p211, %s18, 1
      %p213 = scmp.lt.s32.totalorder %s210, 3
      %s214 = scalar_select %p213, %s210, 3
      %s215 = smul.addr %s214, 3
      %s216 = smul.addr %s212, 12
      %s217 = sadd.s32 %s215, %s216
      %s218 = smul.addr %s217, 8
      %s219 = scalar_lea.vmem %s3, %s218
      %s220 = smul.u32 4, %s19
      %p222 = scmp.eq.s32.totalorder %s19, 0
      // Predicated region
      $region33: #{resnet_block_forward.3} parent=31 // pred_check
        %p223 = pneg %p222
      $region34: #{resnet_block_forward.3} parent=31 // pred_check_branch
        %225 = sbr.rel (%p223) target = $region36
      $region35: #{resnet_block_forward.3} parent=31 // pred_region
        %v226 = vld [vmem:[%s202] sm:$0xff]
        %v227 = vld [vmem:[%s202 + $0x8] sm:$0xf]
        %v228 = vld [vmem:[%s202 + $0x10] sm:$0xff]
        %v229 = vld [vmem:[%s202 + $0x18] sm:$0xf]
        %v230 = vld [vmem:[%s202 + $0x20] sm:$0xff]
        %v231 = vld [vmem:[%s202 + $0x28] sm:$0xf]
        %v232 = vld [vmem:[%s202 + $0x30] sm:$0xff]
        %v233 = vld [vmem:[%s202 + $0x38] sm:$0xf]
        %234 = vst [vmem:[#allocation2] sm:$0xff] %v226
        %235 = vst [vmem:[#allocation2 + $0x8] sm:$0xf] %v227
        %236 = vst [vmem:[#allocation2 + $0xc] sm:$0xff] %v228
        %237 = vst [vmem:[#allocation2 + $0x14] sm:$0xf] %v229
        %238 = vst [vmem:[#allocation2 + $0x18] sm:$0xff] %v230
        %239 = vst [vmem:[#allocation2 + $0x20] sm:$0xf] %v231
        %240 = vst [vmem:[#allocation2 + $0x24] sm:$0xff] %v232
        %241 = vst [vmem:[#allocation2 + $0x2c] sm:$0xf] %v233
        %v242 = vld [vmem:[%s202] sm:$0xff]
        %v243 = vld [vmem:[%s202 + $0x8] sm:$0xff]
        %v244 = vld [vmem:[%s202 + $0x10] sm:$0xff]
        %v245 = vld [vmem:[%s202 + $0x18] sm:$0xff]
        %v246 = vld [vmem:[%s202 + $0x20] sm:$0xff]
        %v247 = vld [vmem:[%s202 + $0x28] sm:$0xff]
        %v248 = vld [vmem:[%s202 + $0x30] sm:$0xff]
        %v249 = vld [vmem:[%s202 + $0x38] sm:$0xff]
        %258 = vrot.lane.b32.xlu0 %v242, 127
        %v259 = vpop.permute.xlu0 %258
        %260 = vrot.lane.b32.xlu0 %v243, 127
        %v261 = vpop.permute.xlu0 %260
        %262 = vrot.lane.b32.xlu0 %v244, 127
        %v263 = vpop.permute.xlu0 %262
        %264 = vrot.lane.b32.xlu0 %v245, 127
        %v265 = vpop.permute.xlu0 %264
        %266 = vrot.lane.b32.xlu0 %v246, 127
        %v267 = vpop.permute.xlu0 %266
        %268 = vrot.lane.b32.xlu0 %v247, 127
        %v269 = vpop.permute.xlu0 %268
        %270 = vrot.lane.b32.xlu0 %v248, 127
        %v271 = vpop.permute.xlu0 %270
        %272 = vrot.lane.b32.xlu0 %v249, 127
        %v273 = vpop.permute.xlu0 %272
        %v274 = vrot.slane %v259, 4
        %v275 = vrot.slane %v261, 4
        %v276 = vrot.slane %v263, 4
        %v277 = vrot.slane %v265, 4
        %v278 = vrot.slane %v267, 4
        %v279 = vrot.slane %v269, 4
        %v280 = vrot.slane %v271, 4
        %v281 = vrot.slane %v273, 4
        %vm282 = vcmask 1043456
        %v283 = vsel %vm282, %v274, %v275
        %vm284 = vcmask 1039360
        %v285 = vsel %vm284, %v259, %v283
        %v286 = vsel %vm284, %v261, %v275
        %v287 = vsel %vm282, %v276, %v277
        %v288 = vsel %vm284, %v263, %v287
        %v289 = vsel %vm284, %v265, %v277
        %v290 = vsel %vm282, %v278, %v279
        %v291 = vsel %vm284, %v267, %v290
        %v292 = vsel %vm284, %v269, %v279
        %v293 = vsel %vm282, %v280, %v281
        %v294 = vsel %vm284, %v271, %v293
        %v295 = vsel %vm284, %v273, %v281
        %304 = vst [vmem:[#allocation2 + $0x30] sm:$0xff] %v285
        %305 = vst [vmem:[#allocation2 + $0x38] sm:$0xf] %v286
        %306 = vst [vmem:[#allocation2 + $0x3c] sm:$0xff] %v288
        %307 = vst [vmem:[#allocation2 + $0x44] sm:$0xf] %v289
        %308 = vst [vmem:[#allocation2 + $0x48] sm:$0xff] %v291
        %309 = vst [vmem:[#allocation2 + $0x50] sm:$0xf] %v292
        %310 = vst [vmem:[#allocation2 + $0x54] sm:$0xff] %v294
        %311 = vst [vmem:[#allocation2 + $0x5c] sm:$0xf] %v295
        %v312 = vld [vmem:[%s202] sm:$0xff]
        %v313 = vld [vmem:[%s202 + $0x8] sm:$0xff]
        %v314 = vld [vmem:[%s202 + $0x10] sm:$0xff]
        %v315 = vld [vmem:[%s202 + $0x18] sm:$0xff]
        %v316 = vld [vmem:[%s202 + $0x20] sm:$0xff]
        %v317 = vld [vmem:[%s202 + $0x28] sm:$0xff]
        %v318 = vld [vmem:[%s202 + $0x30] sm:$0xff]
        %v319 = vld [vmem:[%s202 + $0x38] sm:$0xff]
        %328 = vrot.lane.b32.xlu0 %v312, 126
        %v329 = vpop.permute.xlu0 %328
        %330 = vrot.lane.b32.xlu0 %v313, 126
        %v331 = vpop.permute.xlu0 %330
        %332 = vrot.lane.b32.xlu0 %v314, 126
        %v333 = vpop.permute.xlu0 %332
        %334 = vrot.lane.b32.xlu0 %v315, 126
        %v335 = vpop.permute.xlu0 %334
        %336 = vrot.lane.b32.xlu0 %v316, 126
        %v337 = vpop.permute.xlu0 %336
        %338 = vrot.lane.b32.xlu0 %v317, 126
        %v339 = vpop.permute.xlu0 %338
        %340 = vrot.lane.b32.xlu0 %v318, 126
        %v341 = vpop.permute.xlu0 %340
        %342 = vrot.lane.b32.xlu0 %v319, 126
        %v343 = vpop.permute.xlu0 %342
        %v344 = vrot.slane %v329, 4
        %v345 = vrot.slane %v331, 4
        %v346 = vrot.slane %v333, 4
        %v347 = vrot.slane %v335, 4
        %v348 = vrot.slane %v337, 4
        %v349 = vrot.slane %v339, 4
        %v350 = vrot.slane %v341, 4
        %v351 = vrot.slane %v343, 4
        %v352 = vsel %vm282, %v344, %v345
        %vm353 = vcmask 1031168
        %v354 = vsel %vm353, %v329, %v352
        %v355 = vsel %vm353, %v331, %v345
        %v356 = vsel %vm282, %v346, %v347
        %v357 = vsel %vm353, %v333, %v356
        %v358 = vsel %vm353, %v335, %v347
        %v359 = vsel %vm282, %v348, %v349
        %v360 = vsel %vm353, %v337, %v359
        %v361 = vsel %vm353, %v339, %v349
        %v362 = vsel %vm282, %v350, %v351
        %v363 = vsel %vm353, %v341, %v362
        %v364 = vsel %vm353, %v343, %v351
        %373 = vst [vmem:[#allocation2 + $0x60] sm:$0xff] %v354
        %374 = vst [vmem:[#allocation2 + $0x68] sm:$0xf] %v355
        %375 = vst [vmem:[#allocation2 + $0x6c] sm:$0xff] %v357
        %376 = vst [vmem:[#allocation2 + $0x74] sm:$0xf] %v358
        %377 = vst [vmem:[#allocation2 + $0x78] sm:$0xff] %v360
        %378 = vst [vmem:[#allocation2 + $0x80] sm:$0xf] %v361
        %379 = vst [vmem:[#allocation2 + $0x84] sm:$0xff] %v363
        %380 = vst [vmem:[#allocation2 + $0x8c] sm:$0xf] %v364
        %v381 = vld [vmem:[%s202] sm:$0xff]
        %v382 = vld [vmem:[%s202 + $0x8] sm:$0xff]
        %v383 = vld [vmem:[%s202 + $0x10] sm:$0xff]
        %v384 = vld [vmem:[%s202 + $0x18] sm:$0xff]
        %v385 = vld [vmem:[%s202 + $0x20] sm:$0xff]
        %v386 = vld [vmem:[%s202 + $0x28] sm:$0xff]
        %v387 = vld [vmem:[%s202 + $0x30] sm:$0xff]
        %v388 = vld [vmem:[%s202 + $0x38] sm:$0xff]
        %397 = vrot.lane.b32.xlu0 %v381, 110
        %v398 = vpop.permute.xlu0 %397
        %399 = vrot.lane.b32.xlu0 %v382, 110
        %v400 = vpop.permute.xlu0 %399
        %401 = vrot.lane.b32.xlu0 %v383, 110
        %v402 = vpop.permute.xlu0 %401
        %403 = vrot.lane.b32.xlu0 %v384, 110
        %v404 = vpop.permute.xlu0 %403
        %405 = vrot.lane.b32.xlu0 %v385, 110
        %v406 = vpop.permute.xlu0 %405
        %407 = vrot.lane.b32.xlu0 %v386, 110
        %v408 = vpop.permute.xlu0 %407
        %409 = vrot.lane.b32.xlu0 %v387, 110
        %v410 = vpop.permute.xlu0 %409
        %411 = vrot.lane.b32.xlu0 %v388, 110
        %v412 = vpop.permute.xlu0 %411
        %v413 = vrot.slane %v398, 4
        %v414 = vrot.slane %v400, 4
        %v415 = vrot.slane %v402, 4
        %v416 = vrot.slane %v404, 4
        %v417 = vrot.slane %v406, 4
        %v418 = vrot.slane %v408, 4
        %v419 = vrot.slane %v410, 4
        %v420 = vrot.slane %v412, 4
        %v421 = vsel %vm282, %v413, %v414
        %vm422 = vcmask 900096
        %v423 = vsel %vm422, %v398, %v421
        %v424 = vsel %vm422, %v400, %v414
        %v425 = vsel %vm282, %v415, %v416
        %v426 = vsel %vm422, %v402, %v425
        %v427 = vsel %vm422, %v404, %v416
        %v428 = vsel %vm282, %v417, %v418
        %v429 = vsel %vm422, %v406, %v428
        %v430 = vsel %vm422, %v408, %v418
        %v431 = vsel %vm282, %v419, %v420
        %v432 = vsel %vm422, %v410, %v431
        %v433 = vsel %vm422, %v412, %v420
        %442 = vst [vmem:[#allocation2 + $0x90] sm:$0xff] %v423
        %443 = vst [vmem:[#allocation2 + $0x98] sm:$0xf] %v424
        %444 = vst [vmem:[#allocation2 + $0x9c] sm:$0xff] %v426
        %445 = vst [vmem:[#allocation2 + $0xa4] sm:$0xf] %v427
        %446 = vst [vmem:[#allocation2 + $0xa8] sm:$0xff] %v429
        %447 = vst [vmem:[#allocation2 + $0xb0] sm:$0xf] %v430
        %448 = vst [vmem:[#allocation2 + $0xb4] sm:$0xff] %v432
        %449 = vst [vmem:[#allocation2 + $0xbc] sm:$0xf] %v433
        %v450 = vld [vmem:[%s202] sm:$0xff]
        %v451 = vld [vmem:[%s202 + $0x8] sm:$0xff]
        %v452 = vld [vmem:[%s202 + $0x10] sm:$0xff]
        %v453 = vld [vmem:[%s202 + $0x18] sm:$0xff]
        %v454 = vld [vmem:[%s202 + $0x20] sm:$0xff]
        %v455 = vld [vmem:[%s202 + $0x28] sm:$0xff]
        %v456 = vld [vmem:[%s202 + $0x30] sm:$0xff]
        %v457 = vld [vmem:[%s202 + $0x38] sm:$0xff]
        %466 = vrot.lane.b32.xlu0 %v450, 109
        %v467 = vpop.permute.xlu0 %466
        %468 = vrot.lane.b32.xlu0 %v451, 109
        %v469 = vpop.permute.xlu0 %468
        %470 = vrot.lane.b32.xlu0 %v452, 109
        %v471 = vpop.permute.xlu0 %470
        %472 = vrot.lane.b32.xlu0 %v453, 109
        %v473 = vpop.permute.xlu0 %472
        %474 = vrot.lane.b32.xlu0 %v454, 109
        %v475 = vpop.permute.xlu0 %474
        %476 = vrot.lane.b32.xlu0 %v455, 109
        %v477 = vpop.permute.xlu0 %476
        %478 = vrot.lane.b32.xlu0 %v456, 109
        %v479 = vpop.permute.xlu0 %478
        %480 = vrot.lane.b32.xlu0 %v457, 109
        %v481 = vpop.permute.xlu0 %480
        %v482 = vrot.slane %v467, 4
        %v483 = vrot.slane %v469, 4
        %v484 = vrot.slane %v471, 4
        %v485 = vrot.slane %v473, 4
        %v486 = vrot.slane %v475, 4
        %v487 = vrot.slane %v477, 4
        %v488 = vrot.slane %v479, 4
        %v489 = vrot.slane %v481, 4
        %v490 = vsel %vm282, %v482, %v483
        %vm491 = vcmask 891904
        %v492 = vsel %vm491, %v467, %v490
        %v493 = vsel %vm491, %v469, %v483
        %v494 = vsel %vm282, %v484, %v485
        %v495 = vsel %vm491, %v471, %v494
        %v496 = vsel %vm491, %v473, %v485
        %v497 = vsel %vm282, %v486, %v487
        %v498 = vsel %vm491, %v475, %v497
        %v499 = vsel %vm491, %v477, %v487
        %v500 = vsel %vm282, %v488, %v489
        %v501 = vsel %vm491, %v479, %v500
        %v502 = vsel %vm491, %v481, %v489
        %511 = vst [vmem:[#allocation2 + $0xc0] sm:$0xff] %v492
        %512 = vst [vmem:[#allocation2 + $0xc8] sm:$0xf] %v493
        %513 = vst [vmem:[#allocation2 + $0xcc] sm:$0xff] %v495
        %514 = vst [vmem:[#allocation2 + $0xd4] sm:$0xf] %v496
        %515 = vst [vmem:[#allocation2 + $0xd8] sm:$0xff] %v498
        %516 = vst [vmem:[#allocation2 + $0xe0] sm:$0xf] %v499
        %517 = vst [vmem:[#allocation2 + $0xe4] sm:$0xff] %v501
        %518 = vst [vmem:[#allocation2 + $0xec] sm:$0xf] %v502
        %v519 = vld [vmem:[%s202] sm:$0xff]
        %v520 = vld [vmem:[%s202 + $0x8] sm:$0xff]
        %v521 = vld [vmem:[%s202 + $0x10] sm:$0xff]
        %v522 = vld [vmem:[%s202 + $0x18] sm:$0xff]
        %v523 = vld [vmem:[%s202 + $0x20] sm:$0xff]
        %v524 = vld [vmem:[%s202 + $0x28] sm:$0xff]
        %v525 = vld [vmem:[%s202 + $0x30] sm:$0xff]
        %v526 = vld [vmem:[%s202 + $0x38] sm:$0xff]
        %535 = vrot.lane.b32.xlu0 %v519, 108
        %v536 = vpop.permute.xlu0 %535
        %537 = vrot.lane.b32.xlu0 %v520, 108
        %v538 = vpop.permute.xlu0 %537
        %539 = vrot.lane.b32.xlu0 %v521, 108
        %v540 = vpop.permute.xlu0 %539
        %541 = vrot.lane.b32.xlu0 %v522, 108
        %v542 = vpop.permute.xlu0 %541
        %543 = vrot.lane.b32.xlu0 %v523, 108
        %v544 = vpop.permute.xlu0 %543
        %545 = vrot.lane.b32.xlu0 %v524, 108
        %v546 = vpop.permute.xlu0 %545
        %547 = vrot.lane.b32.xlu0 %v525, 108
        %v548 = vpop.permute.xlu0 %547
        %549 = vrot.lane.b32.xlu0 %v526, 108
        %v550 = vpop.permute.xlu0 %549
        %v551 = vrot.slane %v536, 4
        %v552 = vrot.slane %v538, 4
        %v553 = vrot.slane %v540, 4
        %v554 = vrot.slane %v542, 4
        %v555 = vrot.slane %v544, 4
        %v556 = vrot.slane %v546, 4
        %v557 = vrot.slane %v548, 4
        %v558 = vrot.slane %v550, 4
        %v559 = vsel %vm282, %v551, %v552
        %vm560 = vcmask 883712
        %v561 = vsel %vm560, %v536, %v559
        %v562 = vsel %vm560, %v538, %v552
        %v563 = vsel %vm282, %v553, %v554
        %v564 = vsel %vm560, %v540, %v563
        %v565 = vsel %vm560, %v542, %v554
        %v566 = vsel %vm282, %v555, %v556
        %v567 = vsel %vm560, %v544, %v566
        %v568 = vsel %vm560, %v546, %v556
        %v569 = vsel %vm282, %v557, %v558
        %v570 = vsel %vm560, %v548, %v569
        %v571 = vsel %vm560, %v550, %v558
        %580 = vst [vmem:[#allocation2 + $0xf0] sm:$0xff] %v561
        %581 = vst [vmem:[#allocation2 + $0xf8] sm:$0xf] %v562
        %582 = vst [vmem:[#allocation2 + $0xfc] sm:$0xff] %v564
        %583 = vst [vmem:[#allocation2 + $0x104] sm:$0xf] %v565
        %584 = vst [vmem:[#allocation2 + $0x108] sm:$0xff] %v567
        %585 = vst [vmem:[#allocation2 + $0x110] sm:$0xf] %v568
        %586 = vst [vmem:[#allocation2 + $0x114] sm:$0xff] %v570
        %587 = vst [vmem:[#allocation2 + $0x11c] sm:$0xf] %v571
        %v588 = vld [vmem:[%s202] sm:$0xff]
        %v589 = vld [vmem:[%s202 + $0x8] sm:$0xff]
        %v590 = vld [vmem:[%s202 + $0x10] sm:$0xff]
        %v591 = vld [vmem:[%s202 + $0x18] sm:$0xff]
        %v592 = vld [vmem:[%s202 + $0x20] sm:$0xff]
        %v593 = vld [vmem:[%s202 + $0x28] sm:$0xff]
        %v594 = vld [vmem:[%s202 + $0x30] sm:$0xff]
        %v595 = vld [vmem:[%s202 + $0x38] sm:$0xff]
        %604 = vrot.lane.b32.xlu0 %v588, 92
        %v605 = vpop.permute.xlu0 %604
        %606 = vrot.lane.b32.xlu0 %v589, 92
        %v607 = vpop.permute.xlu0 %606
        %608 = vrot.lane.b32.xlu0 %v590, 92
        %v609 = vpop.permute.xlu0 %608
        %610 = vrot.lane.b32.xlu0 %v591, 92
        %v611 = vpop.permute.xlu0 %610
        %612 = vrot.lane.b32.xlu0 %v592, 92
        %v613 = vpop.permute.xlu0 %612
        %614 = vrot.lane.b32.xlu0 %v593, 92
        %v615 = vpop.permute.xlu0 %614
        %616 = vrot.lane.b32.xlu0 %v594, 92
        %v617 = vpop.permute.xlu0 %616
        %618 = vrot.lane.b32.xlu0 %v595, 92
        %v619 = vpop.permute.xlu0 %618
        %v620 = vrot.slane %v605, 4
        %v621 = vrot.slane %v607, 4
        %v622 = vrot.slane %v609, 4
        %v623 = vrot.slane %v611, 4
        %v624 = vrot.slane %v613, 4
        %v625 = vrot.slane %v615, 4
        %v626 = vrot.slane %v617, 4
        %v627 = vrot.slane %v619, 4
        %v628 = vsel %vm282, %v620, %v621
        %vm629 = vcmask 752640
        %v630 = vsel %vm629, %v605, %v628
        %v631 = vsel %vm629, %v607, %v621
        %v632 = vsel %vm282, %v622, %v623
        %v633 = vsel %vm629, %v609, %v632
        %v634 = vsel %vm629, %v611, %v623
        %v635 = vsel %vm282, %v624, %v625
        %v636 = vsel %vm629, %v613, %v635
        %v637 = vsel %vm629, %v615, %v625
        %v638 = vsel %vm282, %v626, %v627
        %v639 = vsel %vm629, %v617, %v638
        %v640 = vsel %vm629, %v619, %v627
        %649 = vst [vmem:[#allocation2 + $0x120] sm:$0xff] %v630
        %650 = vst [vmem:[#allocation2 + $0x128] sm:$0xf] %v631
        %651 = vst [vmem:[#allocation2 + $0x12c] sm:$0xff] %v633
        %652 = vst [vmem:[#allocation2 + $0x134] sm:$0xf] %v634
        %653 = vst [vmem:[#allocation2 + $0x138] sm:$0xff] %v636
        %654 = vst [vmem:[#allocation2 + $0x140] sm:$0xf] %v637
        %655 = vst [vmem:[#allocation2 + $0x144] sm:$0xff] %v639
        %656 = vst [vmem:[#allocation2 + $0x14c] sm:$0xf] %v640
        %v657 = vld [vmem:[%s202] sm:$0xff]
        %v658 = vld [vmem:[%s202 + $0x8] sm:$0xff]
        %v659 = vld [vmem:[%s202 + $0x10] sm:$0xff]
        %v660 = vld [vmem:[%s202 + $0x18] sm:$0xff]
        %v661 = vld [vmem:[%s202 + $0x20] sm:$0xff]
        %v662 = vld [vmem:[%s202 + $0x28] sm:$0xff]
        %v663 = vld [vmem:[%s202 + $0x30] sm:$0xff]
        %v664 = vld [vmem:[%s202 + $0x38] sm:$0xff]
        %673 = vrot.lane.b32.xlu0 %v657, 91
        %v674 = vpop.permute.xlu0 %673
        %675 = vrot.lane.b32.xlu0 %v658, 91
        %v676 = vpop.permute.xlu0 %675
        %677 = vrot.lane.b32.xlu0 %v659, 91
        %v678 = vpop.permute.xlu0 %677
        %679 = vrot.lane.b32.xlu0 %v660, 91
        %v680 = vpop.permute.xlu0 %679
        %681 = vrot.lane.b32.xlu0 %v661, 91
        %v682 = vpop.permute.xlu0 %681
        %683 = vrot.lane.b32.xlu0 %v662, 91
        %v684 = vpop.permute.xlu0 %683
        %685 = vrot.lane.b32.xlu0 %v663, 91
        %v686 = vpop.permute.xlu0 %685
        %687 = vrot.lane.b32.xlu0 %v664, 91
        %v688 = vpop.permute.xlu0 %687
        %v689 = vrot.slane %v674, 4
        %v690 = vrot.slane %v676, 4
        %v691 = vrot.slane %v678, 4
        %v692 = vrot.slane %v680, 4
        %v693 = vrot.slane %v682, 4
        %v694 = vrot.slane %v684, 4
        %v695 = vrot.slane %v686, 4
        %v696 = vrot.slane %v688, 4
        %v697 = vsel %vm282, %v689, %v690
        %vm698 = vcmask 744448
        %v699 = vsel %vm698, %v674, %v697
        %v700 = vsel %vm698, %v676, %v690
        %v701 = vsel %vm282, %v691, %v692
        %v702 = vsel %vm698, %v678, %v701
        %v703 = vsel %vm698, %v680, %v692
        %v704 = vsel %vm282, %v693, %v694
        %v705 = vsel %vm698, %v682, %v704
        %v706 = vsel %vm698, %v684, %v694
        %v707 = vsel %vm282, %v695, %v696
        %v708 = vsel %vm698, %v686, %v707
        %v709 = vsel %vm698, %v688, %v696
        %718 = vst [vmem:[#allocation2 + $0x150] sm:$0xff] %v699
        %719 = vst [vmem:[#allocation2 + $0x158] sm:$0xf] %v700
        %720 = vst [vmem:[#allocation2 + $0x15c] sm:$0xff] %v702
        %721 = vst [vmem:[#allocation2 + $0x164] sm:$0xf] %v703
        %722 = vst [vmem:[#allocation2 + $0x168] sm:$0xff] %v705
        %723 = vst [vmem:[#allocation2 + $0x170] sm:$0xf] %v706
        %724 = vst [vmem:[#allocation2 + $0x174] sm:$0xff] %v708
        %725 = vst [vmem:[#allocation2 + $0x17c] sm:$0xf] %v709
        %v726 = vld [vmem:[%s202] sm:$0xff]
        %v727 = vld [vmem:[%s202 + $0x8] sm:$0xff]
        %v728 = vld [vmem:[%s202 + $0x10] sm:$0xff]
        %v729 = vld [vmem:[%s202 + $0x18] sm:$0xff]
        %v730 = vld [vmem:[%s202 + $0x20] sm:$0xff]
        %v731 = vld [vmem:[%s202 + $0x28] sm:$0xff]
        %v732 = vld [vmem:[%s202 + $0x30] sm:$0xff]
        %v733 = vld [vmem:[%s202 + $0x38] sm:$0xff]
        %742 = vrot.lane.b32.xlu0 %v726, 90
        %v743 = vpop.permute.xlu0 %742
        %744 = vrot.lane.b32.xlu0 %v727, 90
        %v745 = vpop.permute.xlu0 %744
        %746 = vrot.lane.b32.xlu0 %v728, 90
        %v747 = vpop.permute.xlu0 %746
        %748 = vrot.lane.b32.xlu0 %v729, 90
        %v749 = vpop.permute.xlu0 %748
        %750 = vrot.lane.b32.xlu0 %v730, 90
        %v751 = vpop.permute.xlu0 %750
        %752 = vrot.lane.b32.xlu0 %v731, 90
        %v753 = vpop.permute.xlu0 %752
        %754 = vrot.lane.b32.xlu0 %v732, 90
        %v755 = vpop.permute.xlu0 %754
        %756 = vrot.lane.b32.xlu0 %v733, 90
        %v757 = vpop.permute.xlu0 %756
        %v758 = vrot.slane %v743, 4
        %v759 = vrot.slane %v745, 4
        %v760 = vrot.slane %v747, 4
        %v761 = vrot.slane %v749, 4
        %v762 = vrot.slane %v751, 4
        %v763 = vrot.slane %v753, 4
        %v764 = vrot.slane %v755, 4
        %v765 = vrot.slane %v757, 4
        %v766 = vsel %vm282, %v758, %v759
        %vm767 = vcmask 736256
        %v768 = vsel %vm767, %v743, %v766
        %v769 = vsel %vm767, %v745, %v759
        %v770 = vsel %vm282, %v760, %v761
        %v771 = vsel %vm767, %v747, %v770
        %v772 = vsel %vm767, %v749, %v761
        %v773 = vsel %vm282, %v762, %v763
        %v774 = vsel %vm767, %v751, %v773
        %v775 = vsel %vm767, %v753, %v763
        %v776 = vsel %vm282, %v764, %v765
        %v777 = vsel %vm767, %v755, %v776
        %v778 = vsel %vm767, %v757, %v765
        %787 = vst [vmem:[#allocation2 + $0x180] sm:$0xff] %v768
        %788 = vst [vmem:[#allocation2 + $0x188] sm:$0xf] %v769
        %789 = vst [vmem:[#allocation2 + $0x18c] sm:$0xff] %v771
        %790 = vst [vmem:[#allocation2 + $0x194] sm:$0xf] %v772
        %791 = vst [vmem:[#allocation2 + $0x198] sm:$0xff] %v774
        %792 = vst [vmem:[#allocation2 + $0x1a0] sm:$0xf] %v775
        %793 = vst [vmem:[#allocation2 + $0x1a4] sm:$0xff] %v777
        %794 = vst [vmem:[#allocation2 + $0x1ac] sm:$0xf] %v778
      $region36: #{resnet_block_forward.3} parent=31 // pred_fallthru
        _
      %v795 = vld [vmem:[%s208] sm:$0xff]
      %v796 = vld [vmem:[%s208 + $0x8] sm:$0xf]
      %v797 = vld [vmem:[%s208 + $0xc] sm:$0xff]
      %v798 = vld [vmem:[%s208 + $0x14] sm:$0xf]
      %v799 = vld [vmem:[%s208 + $0x18] sm:$0xff]
      %v800 = vld [vmem:[%s208 + $0x20] sm:$0xf]
      %v801 = vld [vmem:[%s208 + $0x24] sm:$0xff]
      %v802 = vld [vmem:[%s208 + $0x2c] sm:$0xf]
      %v803 = vld [vmem:[#allocation2] sm:$0xff]
      %v804 = vld [vmem:[#allocation2 + $0x8] sm:$0xf]
      %v805 = vld [vmem:[#allocation2 + $0xc] sm:$0xff]
      %v806 = vld [vmem:[#allocation2 + $0x14] sm:$0xf]
      %v807 = vld [vmem:[#allocation2 + $0x18] sm:$0xff]
      %v808 = vld [vmem:[#allocation2 + $0x20] sm:$0xf]
      %v809 = vld [vmem:[#allocation2 + $0x24] sm:$0xff]
      %v810 = vld [vmem:[#allocation2 + $0x2c] sm:$0xf]
      %v811 = vld [vmem:[#allocation2 + $0x30] sm:$0xff]
      %v812 = vld [vmem:[#allocation2 + $0x38] sm:$0xf]
      %v813 = vld [vmem:[#allocation2 + $0x3c] sm:$0xff]
      %v814 = vld [vmem:[#allocation2 + $0x44] sm:$0xf]
      %v815 = vld [vmem:[#allocation2 + $0x48] sm:$0xff]
      %v816 = vld [vmem:[#allocation2 + $0x50] sm:$0xf]
      %v817 = vld [vmem:[#allocation2 + $0x54] sm:$0xff]
      %v818 = vld [vmem:[#allocation2 + $0x5c] sm:$0xf]
      %v819 = vld [vmem:[#allocation2 + $0x60] sm:$0xff]
      %v820 = vld [vmem:[#allocation2 + $0x68] sm:$0xf]
      %v821 = vld [vmem:[#allocation2 + $0x6c] sm:$0xff]
      %v822 = vld [vmem:[#allocation2 + $0x74] sm:$0xf]
      %v823 = vld [vmem:[#allocation2 + $0x78] sm:$0xff]
      %v824 = vld [vmem:[#allocation2 + $0x80] sm:$0xf]
      %v825 = vld [vmem:[#allocation2 + $0x84] sm:$0xff]
      %v826 = vld [vmem:[#allocation2 + $0x8c] sm:$0xf]
      %v827 = vld [vmem:[#allocation2 + $0x90] sm:$0xff]
      %v828 = vld [vmem:[#allocation2 + $0x98] sm:$0xf]
      %v829 = vld [vmem:[#allocation2 + $0x9c] sm:$0xff]
      %v830 = vld [vmem:[#allocation2 + $0xa4] sm:$0xf]
      %v831 = vld [vmem:[#allocation2 + $0xa8] sm:$0xff]
      %v832 = vld [vmem:[#allocation2 + $0xb0] sm:$0xf]
      %v833 = vld [vmem:[#allocation2 + $0xb4] sm:$0xff]
      %v834 = vld [vmem:[#allocation2 + $0xbc] sm:$0xf]
      %v835 = vld [vmem:[#allocation2 + $0xc0] sm:$0xff]
      %v836 = vld [vmem:[#allocation2 + $0xc8] sm:$0xf]
      %v837 = vld [vmem:[#allocation2 + $0xcc] sm:$0xff]
      %v838 = vld [vmem:[#allocation2 + $0xd4] sm:$0xf]
      %v839 = vld [vmem:[#allocation2 + $0xd8] sm:$0xff]
      %v840 = vld [vmem:[#allocation2 + $0xe0] sm:$0xf]
      %v841 = vld [vmem:[#allocation2 + $0xe4] sm:$0xff]
      %v842 = vld [vmem:[#allocation2 + $0xec] sm:$0xf]
      %v843 = vld [vmem:[#allocation2 + $0xf0] sm:$0xff]
      %v844 = vld [vmem:[#allocation2 + $0xf8] sm:$0xf]
      %v845 = vld [vmem:[#allocation2 + $0xfc] sm:$0xff]
      %v846 = vld [vmem:[#allocation2 + $0x104] sm:$0xf]
      %v847 = vld [vmem:[#allocation2 + $0x108] sm:$0xff]
      %v848 = vld [vmem:[#allocation2 + $0x110] sm:$0xf]
      %v849 = vld [vmem:[#allocation2 + $0x114] sm:$0xff]
      %v850 = vld [vmem:[#allocation2 + $0x11c] sm:$0xf]
      %v851 = vld [vmem:[#allocation2 + $0x120] sm:$0xff]
      %v852 = vld [vmem:[#allocation2 + $0x128] sm:$0xf]
      %v853 = vld [vmem:[#allocation2 + $0x12c] sm:$0xff]
      %v854 = vld [vmem:[#allocation2 + $0x134] sm:$0xf]
      %v855 = vld [vmem:[#allocation2 + $0x138] sm:$0xff]
      %v856 = vld [vmem:[#allocation2 + $0x140] sm:$0xf]
      %v857 = vld [vmem:[#allocation2 + $0x144] sm:$0xff]
      %v858 = vld [vmem:[#allocation2 + $0x14c] sm:$0xf]
      %v859 = vld [vmem:[#allocation2 + $0x150] sm:$0xff]
      %v860 = vld [vmem:[#allocation2 + $0x158] sm:$0xf]
      %v861 = vld [vmem:[#allocation2 + $0x15c] sm:$0xff]
      %v862 = vld [vmem:[#allocation2 + $0x164] sm:$0xf]
      %v863 = vld [vmem:[#allocation2 + $0x168] sm:$0xff]
      %v864 = vld [vmem:[#allocation2 + $0x170] sm:$0xf]
      %v865 = vld [vmem:[#allocation2 + $0x174] sm:$0xff]
      %v866 = vld [vmem:[#allocation2 + $0x17c] sm:$0xf]
      %v867 = vld [vmem:[#allocation2 + $0x180] sm:$0xff]
      %v868 = vld [vmem:[#allocation2 + $0x188] sm:$0xf]
      %v869 = vld [vmem:[#allocation2 + $0x18c] sm:$0xff]
      %v870 = vld [vmem:[#allocation2 + $0x194] sm:$0xf]
      %v871 = vld [vmem:[#allocation2 + $0x198] sm:$0xff]
      %v872 = vld [vmem:[#allocation2 + $0x1a0] sm:$0xf]
      %v873 = vld [vmem:[#allocation2 + $0x1a4] sm:$0xff]
      %v874 = vld [vmem:[#allocation2 + $0x1ac] sm:$0xf]
      %v883 = vunpack.c.l.b16 %v795
      %v884 = vunpack.c.h.b16 %v795
      %v885 = vunpack.c.l.b16 %v796
      %v886 = vunpack.c.l.b16 %v797
      %v887 = vunpack.c.h.b16 %v797
      %v888 = vunpack.c.l.b16 %v798
      %v889 = vunpack.c.l.b16 %v799
      %v890 = vunpack.c.h.b16 %v799
      %v891 = vunpack.c.l.b16 %v800
      %v892 = vunpack.c.l.b16 %v801
      %v893 = vunpack.c.h.b16 %v801
      %v894 = vunpack.c.l.b16 %v802
      %v895 = vpack.c.b16 %v886, %v883
      %v896 = vpack.c.b16 %v887, %v884
      %v897 = vpack.c.b16 %v888, %v885
      %v898 = vpack.c.b16 %v892, %v889
      %v899 = vpack.c.b16 %v893, %v890
      %v900 = vpack.c.b16 %v894, %v891
      %v977 = vunpack.c.l.b16 %v803
      %v978 = vunpack.c.h.b16 %v803
      %v979 = vunpack.c.l.b16 %v804
      %v980 = vunpack.c.l.b16 %v805
      %v981 = vunpack.c.h.b16 %v805
      %v982 = vunpack.c.l.b16 %v806
      %v983 = vunpack.c.l.b16 %v807
      %v984 = vunpack.c.h.b16 %v807
      %v985 = vunpack.c.l.b16 %v808
      %v986 = vunpack.c.l.b16 %v809
      %v987 = vunpack.c.h.b16 %v809
      %v988 = vunpack.c.l.b16 %v810
      %v989 = vunpack.c.l.b16 %v811
      %v990 = vunpack.c.h.b16 %v811
      %v991 = vunpack.c.l.b16 %v812
      %v992 = vunpack.c.l.b16 %v813
      %v993 = vunpack.c.h.b16 %v813
      %v994 = vunpack.c.l.b16 %v814
      %v995 = vunpack.c.l.b16 %v815
      %v996 = vunpack.c.h.b16 %v815
      %v997 = vunpack.c.l.b16 %v816
      %v998 = vunpack.c.l.b16 %v817
      %v999 = vunpack.c.h.b16 %v817
      %v1000 = vunpack.c.l.b16 %v818
      %v1001 = vunpack.c.l.b16 %v819
      %v1002 = vunpack.c.h.b16 %v819
      %v1003 = vunpack.c.l.b16 %v820
      %v1004 = vunpack.c.l.b16 %v821
      %v1005 = vunpack.c.h.b16 %v821
      %v1006 = vunpack.c.l.b16 %v822
      %v1007 = vunpack.c.l.b16 %v823
      %v1008 = vunpack.c.h.b16 %v823
      %v1009 = vunpack.c.l.b16 %v824
      %v1010 = vunpack.c.l.b16 %v825
      %v1011 = vunpack.c.h.b16 %v825
      %v1012 = vunpack.c.l.b16 %v826
      %v1013 = vunpack.c.l.b16 %v827
      %v1014 = vunpack.c.h.b16 %v827
      %v1015 = vunpack.c.l.b16 %v828
      %v1016 = vunpack.c.l.b16 %v829
      %v1017 = vunpack.c.h.b16 %v829
      %v1018 = vunpack.c.l.b16 %v830
      %v1019 = vunpack.c.l.b16 %v831
      %v1020 = vunpack.c.h.b16 %v831
      %v1021 = vunpack.c.l.b16 %v832
      %v1022 = vunpack.c.l.b16 %v833
      %v1023 = vunpack.c.h.b16 %v833
      %v1024 = vunpack.c.l.b16 %v834
      %v1025 = vunpack.c.l.b16 %v835
      %v1026 = vunpack.c.h.b16 %v835
      %v1027 = vunpack.c.l.b16 %v836
      %v1028 = vunpack.c.l.b16 %v837
      %v1029 = vunpack.c.h.b16 %v837
      %v1030 = vunpack.c.l.b16 %v838
      %v1031 = vunpack.c.l.b16 %v839
      %v1032 = vunpack.c.h.b16 %v839
      %v1033 = vunpack.c.l.b16 %v840
      %v1034 = vunpack.c.l.b16 %v841
      %v1035 = vunpack.c.h.b16 %v841
      %v1036 = vunpack.c.l.b16 %v842
      %v1037 = vunpack.c.l.b16 %v843
      %v1038 = vunpack.c.h.b16 %v843
      %v1039 = vunpack.c.l.b16 %v844
      %v1040 = vunpack.c.l.b16 %v845
      %v1041 = vunpack.c.h.b16 %v845
      %v1042 = vunpack.c.l.b16 %v846
      %v1043 = vunpack.c.l.b16 %v847
      %v1044 = vunpack.c.h.b16 %v847
      %v1045 = vunpack.c.l.b16 %v848
      %v1046 = vunpack.c.l.b16 %v849
      %v1047 = vunpack.c.h.b16 %v849
      %v1048 = vunpack.c.l.b16 %v850
      %v1049 = vunpack.c.l.b16 %v851
      %v1050 = vunpack.c.h.b16 %v851
      %v1051 = vunpack.c.l.b16 %v852
      %v1052 = vunpack.c.l.b16 %v853
      %v1053 = vunpack.c.h.b16 %v853
      %v1054 = vunpack.c.l.b16 %v854
      %v1055 = vunpack.c.l.b16 %v855
      %v1056 = vunpack.c.h.b16 %v855
      %v1057 = vunpack.c.l.b16 %v856
      %v1058 = vunpack.c.l.b16 %v857
      %v1059 = vunpack.c.h.b16 %v857
      %v1060 = vunpack.c.l.b16 %v858
      %v1061 = vunpack.c.l.b16 %v859
      %v1062 = vunpack.c.h.b16 %v859
      %v1063 = vunpack.c.l.b16 %v860
      %v1064 = vunpack.c.l.b16 %v861
      %v1065 = vunpack.c.h.b16 %v861
      %v1066 = vunpack.c.l.b16 %v862
      %v1067 = vunpack.c.l.b16 %v863
      %v1068 = vunpack.c.h.b16 %v863
      %v1069 = vunpack.c.l.b16 %v864
      %v1070 = vunpack.c.l.b16 %v865
      %v1071 = vunpack.c.h.b16 %v865
      %v1072 = vunpack.c.l.b16 %v866
      %v1073 = vunpack.c.l.b16 %v867
      %v1074 = vunpack.c.h.b16 %v867
      %v1075 = vunpack.c.l.b16 %v868
      %v1076 = vunpack.c.l.b16 %v869
      %v1077 = vunpack.c.h.b16 %v869
      %v1078 = vunpack.c.l.b16 %v870
      %v1079 = vunpack.c.l.b16 %v871
      %v1080 = vunpack.c.h.b16 %v871
      %v1081 = vunpack.c.l.b16 %v872
      %v1082 = vunpack.c.l.b16 %v873
      %v1083 = vunpack.c.h.b16 %v873
      %v1084 = vunpack.c.l.b16 %v874
      %v1085 = vpack.c.b16 %v980, %v977
      %v1086 = vpack.c.b16 %v981, %v978
      %v1087 = vpack.c.b16 %v982, %v979
      %v1088 = vpack.c.b16 %v986, %v983
      %v1089 = vpack.c.b16 %v987, %v984
      %v1090 = vpack.c.b16 %v988, %v985
      %v1091 = vpack.c.b16 %v992, %v989
      %v1092 = vpack.c.b16 %v993, %v990
      %v1093 = vpack.c.b16 %v994, %v991
      %v1094 = vpack.c.b16 %v998, %v995
      %v1095 = vpack.c.b16 %v999, %v996
      %v1096 = vpack.c.b16 %v1000, %v997
      %v1097 = vpack.c.b16 %v1004, %v1001
      %v1098 = vpack.c.b16 %v1005, %v1002
      %v1099 = vpack.c.b16 %v1006, %v1003
      %v1100 = vpack.c.b16 %v1010, %v1007
      %v1101 = vpack.c.b16 %v1011, %v1008
      %v1102 = vpack.c.b16 %v1012, %v1009
      %v1103 = vpack.c.b16 %v1016, %v1013
      %v1104 = vpack.c.b16 %v1017, %v1014
      %v1105 = vpack.c.b16 %v1018, %v1015
      %v1106 = vpack.c.b16 %v1022, %v1019
      %v1107 = vpack.c.b16 %v1023, %v1020
      %v1108 = vpack.c.b16 %v1024, %v1021
      %v1109 = vpack.c.b16 %v1028, %v1025
      %v1110 = vpack.c.b16 %v1029, %v1026
      %v1111 = vpack.c.b16 %v1030, %v1027
      %v1112 = vpack.c.b16 %v1034, %v1031
      %v1113 = vpack.c.b16 %v1035, %v1032
      %v1114 = vpack.c.b16 %v1036, %v1033
      %v1115 = vpack.c.b16 %v1040, %v1037
      %v1116 = vpack.c.b16 %v1041, %v1038
      %v1117 = vpack.c.b16 %v1042, %v1039
      %v1118 = vpack.c.b16 %v1046, %v1043
      %v1119 = vpack.c.b16 %v1047, %v1044
      %v1120 = vpack.c.b16 %v1048, %v1045
      %v1121 = vpack.c.b16 %v1052, %v1049
      %v1122 = vpack.c.b16 %v1053, %v1050
      %v1123 = vpack.c.b16 %v1054, %v1051
      %v1124 = vpack.c.b16 %v1058, %v1055
      %v1125 = vpack.c.b16 %v1059, %v1056
      %v1126 = vpack.c.b16 %v1060, %v1057
      %v1127 = vpack.c.b16 %v1064, %v1061
      %v1128 = vpack.c.b16 %v1065, %v1062
      %v1129 = vpack.c.b16 %v1066, %v1063
      %v1130 = vpack.c.b16 %v1070, %v1067
      %v1131 = vpack.c.b16 %v1071, %v1068
      %v1132 = vpack.c.b16 %v1072, %v1069
      %v1133 = vpack.c.b16 %v1076, %v1073
      %v1134 = vpack.c.b16 %v1077, %v1074
      %v1135 = vpack.c.b16 %v1078, %v1075
      %v1136 = vpack.c.b16 %v1082, %v1079
      %v1137 = vpack.c.b16 %v1083, %v1080
      %v1138 = vpack.c.b16 %v1084, %v1081
      %vm1193 = vcmask 261120
      %v1195 = vsel %vm1193, %v897, 0
      %v1198 = vsel %vm1193, %v900, 0
      %1200 = vmatprep.subr.bf16.mxu0 %v1107
      %1201 = vmatpush1.bf16.msra.mxu0 %v1106
      %1202 = vmatprep.subr.bf16.mxu0 %v1104
      %1203 = vmatpush1.bf16.msra.mxu0 %v1103
      %1204 = vmatprep.subr.bf16.mxu0 %v1101
      %1205 = vmatpush1.bf16.msra.mxu0 %v1100
      %1206 = vmatprep.subr.bf16.mxu0 %v1098
      %1207 = vmatpush1.bf16.msra.mxu0 %v1097
      %1208 = vmatprep.subr.bf16.mxu0 %v1095
      %1209 = vmatpush1.bf16.msra.mxu0 %v1094
      %1210 = vmatprep.subr.bf16.mxu0 %v1092
      %1211 = vmatpush1.bf16.msra.mxu0 %v1091
      %1212 = vmatprep.subr.bf16.mxu0 %v1089
      %1213 = vmatpush1.bf16.msra.mxu0 %v1088
      %1214 = vmatprep.subr.bf16.mxu0 %v1086
      %1215 = vmatpush1.bf16.msra.mxu0 %v1085
      %1216 = vmatprep.subr.bf16.mxu0 %v1131
      %1217 = vmatpush2.bf16.msra.mxu0 %v1130
      %1218 = vmatprep.subr.bf16.mxu0 %v1128
      %1219 = vmatpush2.bf16.msra.mxu0 %v1127
      %1220 = vmatprep.subr.bf16.mxu0 %v1125
      %1221 = vmatpush2.bf16.msra.mxu0 %v1124
      %1222 = vmatprep.subr.bf16.mxu0 %v1122
      %1223 = vmatpush2.bf16.msra.mxu0 %v1121
      %1224 = vmatprep.subr.bf16.mxu0 %v1119
      %1225 = vmatpush2.bf16.msra.mxu0 %v1118
      %1226 = vmatprep.subr.bf16.mxu0 %v1116
      %1227 = vmatpush2.bf16.msra.mxu0 %v1115
      %1228 = vmatprep.subr.bf16.mxu0 %v1113
      %1229 = vmatpush2.bf16.msra.mxu0 %v1112
      %1230 = vmatprep.subr.bf16.mxu0 %v1110
      %1231 = vmatpush2.bf16.msra.mxu0 %v1109
      %1232 = vmatprep.mubr.bf16.mxu0 %v896
      %1233 = vmatmul.mubr.bf16.gmra.mxu0 %v895
      %v1234 = vpop.f32.mrf.mxu0
      %v1235 = vadd.f32 0.0, %v1234
      %v1236 = vpop.f32.mrf.mxu0
      %v1237 = vadd.f32 0.0, %v1236
      %v1238 = vpop.f32.mrf.mxu0
      %v1239 = vadd.f32 0.0, %v1238
      %v1240 = vpop.f32.mrf.mxu0
      %v1241 = vadd.f32 0.0, %v1240
      %1242 = vmatprep.mubr.bf16.mxu0 %v899
      %1243 = vmatmul.mubr.bf16.gmra.mxu0 %v898
      %v1244 = vpop.f32.mrf.mxu0
      %v1245 = vadd.f32 0.0, %v1244
      %v1246 = vpop.f32.mrf.mxu0
      %v1247 = vadd.f32 0.0, %v1246
      %v1248 = vpop.f32.mrf.mxu0
      %v1249 = vadd.f32 0.0, %v1248
      %v1250 = vpop.f32.mrf.mxu0
      %v1251 = vadd.f32 0.0, %v1250
      %1252 = vdwg.mxu0
      %1253 = vmatprep.subr.bf16.mxu0 0
      %1254 = vmatpush1.bf16.msra.mxu0 0
      %1255 = vmatprep.subr.bf16.mxu0 0
      %1256 = vmatpush1.bf16.msra.mxu0 0
      %1257 = vmatprep.subr.bf16.mxu0 0
      %1258 = vmatpush1.bf16.msra.mxu0 0
      %1259 = vmatprep.subr.bf16.mxu0 0
      %1260 = vmatpush1.bf16.msra.mxu0 0
      %1261 = vmatprep.subr.bf16.mxu0 0
      %1262 = vmatpush1.bf16.msra.mxu0 0
      %1263 = vmatprep.subr.bf16.mxu0 0
      %1264 = vmatpush1.bf16.msra.mxu0 0
      %1265 = vmatprep.subr.bf16.mxu0 %v1137
      %1266 = vmatpush1.bf16.msra.mxu0 %v1136
      %1267 = vmatprep.subr.bf16.mxu0 %v1134
      %1268 = vmatpush1.bf16.msra.mxu0 %v1133
      %1269 = vmatprep.subr.bf16.mxu0 0
      %1270 = vmatpush2.bf16.msra.mxu0 0
      %1271 = vmatprep.subr.bf16.mxu0 0
      %1272 = vmatpush2.bf16.msra.mxu0 0
      %1273 = vmatprep.subr.bf16.mxu0 0
      %1274 = vmatpush2.bf16.msra.mxu0 0
      %1275 = vmatprep.subr.bf16.mxu0 0
      %1276 = vmatpush2.bf16.msra.mxu0 0
      %1277 = vmatprep.subr.bf16.mxu0 0
      %1278 = vmatpush2.bf16.msra.mxu0 0
      %1279 = vmatprep.subr.bf16.mxu0 0
      %1280 = vmatpush2.bf16.msra.mxu0 0
      %1281 = vmatprep.subr.bf16.mxu0 0
      %1282 = vmatpush2.bf16.msra.mxu0 0
      %1283 = vmatprep.subr.bf16.mxu0 0
      %1284 = vmatpush2.bf16.msra.mxu0 0
      %1285 = vmatprep.mubr.bf16.mxu0 0
      %1286 = vmatmul.mubr.bf16.gmra.mxu0 %v1195
      %v1287 = vpop.f32.mrf.mxu0
      %v1288 = vadd.f32 %v1235, %v1287
      %v1289 = vpop.f32.mrf.mxu0
      %v1290 = vadd.f32 %v1237, %v1289
      %v1291 = vpop.f32.mrf.mxu0
      %v1292 = vadd.f32 %v1239, %v1291
      %v1293 = vpop.f32.mrf.mxu0
      %v1294 = vadd.f32 %v1241, %v1293
      %1295 = vmatprep.mubr.bf16.mxu0 0
      %1296 = vmatmul.mubr.bf16.gmra.mxu0 %v1198
      %v1297 = vpop.f32.mrf.mxu0
      %v1298 = vadd.f32 %v1245, %v1297
      %v1299 = vpop.f32.mrf.mxu0
      %v1300 = vadd.f32 %v1247, %v1299
      %v1301 = vpop.f32.mrf.mxu0
      %v1302 = vadd.f32 %v1249, %v1301
      %v1303 = vpop.f32.mrf.mxu0
      %v1304 = vadd.f32 %v1251, %v1303
      %1305 = vdwg.mxu0
      %1306 = vmatprep.subr.bf16.mxu0 0
      %1307 = vmatpush1.bf16.msra.mxu0 %v1108
      %1308 = vmatprep.subr.bf16.mxu0 0
      %1309 = vmatpush1.bf16.msra.mxu0 %v1105
      %1310 = vmatprep.subr.bf16.mxu0 0
      %1311 = vmatpush1.bf16.msra.mxu0 %v1102
      %1312 = vmatprep.subr.bf16.mxu0 0
      %1313 = vmatpush1.bf16.msra.mxu0 %v1099
      %1314 = vmatprep.subr.bf16.mxu0 0
      %1315 = vmatpush1.bf16.msra.mxu0 %v1096
      %1316 = vmatprep.subr.bf16.mxu0 0
      %1317 = vmatpush1.bf16.msra.mxu0 %v1093
      %1318 = vmatprep.subr.bf16.mxu0 0
      %1319 = vmatpush1.bf16.msra.mxu0 %v1090
      %1320 = vmatprep.subr.bf16.mxu0 0
      %1321 = vmatpush1.bf16.msra.mxu0 %v1087
      %1322 = vmatprep.subr.bf16.mxu0 0
      %1323 = vmatpush2.bf16.msra.mxu0 %v1132
      %1324 = vmatprep.subr.bf16.mxu0 0
      %1325 = vmatpush2.bf16.msra.mxu0 %v1129
      %1326 = vmatprep.subr.bf16.mxu0 0
      %1327 = vmatpush2.bf16.msra.mxu0 %v1126
      %1328 = vmatprep.subr.bf16.mxu0 0
      %1329 = vmatpush2.bf16.msra.mxu0 %v1123
      %1330 = vmatprep.subr.bf16.mxu0 0
      %1331 = vmatpush2.bf16.msra.mxu0 %v1120
      %1332 = vmatprep.subr.bf16.mxu0 0
      %1333 = vmatpush2.bf16.msra.mxu0 %v1117
      %1334 = vmatprep.subr.bf16.mxu0 0
      %1335 = vmatpush2.bf16.msra.mxu0 %v1114
      %1336 = vmatprep.subr.bf16.mxu0 0
      %1337 = vmatpush2.bf16.msra.mxu0 %v1111
      %1338 = vmatprep.mubr.bf16.mxu0 %v896
      %1339 = vmatmul.mubr.bf16.gmra.mxu0 %v895
      %v1340 = vpop.f32.mrf.mxu0
      %v1341 = vadd.f32 0.0, %v1340
      %v1342 = vpop.f32.mrf.mxu0
      %v1343 = vpop.f32.mrf.mxu0
      %v1344 = vadd.f32 0.0, %v1343
      %v1345 = vpop.f32.mrf.mxu0
      %1346 = vmatprep.mubr.bf16.mxu0 %v899
      %1347 = vmatmul.mubr.bf16.gmra.mxu0 %v898
      %v1348 = vpop.f32.mrf.mxu0
      %v1349 = vadd.f32 0.0, %v1348
      %v1350 = vpop.f32.mrf.mxu0
      %v1351 = vpop.f32.mrf.mxu0
      %v1352 = vadd.f32 0.0, %v1351
      %v1353 = vpop.f32.mrf.mxu0
      %1354 = vdwg.mxu0
      %1355 = vmatprep.subr.bf16.mxu0 0
      %1356 = vmatpush1.bf16.msra.mxu0 0
      %1357 = vmatprep.subr.bf16.mxu0 0
      %1358 = vmatpush1.bf16.msra.mxu0 0
      %1359 = vmatprep.subr.bf16.mxu0 0
      %1360 = vmatpush1.bf16.msra.mxu0 0
      %1361 = vmatprep.subr.bf16.mxu0 0
      %1362 = vmatpush1.bf16.msra.mxu0 0
      %1363 = vmatprep.subr.bf16.mxu0 0
      %1364 = vmatpush1.bf16.msra.mxu0 0
      %1365 = vmatprep.subr.bf16.mxu0 0
      %1366 = vmatpush1.bf16.msra.mxu0 0
      %1367 = vmatprep.subr.bf16.mxu0 0
      %1368 = vmatpush1.bf16.msra.mxu0 %v1138
      %1369 = vmatprep.subr.bf16.mxu0 0
      %1370 = vmatpush1.bf16.msra.mxu0 %v1135
      %1371 = vmatprep.subr.bf16.mxu0 0
      %1372 = vmatpush2.bf16.msra.mxu0 0
      %1373 = vmatprep.subr.bf16.mxu0 0
      %1374 = vmatpush2.bf16.msra.mxu0 0
      %1375 = vmatprep.subr.bf16.mxu0 0
      %1376 = vmatpush2.bf16.msra.mxu0 0
      %1377 = vmatprep.subr.bf16.mxu0 0
      %1378 = vmatpush2.bf16.msra.mxu0 0
      %1379 = vmatprep.subr.bf16.mxu0 0
      %1380 = vmatpush2.bf16.msra.mxu0 0
      %1381 = vmatprep.subr.bf16.mxu0 0
      %1382 = vmatpush2.bf16.msra.mxu0 0
      %1383 = vmatprep.subr.bf16.mxu0 0
      %1384 = vmatpush2.bf16.msra.mxu0 0
      %1385 = vmatprep.subr.bf16.mxu0 0
      %1386 = vmatpush2.bf16.msra.mxu0 0
      %1387 = vmatprep.mubr.bf16.mxu0 0
      %1388 = vmatmul.mubr.bf16.gmra.mxu0 %v1195
      %v1389 = vpop.f32.mrf.mxu0
      %v1390 = vadd.f32 %v1341, %v1389
      %v1391 = vpop.f32.mrf.mxu0
      %v1392 = vpop.f32.mrf.mxu0
      %v1393 = vadd.f32 %v1344, %v1392
      %v1394 = vpop.f32.mrf.mxu0
      %1395 = vmatprep.mubr.bf16.mxu0 0
      %1396 = vmatmul.mubr.bf16.gmra.mxu0 %v1198
      %v1397 = vpop.f32.mrf.mxu0
      %v1398 = vadd.f32 %v1349, %v1397
      %v1399 = vpop.f32.mrf.mxu0
      %v1400 = vpop.f32.mrf.mxu0
      %v1401 = vadd.f32 %v1352, %v1400
      %v1402 = vpop.f32.mrf.mxu0
      %1403 = vdwg.mxu0
      %v1404 = vld [vmem:[%s2] sm:$0x7]
      %v1406 = vlaneseq
      %v1407 = vshrl.u32 %v1406, 7
      %v1408 = vsub.s32 0, %v1407
      %v1409 = vrot.slane %v1404, %v1408
      %v1410 = vlaneseq
      %v1411 = vshrl.u32 %v1410, 7
      %v1412 = vsub.s32 1, %v1411
      %v1413 = vrot.slane %v1404, %v1412
      %v1414 = vlaneseq
      %v1415 = vshrl.u32 %v1414, 7
      %v1416 = vsub.s32 2, %v1415
      %v1417 = vrot.slane %v1404, %v1416
      %v1421 = vmul.f32 %v1288, %v1409
      %v1422 = vmul.f32 %v1290, %v1413
      %v1423 = vmul.f32 %v1390, %v1417
      %v1424 = vmul.f32 %v1292, %v1409
      %v1425 = vmul.f32 %v1294, %v1413
      %v1426 = vmul.f32 %v1393, %v1417
      %v1427 = vmul.f32 %v1298, %v1409
      %v1428 = vmul.f32 %v1300, %v1413
      %v1429 = vmul.f32 %v1398, %v1417
      %v1430 = vmul.f32 %v1302, %v1409
      %v1431 = vmul.f32 %v1304, %v1413
      %v1432 = vmul.f32 %v1401, %v1417
      %v1433 = vadd.f32 %v1421, %v1422
      %v1434 = vadd.f32 %v1433, %v1423
      %1435 = vadd.xlane.f32.xlu0 %v1434
      %v1436 = vpop.xlane.xlu0 %1435
      %v1437 = vadd.f32 %v1424, %v1425
      %v1438 = vadd.f32 %v1437, %v1426
      %1439 = vadd.xlane.f32.xlu0 %v1438
      %v1440 = vpop.xlane.xlu0 %1439
      %v1441 = vadd.f32 %v1427, %v1428
      %v1442 = vadd.f32 %v1441, %v1429
      %1443 = vadd.xlane.f32.xlu0 %v1442
      %v1444 = vpop.xlane.xlu0 %1443
      %v1445 = vadd.f32 %v1430, %v1431
      %v1446 = vadd.f32 %v1445, %v1432
      %1447 = vadd.xlane.f32.xlu0 %v1446
      %v1448 = vpop.xlane.xlu0 %1447
      %v1449 = vmul.f32 %v1436, 0.00390625
      %v1450 = vmul.f32 %v1440, 0.00390625
      %v1451 = vmul.f32 %v1444, 0.00390625
      %v1452 = vmul.f32 %v1448, 0.00390625
      %v1453 = vsub.f32 %v1288, %v1449
      %v1454 = vsub.f32 %v1290, %v1449
      %v1455 = vsub.f32 %v1390, %v1449
      %v1456 = vsub.f32 %v1292, %v1450
      %v1457 = vsub.f32 %v1294, %v1450
      %v1458 = vsub.f32 %v1393, %v1450
      %v1459 = vsub.f32 %v1298, %v1451
      %v1460 = vsub.f32 %v1300, %v1451
      %v1461 = vsub.f32 %v1398, %v1451
      %v1462 = vsub.f32 %v1302, %v1452
      %v1463 = vsub.f32 %v1304, %v1452
      %v1464 = vsub.f32 %v1401, %v1452
      %v1465 = vmul.f32 %v1453, %v1409
      %v1466 = vmul.f32 %v1454, %v1413
      %v1467 = vmul.f32 %v1455, %v1417
      %v1468 = vmul.f32 %v1456, %v1409
      %v1469 = vmul.f32 %v1457, %v1413
      %v1470 = vmul.f32 %v1458, %v1417
      %v1471 = vmul.f32 %v1459, %v1409
      %v1472 = vmul.f32 %v1460, %v1413
      %v1473 = vmul.f32 %v1461, %v1417
      %v1474 = vmul.f32 %v1462, %v1409
      %v1475 = vmul.f32 %v1463, %v1413
      %v1476 = vmul.f32 %v1464, %v1417
      %v1477 = vmul.f32 %v1465, %v1465
      %v1478 = vmul.f32 %v1466, %v1466
      %v1479 = vmul.f32 %v1467, %v1467
      %v1480 = vmul.f32 %v1468, %v1468
      %v1481 = vmul.f32 %v1469, %v1469
      %v1482 = vmul.f32 %v1470, %v1470
      %v1483 = vmul.f32 %v1471, %v1471
      %v1484 = vmul.f32 %v1472, %v1472
      %v1485 = vmul.f32 %v1473, %v1473
      %v1486 = vmul.f32 %v1474, %v1474
      %v1487 = vmul.f32 %v1475, %v1475
      %v1488 = vmul.f32 %v1476, %v1476
      %v1489 = vadd.f32 %v1477, %v1478
      %v1490 = vadd.f32 %v1489, %v1479
      %1491 = vadd.xlane.f32.xlu0 %v1490
      %v1492 = vpop.xlane.xlu0 %1491
      %v1493 = vadd.f32 %v1480, %v1481
      %v1494 = vadd.f32 %v1493, %v1482
      %1495 = vadd.xlane.f32.xlu0 %v1494
      %v1496 = vpop.xlane.xlu0 %1495
      %v1497 = vadd.f32 %v1483, %v1484
      %v1498 = vadd.f32 %v1497, %v1485
      %1499 = vadd.xlane.f32.xlu0 %v1498
      %v1500 = vpop.xlane.xlu0 %1499
      %v1501 = vadd.f32 %v1486, %v1487
      %v1502 = vadd.f32 %v1501, %v1488
      %1503 = vadd.xlane.f32.xlu0 %v1502
      %v1504 = vpop.xlane.xlu0 %1503
      %v1505 = vmul.f32 %v1492, 0.00390625
      %v1506 = vmul.f32 %v1496, 0.00390625
      %v1507 = vmul.f32 %v1500, 0.00390625
      %v1508 = vmul.f32 %v1504, 0.00390625
      %v1509 = vadd.f32 %v1505, 1e-05
      %v1510 = vadd.f32 %v1506, 1e-05
      %v1511 = vadd.f32 %v1507, 1e-05
      %v1512 = vadd.f32 %v1508, 1e-05
      %v1513 = vrsqrt.pop %v1509
      %v1514 = vrsqrt.pop %v1510
      %v1515 = vrsqrt.pop %v1511
      %v1516 = vrsqrt.pop %v1512
      %v1517 = vmul.f32 %v1465, %v1513
      %v1518 = vmul.f32 %v1466, %v1513
      %v1519 = vmul.f32 %v1467, %v1513
      %v1520 = vmul.f32 %v1468, %v1514
      %v1521 = vmul.f32 %v1469, %v1514
      %v1522 = vmul.f32 %v1470, %v1514
      %v1523 = vmul.f32 %v1471, %v1515
      %v1524 = vmul.f32 %v1472, %v1515
      %v1525 = vmul.f32 %v1473, %v1515
      %v1526 = vmul.f32 %v1474, %v1516
      %v1527 = vmul.f32 %v1475, %v1516
      %v1528 = vmul.f32 %v1476, %v1516
      %1529 = vst [vmem:[%s219] sm:$0xff] %v1517
      %1530 = vst [vmem:[%s219 + $0x8] sm:$0xff] %v1518
      %1531 = vst [vmem:[%s219 + $0x10] sm:$0xff] %v1519
      %1532 = vst [vmem:[%s219 + $0x18] sm:$0xff] %v1520
      %1533 = vst [vmem:[%s219 + $0x20] sm:$0xff] %v1521
      %1534 = vst [vmem:[%s219 + $0x28] sm:$0xff] %v1522
      %1535 = vst [vmem:[%s219 + $0x30] sm:$0xff] %v1523
      %1536 = vst [vmem:[%s219 + $0x38] sm:$0xff] %v1524
      %1537 = vst [vmem:[%s219 + $0x40] sm:$0xff] %v1525
      %1538 = vst [vmem:[%s219 + $0x48] sm:$0xff] %v1526
      %1539 = vst [vmem:[%s219 + $0x50] sm:$0xff] %v1527
      %1540 = vst [vmem:[%s219 + $0x58] sm:$0xff] %v1528
      %s1541 = smul.u32 4, %s19
      %p1542 = scmp.lt.s32.totalorder %s18, 1
      %s1543 = scalar_select %p1542, %s18, 1
      %p1544 = scmp.lt.s32.totalorder %s1541, 3
      %s1545 = scalar_select %p1544, %s1541, 3
      %s1546 = smul.addr %s1545, 3
      %s1547 = smul.addr %s1543, 12
      %s1548 = sadd.s32 %s1546, %s1547
      %s1549 = smul.addr %s1548, 8
      %s1550 = scalar_lea.vmem %s3, %s1549
      // Predicated region
      $region37: #{resnet_block_forward.3} parent=31 // pred_check
        %p1551 = pneg %p119
      $region38: #{resnet_block_forward.3} parent=31 // pred_check_branch
        %1553 = sbr.rel (%p1551) target = $region40
      $region39: #{resnet_block_forward.3} parent=31 // pred_region
        %s1554 = smul.u32 4, %s19
      $region40: #{resnet_block_forward.3} parent=31 // pred_fallthru
        _
    $region32: #{resnet_block_forward.3} parent=5 // pred_fallthru
      _
    %p1555 = scmp.le.s32.totalorder 2, %s9
    // Predicated region
    $region41: #{resnet_block_forward.3} parent=5 // pred_check
      %p1556 = pneg %p1555
    $region42: #{resnet_block_forward.3} parent=5 // pred_check_branch
      %1558 = sbr.rel (%p1556) target = $region44
    $region43: #{resnet_block_forward.3} parent=5 // pred_region
      %s1559 = ssub.s32 %s9, 2
      // Predicated region
      $region45: #{resnet_block_forward.3} parent=43 // pred_check
        %p1560 = pneg %p125
      $region46: #{resnet_block_forward.3} parent=43 // pred_check_branch
        %1562 = sbr.rel (%p1560) target = $region48
      $region47: #{resnet_block_forward.3} parent=43 // pred_region
        %s1563 = smul.u32 4, %s21
        %p1564 = scmp.lt.s32.totalorder %s20, 1
        %s1565 = scalar_select %p1564, %s20, 1
        %p1566 = scmp.lt.s32.totalorder %s1563, 3
        %s1567 = scalar_select %p1566, %s1563, 3
        %s1568 = smul.addr %s1567, 3
        %s1569 = smul.addr %s1565, 12
        %s1570 = sadd.s32 %s1568, %s1569
        %s1571 = smul.addr %s1570, 8
        %s1572 = scalar_lea.vmem %s3, %s1571
      $region48: #{resnet_block_forward.3} parent=43 // pred_fallthru
        _
    $region44: #{resnet_block_forward.3} parent=5 // pred_fallthru
      _
  $region6: #{resnet_block_forward.3} parent=0 // loop_footer
    %s13 = sadd.s32 1, %s9
  $region7: #{resnet_block_forward.3} parent=0 // loop_footer_branch
    %8 = sbr.rel target = $region3
  $region8: #{resnet_block_forward.3} parent=0 // loop_exit
    _

</llo_original>
